<compile_context>
chip_gen: v7x
topology: tpu7x:2x2x1
jax: 0.10.0
libtpu: 0.0.40
codegen_flags: <defaults>
</compile_context>

<pallas_src>
import jax
import jax.numpy as jnp
from jax.experimental import pallas as pl
from jax.experimental.pallas import tpu as pltpu


def _round_up(v, m):
    return -(-v // m) * m


# ----------------------------- Pallas kernels ------------------------------

def _conv_relu_pool_kernel(x_ref, w_ref, b_ref, o_ref):
    """Fused: valid conv (as matmul) + bias + ReLU + 2x2/s2 max-pool.

    x_ref: (4, tm, Kp) bf16 -- leading axis = position inside the 2x2 pool window
    w_ref: (Kp, Np)   bf16
    b_ref: (1, Np)    f32
    o_ref: (tm, Np)   f32  -- one row per pool window
    """
    w = w_ref[...]
    b = b_ref[...]
    y0 = jnp.dot(x_ref[0], w, preferred_element_type=jnp.float32) + b
    y1 = jnp.dot(x_ref[1], w, preferred_element_type=jnp.float32) + b
    y2 = jnp.dot(x_ref[2], w, preferred_element_type=jnp.float32) + b
    y3 = jnp.dot(x_ref[3], w, preferred_element_type=jnp.float32) + b
    # max(relu(a), relu(b)) == relu(max(a, b))  (ReLU is monotone)
    y = jnp.maximum(jnp.maximum(y0, y1), jnp.maximum(y2, y3))
    o_ref[...] = jnp.maximum(y, 0.0)


def _mlp_kernel(x_ref, w1_ref, b1_ref, w2_ref, b2_ref, w3_ref, b3_ref, o_ref):
    """Fused fc1+ReLU, fc2+ReLU, fc3 (bf16 MXU operands, f32 accumulation)."""
    h = jnp.dot(x_ref[...], w1_ref[...],
                preferred_element_type=jnp.float32) + b1_ref[...]
    h = jnp.maximum(h, 0.0).astype(jnp.bfloat16)
    h = jnp.dot(h, w2_ref[...],
                preferred_element_type=jnp.float32) + b2_ref[...]
    h = jnp.maximum(h, 0.0).astype(jnp.bfloat16)
    o_ref[...] = jnp.dot(h, w3_ref[...],
                         preferred_element_type=jnp.float32) + b3_ref[...]


# ------------------------------ layer wrappers ------------------------------

def _pool_im2col(x_bf16, kh, kw):
    """Build [4, N*PH*PW, kh*kw*Cin] patches for a valid conv followed by a
    2x2/s2 max-pool.  The leading axis indexes the position inside each 2x2
    pool window; each row is one pool-window location."""
    n, h, w, c = x_bf16.shape
    oh, ow = h - kh + 1, w - kw + 1
    ph, pw = oh // 2, ow // 2
    qs = []
    for ky in range(2):
        for kx in range(2):
            pats = []
            for di in range(kh):
                for dj in range(kw):
                    ys, xs = ky + di, kx + dj
                    pats.append(x_bf16[:, ys:ys + 2 * (ph - 1) + 1:2,
                                       xs:xs + 2 * (pw - 1) + 1:2, :])
            qs.append(jnp.concatenate(pats, axis=-1)
                      .reshape(n * ph * pw, kh * kw * c))
    return jnp.stack(qs, axis=0), (n, ph, pw)


def conv_relu_pool(x, w, b):
    """x: NHWC f32; w: [KH,KW,Cin,Cout]; b: [Cout].
    Returns maxpool2x2(relu(conv_valid(x, w) + b)) as NHWC f32."""
    kh, kw, cin, cout = w.shape
    x_bf = x.astype(jnp.bfloat16)
    pmat, (n, ph, pw) = _pool_im2col(x_bf, kh, kw)
    _, m, k = pmat.shape

    kp = _round_up(k, 128)
    np_ = _round_up(cout, 128)
    tm = _round_up(m, 16) if m <= 512 else 128
    mp = _round_up(m, tm)

    xp = jnp.pad(pmat, ((0, 0), (0, mp - m), (0, kp - k)))
    wp = jnp.pad(w.astype(jnp.bfloat16).reshape(kh * kw * cin, cout),
                 ((0, kp - k), (0, np_ - cout)))
    bp = jnp.pad(b.astype(jnp.float32), (0, np_ - cout)).reshape(1, np_)

    out = pl.pallas_call(
        _conv_relu_pool_kernel,
        out_shape=jax.ShapeDtypeStruct((mp, np_), jnp.float32),
        grid_spec=pltpu.PrefetchScalarGridSpec(
            num_scalar_prefetch=0,
            grid=(mp // tm,),
            in_specs=[
                pl.BlockSpec((4, tm, kp), lambda i: (0, i, 0)),
                pl.BlockSpec((kp, np_), lambda i: (0, 0)),
                pl.BlockSpec((1, np_), lambda i: (0, 0)),
            ],
            out_specs=pl.BlockSpec((tm, np_), lambda i: (i, 0)),
        ),
        compiler_params=pltpu.CompilerParams(
            dimension_semantics=("parallel",)),
    )(xp, wp, bp)
    return out[:m, :cout].reshape(n, ph, pw, cout)


def mlp_head(x, w1, b1, w2, b2, w3, b3):
    """logits = fc3(relu(fc2(relu(fc1(x))))) fused in one Pallas kernel."""
    m, k1 = x.shape
    n1, n2, n3 = w1.shape[1], w2.shape[1], w3.shape[1]
    mp = _round_up(m, 16)
    k1p = _round_up(k1, 128)
    n1p = _round_up(n1, 128)
    n2p = _round_up(n2, 128)
    n3p = _round_up(n3, 128)

    xp = jnp.pad(x.astype(jnp.bfloat16), ((0, mp - m), (0, k1p - k1)))
    w1p = jnp.pad(w1.astype(jnp.bfloat16), ((0, k1p - k1), (0, n1p - n1)))
    w2p = jnp.pad(w2.astype(jnp.bfloat16), ((0, n1p - n1), (0, n2p - n2)))
    w3p = jnp.pad(w3.astype(jnp.bfloat16), ((0, n2p - n2), (0, n3p - n3)))
    b1p = jnp.pad(b1.astype(jnp.float32), (0, n1p - n1)).reshape(1, n1p)
    b2p = jnp.pad(b2.astype(jnp.float32), (0, n2p - n2)).reshape(1, n2p)
    b3p = jnp.pad(b3.astype(jnp.float32), (0, n3p - n3)).reshape(1, n3p)

    out = pl.pallas_call(
        _mlp_kernel,
        out_shape=jax.ShapeDtypeStruct((mp, n3p), jnp.float32),
    )(xp, w1p, b1p, w2p, b2p, w3p, b3p)
    return out[:m, :n3]


# ------------------------------- parameters ---------------------------------

def init_params(key, num_classes):
    ks = list(jax.random.split(key, 10))

    def conv_w(k, kh, kw, cin, cout):
        bound = 1.0 / jnp.sqrt(kh * kw * cin)
        return jax.random.uniform(k, (kh, kw, cin, cout), jnp.float32,
                                  -bound, bound)

    def lin_w(k, fin, fout):
        bound = 1.0 / jnp.sqrt(fin)
        return jax.random.uniform(k, (fin, fout), jnp.float32, -bound, bound)

    def bias(k, fan_in, c):
        bound = 1.0 / jnp.sqrt(fan_in)
        return jax.random.uniform(k, (c,), jnp.float32, -bound, bound)

    return dict(
        conv1_w=conv_w(ks[0], 5, 5, 3, 6),   conv1_b=bias(ks[1], 5 * 5 * 3, 6),
        conv2_w=conv_w(ks[2], 5, 5, 6, 16),  conv2_b=bias(ks[3], 5 * 5 * 6, 16),
        fc1_w=lin_w(ks[4], 16 * 5 * 5, 120), fc1_b=bias(ks[5], 400, 120),
        fc2_w=lin_w(ks[6], 120, 84),         fc2_b=bias(ks[7], 120, 84),
        fc3_w=lin_w(ks[8], 84, num_classes), fc3_b=bias(ks[9], 84, num_classes),
    )


# --------------------------------- forward ----------------------------------

def forward(params, x_nchw):
    x = jnp.transpose(x_nchw, (0, 2, 3, 1))                    # NCHW -> NHWC
    h = conv_relu_pool(x, params['conv1_w'], params['conv1_b'])  # [N,14,14,6]
    h = conv_relu_pool(h, params['conv2_w'], params['conv2_b'])  # [N,5,5,16]
    n = h.shape[0]
    # match PyTorch's x.view(-1, 16*5*5) flatten order (C, H, W)
    h = jnp.transpose(h, (0, 3, 1, 2)).reshape(n, 16 * 5 * 5)
    return mlp_head(h,
                    params['fc1_w'], params['fc1_b'],
                    params['fc2_w'], params['fc2_b'],
                    params['fc3_w'], params['fc3_b'])


# ----------------------------------- main ------------------------------------

if __name__ == "__main__":
    NUM_CLASSES = 100
    params = init_params(jax.random.PRNGKey(0), NUM_CLASSES)
    x = jax.random.normal(jax.random.PRNGKey(0), (2, 3, 32, 32), jnp.float32)

    fwd = jax.jit(forward)
    out = jax.block_until_ready(fwd(params, x))

    assert out.shape == (2, NUM_CLASSES), out.shape
    assert bool(jnp.all(jnp.isfinite(out)))
    print("KERNEL_OK")
</pallas_src>

<mosaic_0001>
module attributes {stable_mosaic.version = 11 : i64} {
  func.func @_conv_relu_pool_kernel(%arg0: i32, %arg1: memref<4x400x128xbf16, #tpu.memory_space<vmem>>, %arg2: memref<128x128xbf16, #tpu.memory_space<vmem>>, %arg3: memref<1x128xf32, #tpu.memory_space<vmem>>, %arg4: memref<400x128xf32, #tpu.memory_space<vmem>>) attributes {dimension_semantics = [#tpu.dimension_semantics<parallel>], iteration_bounds = array<i64: 1>, scalar_prefetch = 0 : i64, scratch_operands = 0 : i64, tpu.core_type = #tpu.core_type<tc>, window_params = [{transform_indices = @transform_0, window_bounds = array<i64: 4, 400, 128>}, {pipeline_mode = #tpu.pipeline_mode<synchronous>, transform_indices = @transform_1, window_bounds = array<i64: 128, 128>}, {pipeline_mode = #tpu.pipeline_mode<synchronous>, transform_indices = @transform_2, window_bounds = array<i64: 1, 128>}, {transform_indices = @transform_3, window_bounds = array<i64: 400, 128>}]} {
    %c0 = arith.constant 0 : index
    %c0_0 = arith.constant 0 : index
    %0 = vector.load %arg2[%c0, %c0_0] : memref<128x128xbf16, #tpu.memory_space<vmem>>, vector<128x128xbf16>
    %c0_1 = arith.constant 0 : index
    %c0_2 = arith.constant 0 : index
    %1 = vector.load %arg3[%c0_1, %c0_2] : memref<1x128xf32, #tpu.memory_space<vmem>>, vector<1x128xf32>
    %c0_3 = arith.constant 0 : index
    %c0_4 = arith.constant 0 : index
    %c0_5 = arith.constant 0 : index
    %2 = vector.load %arg1[%c0_3, %c0_4, %c0_5] : memref<4x400x128xbf16, #tpu.memory_space<vmem>>, vector<1x400x128xbf16>
    %3 = vector.shape_cast %2 : vector<1x400x128xbf16> to vector<400x128xbf16>
    %cst = arith.constant dense<0.000000e+00> : vector<400x128xf32>
    %4 = tpu.matmul %3, %0, %cst {dimension_numbers = #tpu.dot_dimension_numbers<[1], [0], [0], [1], [0, 0, 1, 1], [], []>} : vector<400x128xbf16>, vector<128x128xbf16>, vector<400x128xf32> -> vector<400x128xf32>
    %5 = vector.broadcast %1 : vector<1x128xf32> to vector<400x128xf32>
    %6 = arith.addf %4, %5 : vector<400x128xf32>
    %c1 = arith.constant 1 : index
    %c0_6 = arith.constant 0 : index
    %c0_7 = arith.constant 0 : index
    %7 = vector.load %arg1[%c1, %c0_6, %c0_7] : memref<4x400x128xbf16, #tpu.memory_space<vmem>>, vector<1x400x128xbf16>
    %8 = vector.shape_cast %7 : vector<1x400x128xbf16> to vector<400x128xbf16>
    %cst_8 = arith.constant dense<0.000000e+00> : vector<400x128xf32>
    %9 = tpu.matmul %8, %0, %cst_8 {dimension_numbers = #tpu.dot_dimension_numbers<[1], [0], [0], [1], [0, 0, 1, 1], [], []>} : vector<400x128xbf16>, vector<128x128xbf16>, vector<400x128xf32> -> vector<400x128xf32>
    %10 = vector.broadcast %1 : vector<1x128xf32> to vector<400x128xf32>
    %11 = arith.addf %9, %10 : vector<400x128xf32>
    %c2 = arith.constant 2 : index
    %c0_9 = arith.constant 0 : index
    %c0_10 = arith.constant 0 : index
    %12 = vector.load %arg1[%c2, %c0_9, %c0_10] : memref<4x400x128xbf16, #tpu.memory_space<vmem>>, vector<1x400x128xbf16>
    %13 = vector.shape_cast %12 : vector<1x400x128xbf16> to vector<400x128xbf16>
    %cst_11 = arith.constant dense<0.000000e+00> : vector<400x128xf32>
    %14 = tpu.matmul %13, %0, %cst_11 {dimension_numbers = #tpu.dot_dimension_numbers<[1], [0], [0], [1], [0, 0, 1, 1], [], []>} : vector<400x128xbf16>, vector<128x128xbf16>, vector<400x128xf32> -> vector<400x128xf32>
    %15 = vector.broadcast %1 : vector<1x128xf32> to vector<400x128xf32>
    %16 = arith.addf %14, %15 : vector<400x128xf32>
    %c3 = arith.constant 3 : index
    %c0_12 = arith.constant 0 : index
    %c0_13 = arith.constant 0 : index
    %17 = vector.load %arg1[%c3, %c0_12, %c0_13] : memref<4x400x128xbf16, #tpu.memory_space<vmem>>, vector<1x400x128xbf16>
    %18 = vector.shape_cast %17 : vector<1x400x128xbf16> to vector<400x128xbf16>
    %cst_14 = arith.constant dense<0.000000e+00> : vector<400x128xf32>
    %19 = tpu.matmul %18, %0, %cst_14 {dimension_numbers = #tpu.dot_dimension_numbers<[1], [0], [0], [1], [0, 0, 1, 1], [], []>} : vector<400x128xbf16>, vector<128x128xbf16>, vector<400x128xf32> -> vector<400x128xf32>
    %20 = vector.broadcast %1 : vector<1x128xf32> to vector<400x128xf32>
    %21 = arith.addf %19, %20 : vector<400x128xf32>
    %22 = arith.maximumf %6, %11 : vector<400x128xf32>
    %23 = arith.maximumf %16, %21 : vector<400x128xf32>
    %24 = arith.maximumf %22, %23 : vector<400x128xf32>
    %cst_15 = arith.constant 0.000000e+00 : f32
    %25 = vector.broadcast %cst_15 : f32 to vector<400x128xf32>
    %26 = arith.maximumf %24, %25 : vector<400x128xf32>
    %c0_16 = arith.constant 0 : index
    %c0_17 = arith.constant 0 : index
    %27 = vector.load %arg4[%c0_16, %c0_17] : memref<400x128xf32, #tpu.memory_space<vmem>>, vector<400x128xf32>
    tpu.vector_store %arg4[%c0_16, %c0_17], %26 {strides = array<i32>} : memref<400x128xf32, #tpu.memory_space<vmem>>, vector<400x128xf32>,
    return
  }
  func.func @transform_0(%arg0: i32) -> (i32, i32, i32) {
    %c0_i32 = arith.constant 0 : i32
    %c0_i32_0 = arith.constant 0 : i32
    %c0_i32_1 = arith.constant 0 : i32
    return %c0_i32, %arg0, %c0_i32_0 : i32, i32, i32
  }
  func.func @transform_1(%arg0: i32) -> (i32, i32) {
    %c0_i32 = arith.constant 0 : i32
    %c0_i32_0 = arith.constant 0 : i32
    %c0_i32_1 = arith.constant 0 : i32
    return %c0_i32, %c0_i32_0 : i32, i32
  }
  func.func @transform_2(%arg0: i32) -> (i32, i32) {
    %c0_i32 = arith.constant 0 : i32
    %c0_i32_0 = arith.constant 0 : i32
    %c0_i32_1 = arith.constant 0 : i32
    return %c0_i32, %c0_i32_0 : i32, i32
  }
  func.func @transform_3(%arg0: i32) -> (i32, i32) {
    %c0_i32 = arith.constant 0 : i32
    %c0_i32_0 = arith.constant 0 : i32
    return %arg0, %c0_i32 : i32, i32
  }
}

module attributes {stable_mosaic.version = 11 : i64} {
  func.func @_conv_relu_pool_kernel(%arg0: i32, %arg1: memref<4x64x256xbf16, #tpu.memory_space<vmem>>, %arg2: memref<256x128xbf16, #tpu.memory_space<vmem>>, %arg3: memref<1x128xf32, #tpu.memory_space<vmem>>, %arg4: memref<64x128xf32, #tpu.memory_space<vmem>>) attributes {dimension_semantics = [#tpu.dimension_semantics<parallel>], iteration_bounds = array<i64: 1>, scalar_prefetch = 0 : i64, scratch_operands = 0 : i64, tpu.core_type = #tpu.core_type<tc>, window_params = [{transform_indices = @transform_0, window_bounds = array<i64: 4, 64, 256>}, {pipeline_mode = #tpu.pipeline_mode<synchronous>, transform_indices = @transform_1, window_bounds = array<i64: 256, 128>}, {pipeline_mode = #tpu.pipeline_mode<synchronous>, transform_indices = @transform_2, window_bounds = array<i64: 1, 128>}, {transform_indices = @transform_3, window_bounds = array<i64: 64, 128>}]} {
    %c0 = arith.constant 0 : index
    %c0_0 = arith.constant 0 : index
    %0 = vector.load %arg2[%c0, %c0_0] : memref<256x128xbf16, #tpu.memory_space<vmem>>, vector<256x128xbf16>
    %c0_1 = arith.constant 0 : index
    %c0_2 = arith.constant 0 : index
    %1 = vector.load %arg3[%c0_1, %c0_2] : memref<1x128xf32, #tpu.memory_space<vmem>>, vector<1x128xf32>
    %c0_3 = arith.constant 0 : index
    %c0_4 = arith.constant 0 : index
    %c0_5 = arith.constant 0 : index
    %2 = vector.load %arg1[%c0_3, %c0_4, %c0_5] : memref<4x64x256xbf16, #tpu.memory_space<vmem>>, vector<1x64x256xbf16>
    %3 = vector.shape_cast %2 : vector<1x64x256xbf16> to vector<64x256xbf16>
    %cst = arith.constant dense<0.000000e+00> : vector<64x128xf32>
    %4 = tpu.matmul %3, %0, %cst {dimension_numbers = #tpu.dot_dimension_numbers<[1], [0], [0], [1], [0, 0, 1, 1], [], []>} : vector<64x256xbf16>, vector<256x128xbf16>, vector<64x128xf32> -> vector<64x128xf32>
    %5 = vector.broadcast %1 : vector<1x128xf32> to vector<64x128xf32>
    %6 = arith.addf %4, %5 : vector<64x128xf32>
    %c1 = arith.constant 1 : index
    %c0_6 = arith.constant 0 : index
    %c0_7 = arith.constant 0 : index
    %7 = vector.load %arg1[%c1, %c0_6, %c0_7] : memref<4x64x256xbf16, #tpu.memory_space<vmem>>, vector<1x64x256xbf16>
    %8 = vector.shape_cast %7 : vector<1x64x256xbf16> to vector<64x256xbf16>
    %cst_8 = arith.constant dense<0.000000e+00> : vector<64x128xf32>
    %9 = tpu.matmul %8, %0, %cst_8 {dimension_numbers = #tpu.dot_dimension_numbers<[1], [0], [0], [1], [0, 0, 1, 1], [], []>} : vector<64x256xbf16>, vector<256x128xbf16>, vector<64x128xf32> -> vector<64x128xf32>
    %10 = vector.broadcast %1 : vector<1x128xf32> to vector<64x128xf32>
    %11 = arith.addf %9, %10 : vector<64x128xf32>
    %c2 = arith.constant 2 : index
    %c0_9 = arith.constant 0 : index
    %c0_10 = arith.constant 0 : index
    %12 = vector.load %arg1[%c2, %c0_9, %c0_10] : memref<4x64x256xbf16, #tpu.memory_space<vmem>>, vector<1x64x256xbf16>
    %13 = vector.shape_cast %12 : vector<1x64x256xbf16> to vector<64x256xbf16>
    %cst_11 = arith.constant dense<0.000000e+00> : vector<64x128xf32>
    %14 = tpu.matmul %13, %0, %cst_11 {dimension_numbers = #tpu.dot_dimension_numbers<[1], [0], [0], [1], [0, 0, 1, 1], [], []>} : vector<64x256xbf16>, vector<256x128xbf16>, vector<64x128xf32> -> vector<64x128xf32>
    %15 = vector.broadcast %1 : vector<1x128xf32> to vector<64x128xf32>
    %16 = arith.addf %14, %15 : vector<64x128xf32>
    %c3 = arith.constant 3 : index
    %c0_12 = arith.constant 0 : index
    %c0_13 = arith.constant 0 : index
    %17 = vector.load %arg1[%c3, %c0_12, %c0_13] : memref<4x64x256xbf16, #tpu.memory_space<vmem>>, vector<1x64x256xbf16>
    %18 = vector.shape_cast %17 : vector<1x64x256xbf16> to vector<64x256xbf16>
    %cst_14 = arith.constant dense<0.000000e+00> : vector<64x128xf32>
    %19 = tpu.matmul %18, %0, %cst_14 {dimension_numbers = #tpu.dot_dimension_numbers<[1], [0], [0], [1], [0, 0, 1, 1], [], []>} : vector<64x256xbf16>, vector<256x128xbf16>, vector<64x128xf32> -> vector<64x128xf32>
    %20 = vector.broadcast %1 : vector<1x128xf32> to vector<64x128xf32>
    %21 = arith.addf %19, %20 : vector<64x128xf32>
    %22 = arith.maximumf %6, %11 : vector<64x128xf32>
    %23 = arith.maximumf %16, %21 : vector<64x128xf32>
    %24 = arith.maximumf %22, %23 : vector<64x128xf32>
    %cst_15 = arith.constant 0.000000e+00 : f32
    %25 = vector.broadcast %cst_15 : f32 to vector<64x128xf32>
    %26 = arith.maximumf %24, %25 : vector<64x128xf32>
    %c0_16 = arith.constant 0 : index
    %c0_17 = arith.constant 0 : index
    %27 = vector.load %arg4[%c0_16, %c0_17] : memref<64x128xf32, #tpu.memory_space<vmem>>, vector<64x128xf32>
    tpu.vector_store %arg4[%c0_16, %c0_17], %26 {strides = array<i32>} : memref<64x128xf32, #tpu.memory_space<vmem>>, vector<64x128xf32>,
    return
  }
  func.func @transform_0(%arg0: i32) -> (i32, i32, i32) {
    %c0_i32 = arith.constant 0 : i32
    %c0_i32_0 = arith.constant 0 : i32
    %c0_i32_1 = arith.constant 0 : i32
    return %c0_i32, %arg0, %c0_i32_0 : i32, i32, i32
  }
  func.func @transform_1(%arg0: i32) -> (i32, i32) {
    %c0_i32 = arith.constant 0 : i32
    %c0_i32_0 = arith.constant 0 : i32
    %c0_i32_1 = arith.constant 0 : i32
    return %c0_i32, %c0_i32_0 : i32, i32
  }
  func.func @transform_2(%arg0: i32) -> (i32, i32) {
    %c0_i32 = arith.constant 0 : i32
    %c0_i32_0 = arith.constant 0 : i32
    %c0_i32_1 = arith.constant 0 : i32
    return %c0_i32, %c0_i32_0 : i32, i32
  }
  func.func @transform_3(%arg0: i32) -> (i32, i32) {
    %c0_i32 = arith.constant 0 : i32
    %c0_i32_0 = arith.constant 0 : i32
    return %arg0, %c0_i32 : i32, i32
  }
}

module attributes {stable_mosaic.version = 11 : i64} {
  func.func @_mlp_kernel(%arg0: memref<16x512xbf16, #tpu.memory_space<vmem>>, %arg1: memref<512x128xbf16, #tpu.memory_space<vmem>>, %arg2: memref<1x128xf32, #tpu.memory_space<vmem>>, %arg3: memref<128x128xbf16, #tpu.memory_space<vmem>>, %arg4: memref<1x128xf32, #tpu.memory_space<vmem>>, %arg5: memref<128x128xbf16, #tpu.memory_space<vmem>>, %arg6: memref<1x128xf32, #tpu.memory_space<vmem>>, %arg7: memref<16x128xf32, #tpu.memory_space<vmem>>) attributes {dimension_semantics = [], scalar_prefetch = 0 : i64, scratch_operands = 0 : i64, tpu.core_type = #tpu.core_type<tc>} {
    %c0 = arith.constant 0 : index
    %c0_0 = arith.constant 0 : index
    %0 = vector.load %arg0[%c0, %c0_0] : memref<16x512xbf16, #tpu.memory_space<vmem>>, vector<16x512xbf16>
    %c0_1 = arith.constant 0 : index
    %c0_2 = arith.constant 0 : index
    %1 = vector.load %arg1[%c0_1, %c0_2] : memref<512x128xbf16, #tpu.memory_space<vmem>>, vector<512x128xbf16>
    %cst = arith.constant dense<0.000000e+00> : vector<16x128xf32>
    %2 = tpu.matmul %0, %1, %cst {dimension_numbers = #tpu.dot_dimension_numbers<[1], [0], [0], [1], [0, 0, 1, 1], [], []>} : vector<16x512xbf16>, vector<512x128xbf16>, vector<16x128xf32> -> vector<16x128xf32>
    %c0_3 = arith.constant 0 : index
    %c0_4 = arith.constant 0 : index
    %3 = vector.load %arg2[%c0_3, %c0_4] : memref<1x128xf32, #tpu.memory_space<vmem>>, vector<1x128xf32>
    %4 = vector.broadcast %3 : vector<1x128xf32> to vector<16x128xf32>
    %5 = arith.addf %2, %4 : vector<16x128xf32>
    %cst_5 = arith.constant 0.000000e+00 : f32
    %6 = vector.broadcast %cst_5 : f32 to vector<16x128xf32>
    %7 = arith.maximumf %5, %6 : vector<16x128xf32>
    %8 = arith.truncf %7 : vector<16x128xf32> to vector<16x128xbf16>
    %c0_6 = arith.constant 0 : index
    %c0_7 = arith.constant 0 : index
    %9 = vector.load %arg3[%c0_6, %c0_7] : memref<128x128xbf16, #tpu.memory_space<vmem>>, vector<128x128xbf16>
    %cst_8 = arith.constant dense<0.000000e+00> : vector<16x128xf32>
    %10 = tpu.matmul %8, %9, %cst_8 {dimension_numbers = #tpu.dot_dimension_numbers<[1], [0], [0], [1], [0, 0, 1, 1], [], []>} : vector<16x128xbf16>, vector<128x128xbf16>, vector<16x128xf32> -> vector<16x128xf32>
    %c0_9 = arith.constant 0 : index
    %c0_10 = arith.constant 0 : index
    %11 = vector.load %arg4[%c0_9, %c0_10] : memref<1x128xf32, #tpu.memory_space<vmem>>, vector<1x128xf32>
    %12 = vector.broadcast %11 : vector<1x128xf32> to vector<16x128xf32>
    %13 = arith.addf %10, %12 : vector<16x128xf32>
    %cst_11 = arith.constant 0.000000e+00 : f32
    %14 = vector.broadcast %cst_11 : f32 to vector<16x128xf32>
    %15 = arith.maximumf %13, %14 : vector<16x128xf32>
    %16 = arith.truncf %15 : vector<16x128xf32> to vector<16x128xbf16>
    %c0_12 = arith.constant 0 : index
    %c0_13 = arith.constant 0 : index
    %17 = vector.load %arg5[%c0_12, %c0_13] : memref<128x128xbf16, #tpu.memory_space<vmem>>, vector<128x128xbf16>
    %cst_14 = arith.constant dense<0.000000e+00> : vector<16x128xf32>
    %18 = tpu.matmul %16, %17, %cst_14 {dimension_numbers = #tpu.dot_dimension_numbers<[1], [0], [0], [1], [0, 0, 1, 1], [], []>} : vector<16x128xbf16>, vector<128x128xbf16>, vector<16x128xf32> -> vector<16x128xf32>
    %c0_15 = arith.constant 0 : index
    %c0_16 = arith.constant 0 : index
    %19 = vector.load %arg6[%c0_15, %c0_16] : memref<1x128xf32, #tpu.memory_space<vmem>>, vector<1x128xf32>
    %20 = vector.broadcast %19 : vector<1x128xf32> to vector<16x128xf32>
    %21 = arith.addf %18, %20 : vector<16x128xf32>
    %c0_17 = arith.constant 0 : index
    %c0_18 = arith.constant 0 : index
    %22 = vector.load %arg7[%c0_17, %c0_18] : memref<16x128xf32, #tpu.memory_space<vmem>>, vector<16x128xf32>
    tpu.vector_store %arg7[%c0_17, %c0_18], %21 {strides = array<i32>} : memref<16x128xf32, #tpu.memory_space<vmem>>, vector<16x128xf32>,
    return
  }
}

</mosaic_0001>

<llo_original>
// kernel: forward.3
$region0: #{forward.3}
  #allocation0 [shape = 'u32[]', space=smem, size = 0x4, offset = 0x4, fixed_abs, tag = 'smem constant byte address 0x4 - core index']
  #allocation1 [shape = 'u32[144,128]{1,0:T(1,128)}', space=vmem, size = 0x12000, scoped, tag = 'internal scratch']
  %s0 = inlined_call_operand.vmem [shape: bf16[4,400,128], index: 0, kind: input, shape index: {}]
  %s1 = inlined_call_operand.vmem [shape: bf16[128,128], index: 1, kind: input, shape index: {}]
  %s2 = inlined_call_operand.vmem [shape: f32[1,128], index: 2, kind: input, shape index: {}]
  %s3 = inlined_call_operand.vmem [shape: f32[400,128], index: 3, kind: output, shape index: {}]
  %s4 = sld [smem:[#allocation0]]
  $region22: #{forward.3} parent=0
    _
  %s6 = ssub.s32 1, %s4
  %s7 = scalar_select 0, %s6, %s4
  // Predicated region
  $region2: #{forward.3} parent=0 // pred_check
    _
  $region3: #{forward.3} parent=0 // pred_check_branch
    %9 = sbr.rel (0) target = $region5
  $region4: #{forward.3} parent=0 // pred_region
    _
  $region5: #{forward.3} parent=0 // pred_fallthru
    _
  // Predicated region
  $region6: #{forward.3} parent=0 // pred_check
    _
  $region7: #{forward.3} parent=0 // pred_check_branch
    %11 = sbr.rel (0) target = $region9
  $region8: #{forward.3} parent=0 // pred_region
    _
  $region9: #{forward.3} parent=0 // pred_fallthru
    _
  // Predicated region
  $region10: #{forward.3} parent=0 // pred_check
    _
  $region11: #{forward.3} parent=0 // pred_check_branch
    %13 = sbr.rel (0) target = $region13
  $region12: #{forward.3} parent=0 // pred_region
    _
  $region13: #{forward.3} parent=0 // pred_fallthru
    _
  %v15 = vld [vmem:[%s1] sm:$0xf]
  %v16 = vld [vmem:[%s1 + $0x4] sm:$0xf]
  %v17 = vld [vmem:[%s1 + $0x8] sm:$0xf]
  %v18 = vld [vmem:[%s1 + $0xc] sm:$0xf]
  %v19 = vld [vmem:[%s1 + $0x10] sm:$0xf]
  %v20 = vld [vmem:[%s1 + $0x14] sm:$0xf]
  %v21 = vld [vmem:[%s1 + $0x18] sm:$0xf]
  %v22 = vld [vmem:[%s1 + $0x1c] sm:$0xf]
  %v23 = vld [vmem:[%s1 + $0x20] sm:$0xf]
  %v24 = vld [vmem:[%s1 + $0x24] sm:$0xf]
  %v25 = vld [vmem:[%s1 + $0x28] sm:$0xf]
  %v26 = vld [vmem:[%s1 + $0x2c] sm:$0xf]
  %v27 = vld [vmem:[%s1 + $0x30] sm:$0xf]
  %v28 = vld [vmem:[%s1 + $0x34] sm:$0xf]
  %v29 = vld [vmem:[%s1 + $0x38] sm:$0xf]
  %v30 = vld [vmem:[%s1 + $0x3c] sm:$0xf]
  %v31 = vld [vmem:[%s2] sm:$0x1]
  %v32 = vld [vmem:[%s0] sm:$0xf]
  %v33 = vld [vmem:[%s0 + $0x4] sm:$0xf]
  %v34 = vld [vmem:[%s0 + $0x8] sm:$0xf]
  %v35 = vld [vmem:[%s0 + $0xc] sm:$0xf]
  %v36 = vld [vmem:[%s0 + $0x10] sm:$0xf]
  %v37 = vld [vmem:[%s0 + $0x14] sm:$0xf]
  %v38 = vld [vmem:[%s0 + $0x18] sm:$0xf]
  %v39 = vld [vmem:[%s0 + $0x1c] sm:$0xf]
  %v40 = vld [vmem:[%s0 + $0x20] sm:$0xf]
  %v41 = vld [vmem:[%s0 + $0x24] sm:$0xf]
  %v42 = vld [vmem:[%s0 + $0x28] sm:$0xf]
  %v43 = vld [vmem:[%s0 + $0x2c] sm:$0xf]
  %v44 = vld [vmem:[%s0 + $0x30] sm:$0xf]
  %v45 = vld [vmem:[%s0 + $0x34] sm:$0xf]
  %v46 = vld [vmem:[%s0 + $0x38] sm:$0xf]
  %v47 = vld [vmem:[%s0 + $0x3c] sm:$0xf]
  %v48 = vld [vmem:[%s0 + $0x40] sm:$0xf]
  %v49 = vld [vmem:[%s0 + $0x44] sm:$0xf]
  %v50 = vld [vmem:[%s0 + $0x48] sm:$0xf]
  %v51 = vld [vmem:[%s0 + $0x4c] sm:$0xf]
  %v52 = vld [vmem:[%s0 + $0x50] sm:$0xf]
  %v53 = vld [vmem:[%s0 + $0x54] sm:$0xf]
  %v54 = vld [vmem:[%s0 + $0x58] sm:$0xf]
  %v55 = vld [vmem:[%s0 + $0x5c] sm:$0xf]
  %v56 = vld [vmem:[%s0 + $0x60] sm:$0xf]
  %v57 = vld [vmem:[%s0 + $0x64] sm:$0xf]
  %v58 = vld [vmem:[%s0 + $0x68] sm:$0xf]
  %v59 = vld [vmem:[%s0 + $0x6c] sm:$0xf]
  %v60 = vld [vmem:[%s0 + $0x70] sm:$0xf]
  %v61 = vld [vmem:[%s0 + $0x74] sm:$0xf]
  %v62 = vld [vmem:[%s0 + $0x78] sm:$0xf]
  %v63 = vld [vmem:[%s0 + $0x7c] sm:$0xf]
  %v64 = vld [vmem:[%s0 + $0x80] sm:$0xf]
  %v65 = vld [vmem:[%s0 + $0x84] sm:$0xf]
  %v66 = vld [vmem:[%s0 + $0x88] sm:$0xf]
  %v67 = vld [vmem:[%s0 + $0x8c] sm:$0xf]
  %v68 = vld [vmem:[%s0 + $0x90] sm:$0xf]
  %v69 = vld [vmem:[%s0 + $0x94] sm:$0xf]
  %v70 = vld [vmem:[%s0 + $0x98] sm:$0xf]
  %v71 = vld [vmem:[%s0 + $0x9c] sm:$0xf]
  %v72 = vld [vmem:[%s0 + $0xa0] sm:$0xf]
  %v73 = vld [vmem:[%s0 + $0xa4] sm:$0xf]
  %v74 = vld [vmem:[%s0 + $0xa8] sm:$0xf]
  %v75 = vld [vmem:[%s0 + $0xac] sm:$0xf]
  %v76 = vld [vmem:[%s0 + $0xb0] sm:$0xf]
  %v77 = vld [vmem:[%s0 + $0xb4] sm:$0xf]
  %v78 = vld [vmem:[%s0 + $0xb8] sm:$0xf]
  %v79 = vld [vmem:[%s0 + $0xbc] sm:$0xf]
  %v80 = vld [vmem:[%s0 + $0xc0] sm:$0xf]
  %v81 = vld [vmem:[%s0 + $0xc4] sm:$0xf]
  %v83 = vlaneseq
  %v84 = vshrl.u32 %v83, 7
  %v85 = vsub.s32 0, %v84
  %v86 = vrot.slane %v31, %v85
  %v138 = vunpack.c.l.b16 %v32
  %v139 = vunpack.c.l.b16 %v33
  %v140 = vunpack.c.l.b16 %v34
  %v141 = vunpack.c.l.b16 %v35
  %v142 = vunpack.c.l.b16 %v36
  %v143 = vunpack.c.l.b16 %v37
  %v144 = vunpack.c.l.b16 %v38
  %v145 = vunpack.c.l.b16 %v39
  %v146 = vunpack.c.l.b16 %v40
  %v147 = vunpack.c.l.b16 %v41
  %v148 = vunpack.c.l.b16 %v42
  %v149 = vunpack.c.l.b16 %v43
  %v150 = vunpack.c.l.b16 %v44
  %v151 = vunpack.c.l.b16 %v45
  %v152 = vunpack.c.l.b16 %v46
  %v153 = vunpack.c.l.b16 %v47
  %v154 = vunpack.c.l.b16 %v48
  %v155 = vunpack.c.l.b16 %v49
  %v156 = vunpack.c.l.b16 %v50
  %v157 = vunpack.c.l.b16 %v51
  %v158 = vunpack.c.l.b16 %v52
  %v159 = vunpack.c.l.b16 %v53
  %v160 = vunpack.c.l.b16 %v54
  %v161 = vunpack.c.l.b16 %v55
  %v162 = vunpack.c.l.b16 %v56
  %v163 = vunpack.c.l.b16 %v57
  %v164 = vunpack.c.l.b16 %v58
  %v165 = vunpack.c.l.b16 %v59
  %v166 = vunpack.c.l.b16 %v60
  %v167 = vunpack.c.l.b16 %v61
  %v168 = vunpack.c.l.b16 %v62
  %v169 = vunpack.c.l.b16 %v63
  %v170 = vunpack.c.l.b16 %v64
  %v171 = vunpack.c.l.b16 %v65
  %v172 = vunpack.c.l.b16 %v66
  %v173 = vunpack.c.l.b16 %v67
  %v174 = vunpack.c.l.b16 %v68
  %v175 = vunpack.c.l.b16 %v69
  %v176 = vunpack.c.l.b16 %v70
  %v177 = vunpack.c.l.b16 %v71
  %v178 = vunpack.c.l.b16 %v72
  %v179 = vunpack.c.l.b16 %v73
  %v180 = vunpack.c.l.b16 %v74
  %v181 = vunpack.c.l.b16 %v75
  %v182 = vunpack.c.l.b16 %v76
  %v183 = vunpack.c.l.b16 %v77
  %v184 = vunpack.c.l.b16 %v78
  %v185 = vunpack.c.l.b16 %v79
  %v186 = vunpack.c.l.b16 %v80
  %v187 = vunpack.c.l.b16 %v81
  %v188 = vpack.c.b16 %v139, %v138
  %v189 = vpack.c.b16 %v141, %v140
  %v190 = vpack.c.b16 %v143, %v142
  %v191 = vpack.c.b16 %v145, %v144
  %v192 = vpack.c.b16 %v147, %v146
  %v193 = vpack.c.b16 %v149, %v148
  %v194 = vpack.c.b16 %v151, %v150
  %v195 = vpack.c.b16 %v153, %v152
  %v196 = vpack.c.b16 %v155, %v154
  %v197 = vpack.c.b16 %v157, %v156
  %v198 = vpack.c.b16 %v159, %v158
  %v199 = vpack.c.b16 %v161, %v160
  %v200 = vpack.c.b16 %v163, %v162
  %v201 = vpack.c.b16 %v165, %v164
  %v202 = vpack.c.b16 %v167, %v166
  %v203 = vpack.c.b16 %v169, %v168
  %v204 = vpack.c.b16 %v171, %v170
  %v205 = vpack.c.b16 %v173, %v172
  %v206 = vpack.c.b16 %v175, %v174
  %v207 = vpack.c.b16 %v177, %v176
  %v208 = vpack.c.b16 %v179, %v178
  %v209 = vpack.c.b16 %v181, %v180
  %v210 = vpack.c.b16 %v183, %v182
  %v211 = vpack.c.b16 %v185, %v184
  %v212 = vpack.c.b16 %v187, %v186
  %v254 = vunpack.c.l.b16 %v15
  %v255 = vunpack.c.l.b16 %v16
  %v256 = vunpack.c.l.b16 %v17
  %v257 = vunpack.c.l.b16 %v18
  %v258 = vunpack.c.l.b16 %v19
  %v259 = vunpack.c.l.b16 %v20
  %v260 = vunpack.c.l.b16 %v21
  %v261 = vunpack.c.l.b16 %v22
  %v262 = vunpack.c.l.b16 %v23
  %v263 = vunpack.c.l.b16 %v24
  %v264 = vunpack.c.l.b16 %v25
  %v265 = vunpack.c.l.b16 %v26
  %v266 = vunpack.c.l.b16 %v27
  %v267 = vunpack.c.l.b16 %v28
  %v268 = vunpack.c.l.b16 %v29
  %v269 = vunpack.c.l.b16 %v30
  %v270 = vpack.c.b16 %v255, %v254
  %v271 = vpack.c.b16 %v257, %v256
  %v272 = vpack.c.b16 %v259, %v258
  %v273 = vpack.c.b16 %v261, %v260
  %v274 = vpack.c.b16 %v263, %v262
  %v275 = vpack.c.b16 %v265, %v264
  %v276 = vpack.c.b16 %v267, %v266
  %v277 = vpack.c.b16 %v269, %v268
  %286 = vmatprep.subr.bf16.mxu0 0
  %287 = vmatpush1.bf16.msra.mxu0 %v270
  %288 = vmatprep.subr.bf16.mxu0 0
  %289 = vmatpush1.bf16.msra.mxu0 %v271
  %290 = vmatprep.subr.bf16.mxu0 0
  %291 = vmatpush1.bf16.msra.mxu0 %v272
  %292 = vmatprep.subr.bf16.mxu0 0
  %293 = vmatpush1.bf16.msra.mxu0 %v273
  %294 = vmatprep.subr.bf16.mxu0 0
  %295 = vmatpush1.bf16.msra.mxu0 %v274
  %296 = vmatprep.subr.bf16.mxu0 0
  %297 = vmatpush1.bf16.msra.mxu0 %v275
  %298 = vmatprep.subr.bf16.mxu0 0
  %299 = vmatpush1.bf16.msra.mxu0 %v276
  %300 = vmatprep.subr.bf16.mxu0 0
  %301 = vmatpush1.bf16.msra.mxu0 %v277
  %302 = vmatprep.subr.bf16.mxu0 0
  %303 = vmatpush1.bf16.msra.mxu0 0
  %304 = vmatprep.subr.bf16.mxu0 0
  %305 = vmatpush1.bf16.msra.mxu0 0
  %306 = vmatprep.subr.bf16.mxu0 0
  %307 = vmatpush1.bf16.msra.mxu0 0
  %308 = vmatprep.subr.bf16.mxu0 0
  %309 = vmatpush1.bf16.msra.mxu0 0
  %310 = vmatprep.subr.bf16.mxu0 0
  %311 = vmatpush1.bf16.msra.mxu0 0
  %312 = vmatprep.subr.bf16.mxu0 0
  %313 = vmatpush1.bf16.msra.mxu0 0
  %314 = vmatprep.subr.bf16.mxu0 0
  %315 = vmatpush1.bf16.msra.mxu0 0
  %316 = vmatprep.subr.bf16.mxu0 0
  %317 = vmatpush1.bf16.msra.mxu0 0
  %318 = vmatprep.mubr.bf16.mxu0 0
  %319 = vmatmul.mubr.bf16.gmra.mrb[0].mxu0 %v188
  %v320 = vpop.f32.mrb[0].mxu0
  %v321 = vadd.f32 %v86, %v320
  %v322 = vpop.f32.mrb[0].mxu0
  %v323 = vpop.f32.mrb[0].mxu0
  %v324 = vadd.f32 %v86, %v323
  %v325 = vpop.f32.mrb[0].mxu0
  %326 = vmatprep.mubr.bf16.mxu0 0
  %327 = vmatmul.mubr.bf16.gmra.mrb[0].mxu0 %v189
  %v328 = vpop.f32.mrb[0].mxu0
  %v329 = vadd.f32 %v86, %v328
  %v330 = vpop.f32.mrb[0].mxu0
  %v331 = vpop.f32.mrb[0].mxu0
  %v332 = vadd.f32 %v86, %v331
  %v333 = vpop.f32.mrb[0].mxu0
  %334 = vmatprep.mubr.bf16.mxu0 0
  %335 = vmatmul.mubr.bf16.gmra.mrb[0].mxu0 %v190
  %v336 = vpop.f32.mrb[0].mxu0
  %v337 = vadd.f32 %v86, %v336
  %v338 = vpop.f32.mrb[0].mxu0
  %v339 = vpop.f32.mrb[0].mxu0
  %v340 = vadd.f32 %v86, %v339
  %v341 = vpop.f32.mrb[0].mxu0
  %342 = vmatprep.mubr.bf16.mxu0 0
  %343 = vmatmul.mubr.bf16.gmra.mrb[0].mxu0 %v191
  %v344 = vpop.f32.mrb[0].mxu0
  %v345 = vadd.f32 %v86, %v344
  %v346 = vpop.f32.mrb[0].mxu0
  %v347 = vpop.f32.mrb[0].mxu0
  %v348 = vadd.f32 %v86, %v347
  %v349 = vpop.f32.mrb[0].mxu0
  %350 = vmatprep.mubr.bf16.mxu0 0
  %351 = vmatmul.mubr.bf16.gmra.mrb[0].mxu0 %v192
  %v352 = vpop.f32.mrb[0].mxu0
  %v353 = vadd.f32 %v86, %v352
  %v354 = vpop.f32.mrb[0].mxu0
  %v355 = vpop.f32.mrb[0].mxu0
  %v356 = vadd.f32 %v86, %v355
  %v357 = vpop.f32.mrb[0].mxu0
  %358 = vmatprep.mubr.bf16.mxu0 0
  %359 = vmatmul.mubr.bf16.gmra.mrb[0].mxu0 %v193
  %v360 = vpop.f32.mrb[0].mxu0
  %v361 = vadd.f32 %v86, %v360
  %v362 = vpop.f32.mrb[0].mxu0
  %v363 = vpop.f32.mrb[0].mxu0
  %v364 = vadd.f32 %v86, %v363
  %v365 = vpop.f32.mrb[0].mxu0
  %366 = vmatprep.mubr.bf16.mxu0 0
  %367 = vmatmul.mubr.bf16.gmra.mrb[0].mxu0 %v194
  %v368 = vpop.f32.mrb[0].mxu0
  %v369 = vadd.f32 %v86, %v368
  %v370 = vpop.f32.mrb[0].mxu0
  %v371 = vpop.f32.mrb[0].mxu0
  %v372 = vadd.f32 %v86, %v371
  %v373 = vpop.f32.mrb[0].mxu0
  %374 = vmatprep.mubr.bf16.mxu0 0
  %375 = vmatmul.mubr.bf16.gmra.mrb[0].mxu0 %v195
  %v376 = vpop.f32.mrb[0].mxu0
  %v377 = vadd.f32 %v86, %v376
  %v378 = vpop.f32.mrb[0].mxu0
  %v379 = vpop.f32.mrb[0].mxu0
  %v380 = vadd.f32 %v86, %v379
  %v381 = vpop.f32.mrb[0].mxu0
  %382 = vmatprep.mubr.bf16.mxu0 0
  %383 = vmatmul.mubr.bf16.gmra.mrb[0].mxu0 %v196
  %v384 = vpop.f32.mrb[0].mxu0
  %v385 = vadd.f32 %v86, %v384
  %v386 = vpop.f32.mrb[0].mxu0
  %v387 = vpop.f32.mrb[0].mxu0
  %v388 = vadd.f32 %v86, %v387
  %v389 = vpop.f32.mrb[0].mxu0
  %390 = vmatprep.mubr.bf16.mxu0 0
  %391 = vmatmul.mubr.bf16.gmra.mrb[0].mxu0 %v197
  %v392 = vpop.f32.mrb[0].mxu0
  %v393 = vadd.f32 %v86, %v392
  %v394 = vpop.f32.mrb[0].mxu0
  %v395 = vpop.f32.mrb[0].mxu0
  %v396 = vadd.f32 %v86, %v395
  %v397 = vpop.f32.mrb[0].mxu0
  %398 = vmatprep.mubr.bf16.mxu0 0
  %399 = vmatmul.mubr.bf16.gmra.mrb[0].mxu0 %v198
  %v400 = vpop.f32.mrb[0].mxu0
  %v401 = vadd.f32 %v86, %v400
  %v402 = vpop.f32.mrb[0].mxu0
  %v403 = vpop.f32.mrb[0].mxu0
  %v404 = vadd.f32 %v86, %v403
  %v405 = vpop.f32.mrb[0].mxu0
  %406 = vmatprep.mubr.bf16.mxu0 0
  %407 = vmatmul.mubr.bf16.gmra.mrb[0].mxu0 %v199
  %v408 = vpop.f32.mrb[0].mxu0
  %v409 = vadd.f32 %v86, %v408
  %v410 = vpop.f32.mrb[0].mxu0
  %v411 = vpop.f32.mrb[0].mxu0
  %v412 = vadd.f32 %v86, %v411
  %v413 = vpop.f32.mrb[0].mxu0
  %414 = vmatprep.mubr.bf16.mxu0 0
  %415 = vmatmul.mubr.bf16.gmra.mrb[0].mxu0 %v200
  %v416 = vpop.f32.mrb[0].mxu0
  %v417 = vadd.f32 %v86, %v416
  %v418 = vpop.f32.mrb[0].mxu0
  %v419 = vpop.f32.mrb[0].mxu0
  %v420 = vadd.f32 %v86, %v419
  %v421 = vpop.f32.mrb[0].mxu0
  %422 = vmatprep.mubr.bf16.mxu0 0
  %423 = vmatmul.mubr.bf16.gmra.mrb[0].mxu0 %v201
  %v424 = vpop.f32.mrb[0].mxu0
  %v425 = vadd.f32 %v86, %v424
  %v426 = vpop.f32.mrb[0].mxu0
  %v427 = vpop.f32.mrb[0].mxu0
  %v428 = vadd.f32 %v86, %v427
  %v429 = vpop.f32.mrb[0].mxu0
  %430 = vmatprep.mubr.bf16.mxu0 0
  %431 = vmatmul.mubr.bf16.gmra.mrb[0].mxu0 %v202
  %v432 = vpop.f32.mrb[0].mxu0
  %v433 = vadd.f32 %v86, %v432
  %v434 = vpop.f32.mrb[0].mxu0
  %v435 = vpop.f32.mrb[0].mxu0
  %v436 = vadd.f32 %v86, %v435
  %v437 = vpop.f32.mrb[0].mxu0
  %438 = vmatprep.mubr.bf16.mxu0 0
  %439 = vmatmul.mubr.bf16.gmra.mrb[0].mxu0 %v203
  %v440 = vpop.f32.mrb[0].mxu0
  %v441 = vadd.f32 %v86, %v440
  %v442 = vpop.f32.mrb[0].mxu0
  %v443 = vpop.f32.mrb[0].mxu0
  %v444 = vadd.f32 %v86, %v443
  %v445 = vpop.f32.mrb[0].mxu0
  %446 = vmatprep.mubr.bf16.mxu0 0
  %447 = vmatmul.mubr.bf16.gmra.mrb[0].mxu0 %v204
  %v448 = vpop.f32.mrb[0].mxu0
  %v449 = vadd.f32 %v86, %v448
  %v450 = vpop.f32.mrb[0].mxu0
  %v451 = vpop.f32.mrb[0].mxu0
  %v452 = vadd.f32 %v86, %v451
  %v453 = vpop.f32.mrb[0].mxu0
  %454 = vmatprep.mubr.bf16.mxu0 0
  %455 = vmatmul.mubr.bf16.gmra.mrb[0].mxu0 %v205
  %v456 = vpop.f32.mrb[0].mxu0
  %v457 = vadd.f32 %v86, %v456
  %v458 = vpop.f32.mrb[0].mxu0
  %v459 = vpop.f32.mrb[0].mxu0
  %v460 = vadd.f32 %v86, %v459
  %v461 = vpop.f32.mrb[0].mxu0
  %462 = vmatprep.mubr.bf16.mxu0 0
  %463 = vmatmul.mubr.bf16.gmra.mrb[0].mxu0 %v206
  %v464 = vpop.f32.mrb[0].mxu0
  %v465 = vadd.f32 %v86, %v464
  %v466 = vpop.f32.mrb[0].mxu0
  %v467 = vpop.f32.mrb[0].mxu0
  %v468 = vadd.f32 %v86, %v467
  %v469 = vpop.f32.mrb[0].mxu0
  %470 = vmatprep.mubr.bf16.mxu0 0
  %471 = vmatmul.mubr.bf16.gmra.mrb[0].mxu0 %v207
  %v472 = vpop.f32.mrb[0].mxu0
  %v473 = vadd.f32 %v86, %v472
  %v474 = vpop.f32.mrb[0].mxu0
  %v475 = vpop.f32.mrb[0].mxu0
  %v476 = vadd.f32 %v86, %v475
  %v477 = vpop.f32.mrb[0].mxu0
  %478 = vmatprep.mubr.bf16.mxu0 0
  %479 = vmatmul.mubr.bf16.gmra.mrb[0].mxu0 %v208
  %v480 = vpop.f32.mrb[0].mxu0
  %v481 = vadd.f32 %v86, %v480
  %v482 = vpop.f32.mrb[0].mxu0
  %v483 = vpop.f32.mrb[0].mxu0
  %v484 = vadd.f32 %v86, %v483
  %v485 = vpop.f32.mrb[0].mxu0
  %486 = vmatprep.mubr.bf16.mxu0 0
  %487 = vmatmul.mubr.bf16.gmra.mrb[0].mxu0 %v209
  %v488 = vpop.f32.mrb[0].mxu0
  %v489 = vadd.f32 %v86, %v488
  %v490 = vpop.f32.mrb[0].mxu0
  %v491 = vpop.f32.mrb[0].mxu0
  %v492 = vadd.f32 %v86, %v491
  %v493 = vpop.f32.mrb[0].mxu0
  %494 = vmatprep.mubr.bf16.mxu0 0
  %495 = vmatmul.mubr.bf16.gmra.mrb[0].mxu0 %v210
  %v496 = vpop.f32.mrb[0].mxu0
  %v497 = vadd.f32 %v86, %v496
  %v498 = vpop.f32.mrb[0].mxu0
  %v499 = vpop.f32.mrb[0].mxu0
  %v500 = vadd.f32 %v86, %v499
  %v501 = vpop.f32.mrb[0].mxu0
  %502 = vmatprep.mubr.bf16.mxu0 0
  %503 = vmatmul.mubr.bf16.gmra.mrb[0].mxu0 %v211
  %v504 = vpop.f32.mrb[0].mxu0
  %v505 = vadd.f32 %v86, %v504
  %v506 = vpop.f32.mrb[0].mxu0
  %v507 = vpop.f32.mrb[0].mxu0
  %v508 = vadd.f32 %v86, %v507
  %v509 = vpop.f32.mrb[0].mxu0
  %510 = vmatprep.mubr.bf16.mxu0 0
  %511 = vmatmul.mubr.bf16.gmra.mrb[0].mxu0 %v212
  %v512 = vpop.f32.mrb[0].mxu0
  %v513 = vadd.f32 %v86, %v512
  %v514 = vpop.f32.mrb[0].mxu0
  %v515 = vpop.f32.mrb[0].mxu0
  %v516 = vadd.f32 %v86, %v515
  %v517 = vpop.f32.mrb[0].mxu0
  %518 = vdwg.mxu0
  %s519 = scalar_lea.vmem %s0, 200
  %v520 = vld [vmem:[%s519] sm:$0xf]
  %v521 = vld [vmem:[%s519 + $0x4] sm:$0xf]
  %v522 = vld [vmem:[%s519 + $0x8] sm:$0xf]
  %v523 = vld [vmem:[%s519 + $0xc] sm:$0xf]
  %v524 = vld [vmem:[%s519 + $0x10] sm:$0xf]
  %v525 = vld [vmem:[%s519 + $0x14] sm:$0xf]
  %v526 = vld [vmem:[%s519 + $0x18] sm:$0xf]
  %v527 = vld [vmem:[%s519 + $0x1c] sm:$0xf]
  %v528 = vld [vmem:[%s519 + $0x20] sm:$0xf]
  %v529 = vld [vmem:[%s519 + $0x24] sm:$0xf]
  %v530 = vld [vmem:[%s519 + $0x28] sm:$0xf]
  %v531 = vld [vmem:[%s519 + $0x2c] sm:$0xf]
  %v532 = vld [vmem:[%s519 + $0x30] sm:$0xf]
  %v533 = vld [vmem:[%s519 + $0x34] sm:$0xf]
  %v534 = vld [vmem:[%s519 + $0x38] sm:$0xf]
  %v535 = vld [vmem:[%s519 + $0x3c] sm:$0xf]
  %v536 = vld [vmem:[%s519 + $0x40] sm:$0xf]
  %v537 = vld [vmem:[%s519 + $0x44] sm:$0xf]
  %v538 = vld [vmem:[%s519 + $0x48] sm:$0xf]
  %v539 = vld [vmem:[%s519 + $0x4c] sm:$0xf]
  %v540 = vld [vmem:[%s519 + $0x50] sm:$0xf]
  %v541 = vld [vmem:[%s519 + $0x54] sm:$0xf]
  %v542 = vld [vmem:[%s519 + $0x58] sm:$0xf]
  %v543 = vld [vmem:[%s519 + $0x5c] sm:$0xf]
  %v544 = vld [vmem:[%s519 + $0x60] sm:$0xf]
  %v545 = vld [vmem:[%s519 + $0x64] sm:$0xf]
  %v546 = vld [vmem:[%s519 + $0x68] sm:$0xf]
  %v547 = vld [vmem:[%s519 + $0x6c] sm:$0xf]
  %v548 = vld [vmem:[%s519 + $0x70] sm:$0xf]
  %v549 = vld [vmem:[%s519 + $0x74] sm:$0xf]
  %v550 = vld [vmem:[%s519 + $0x78] sm:$0xf]
  %v551 = vld [vmem:[%s519 + $0x7c] sm:$0xf]
  %v552 = vld [vmem:[%s519 + $0x80] sm:$0xf]
  %v553 = vld [vmem:[%s519 + $0x84] sm:$0xf]
  %v554 = vld [vmem:[%s519 + $0x88] sm:$0xf]
  %v555 = vld [vmem:[%s519 + $0x8c] sm:$0xf]
  %v556 = vld [vmem:[%s519 + $0x90] sm:$0xf]
  %v557 = vld [vmem:[%s519 + $0x94] sm:$0xf]
  %v558 = vld [vmem:[%s519 + $0x98] sm:$0xf]
  %v559 = vld [vmem:[%s519 + $0x9c] sm:$0xf]
  %v560 = vld [vmem:[%s519 + $0xa0] sm:$0xf]
  %v561 = vld [vmem:[%s519 + $0xa4] sm:$0xf]
  %v562 = vld [vmem:[%s519 + $0xa8] sm:$0xf]
  %v563 = vld [vmem:[%s519 + $0xac] sm:$0xf]
  %v564 = vld [vmem:[%s519 + $0xb0] sm:$0xf]
  %v565 = vld [vmem:[%s519 + $0xb4] sm:$0xf]
  %v566 = vld [vmem:[%s519 + $0xb8] sm:$0xf]
  %v567 = vld [vmem:[%s519 + $0xbc] sm:$0xf]
  %v568 = vld [vmem:[%s519 + $0xc0] sm:$0xf]
  %v569 = vld [vmem:[%s519 + $0xc4] sm:$0xf]
  %v620 = vunpack.c.l.b16 %v520
  %v621 = vunpack.c.l.b16 %v521
  %v622 = vunpack.c.l.b16 %v522
  %v623 = vunpack.c.l.b16 %v523
  %v624 = vunpack.c.l.b16 %v524
  %v625 = vunpack.c.l.b16 %v525
  %v626 = vunpack.c.l.b16 %v526
  %v627 = vunpack.c.l.b16 %v527
  %v628 = vunpack.c.l.b16 %v528
  %v629 = vunpack.c.l.b16 %v529
  %v630 = vunpack.c.l.b16 %v530
  %v631 = vunpack.c.l.b16 %v531
  %v632 = vunpack.c.l.b16 %v532
  %v633 = vunpack.c.l.b16 %v533
  %v634 = vunpack.c.l.b16 %v534
  %v635 = vunpack.c.l.b16 %v535
  %v636 = vunpack.c.l.b16 %v536
  %v637 = vunpack.c.l.b16 %v537
  %v638 = vunpack.c.l.b16 %v538
  %v639 = vunpack.c.l.b16 %v539
  %v640 = vunpack.c.l.b16 %v540
  %v641 = vunpack.c.l.b16 %v541
  %v642 = vunpack.c.l.b16 %v542
  %v643 = vunpack.c.l.b16 %v543
  %v644 = vunpack.c.l.b16 %v544
  %v645 = vunpack.c.l.b16 %v545
  %v646 = vunpack.c.l.b16 %v546
  %v647 = vunpack.c.l.b16 %v547
  %v648 = vunpack.c.l.b16 %v548
  %v649 = vunpack.c.l.b16 %v549
  %v650 = vunpack.c.l.b16 %v550
  %v651 = vunpack.c.l.b16 %v551
  %v652 = vunpack.c.l.b16 %v552
  %v653 = vunpack.c.l.b16 %v553
  %v654 = vunpack.c.l.b16 %v554
  %v655 = vunpack.c.l.b16 %v555
  %v656 = vunpack.c.l.b16 %v556
  %v657 = vunpack.c.l.b16 %v557
  %v658 = vunpack.c.l.b16 %v558
  %v659 = vunpack.c.l.b16 %v559
  %v660 = vunpack.c.l.b16 %v560
  %v661 = vunpack.c.l.b16 %v561
  %v662 = vunpack.c.l.b16 %v562
  %v663 = vunpack.c.l.b16 %v563
  %v664 = vunpack.c.l.b16 %v564
  %v665 = vunpack.c.l.b16 %v565
  %v666 = vunpack.c.l.b16 %v566
  %v667 = vunpack.c.l.b16 %v567
  %v668 = vunpack.c.l.b16 %v568
  %v669 = vunpack.c.l.b16 %v569
  %v670 = vpack.c.b16 %v621, %v620
  %v671 = vpack.c.b16 %v623, %v622
  %v672 = vpack.c.b16 %v625, %v624
  %v673 = vpack.c.b16 %v627, %v626
  %v674 = vpack.c.b16 %v629, %v628
  %v675 = vpack.c.b16 %v631, %v630
  %v676 = vpack.c.b16 %v633, %v632
  %v677 = vpack.c.b16 %v635, %v634
  %v678 = vpack.c.b16 %v637, %v636
  %v679 = vpack.c.b16 %v639, %v638
  %v680 = vpack.c.b16 %v641, %v640
  %v681 = vpack.c.b16 %v643, %v642
  %v682 = vpack.c.b16 %v645, %v644
  %v683 = vpack.c.b16 %v647, %v646
  %v684 = vpack.c.b16 %v649, %v648
  %v685 = vpack.c.b16 %v651, %v650
  %v686 = vpack.c.b16 %v653, %v652
  %v687 = vpack.c.b16 %v655, %v654
  %v688 = vpack.c.b16 %v657, %v656
  %v689 = vpack.c.b16 %v659, %v658
  %v690 = vpack.c.b16 %v661, %v660
  %v691 = vpack.c.b16 %v663, %v662
  %v692 = vpack.c.b16 %v665, %v664
  %v693 = vpack.c.b16 %v667, %v666
  %v694 = vpack.c.b16 %v669, %v668
  %720 = vmatprep.subr.bf16.mxu0 0
  %721 = vmatpush1.bf16.msra.mxu0 %v270
  %722 = vmatprep.subr.bf16.mxu0 0
  %723 = vmatpush1.bf16.msra.mxu0 %v271
  %724 = vmatprep.subr.bf16.mxu0 0
  %725 = vmatpush1.bf16.msra.mxu0 %v272
  %726 = vmatprep.subr.bf16.mxu0 0
  %727 = vmatpush1.bf16.msra.mxu0 %v273
  %728 = vmatprep.subr.bf16.mxu0 0
  %729 = vmatpush1.bf16.msra.mxu0 %v274
  %730 = vmatprep.subr.bf16.mxu0 0
  %731 = vmatpush1.bf16.msra.mxu0 %v275
  %732 = vmatprep.subr.bf16.mxu0 0
  %733 = vmatpush1.bf16.msra.mxu0 %v276
  %734 = vmatprep.subr.bf16.mxu0 0
  %735 = vmatpush1.bf16.msra.mxu0 %v277
  %736 = vmatprep.subr.bf16.mxu0 0
  %737 = vmatpush1.bf16.msra.mxu0 0
  %738 = vmatprep.subr.bf16.mxu0 0
  %739 = vmatpush1.bf16.msra.mxu0 0
  %740 = vmatprep.subr.bf16.mxu0 0
  %741 = vmatpush1.bf16.msra.mxu0 0
  %742 = vmatprep.subr.bf16.mxu0 0
  %743 = vmatpush1.bf16.msra.mxu0 0
  %744 = vmatprep.subr.bf16.mxu0 0
  %745 = vmatpush1.bf16.msra.mxu0 0
  %746 = vmatprep.subr.bf16.mxu0 0
  %747 = vmatpush1.bf16.msra.mxu0 0
  %748 = vmatprep.subr.bf16.mxu0 0
  %749 = vmatpush1.bf16.msra.mxu0 0
  %750 = vmatprep.subr.bf16.mxu0 0
  %751 = vmatpush1.bf16.msra.mxu0 0
  %752 = vmatprep.mubr.bf16.mxu0 0
  %753 = vmatmul.mubr.bf16.gmra.mrb[0].mxu0 %v670
  %v754 = vpop.f32.mrb[0].mxu0
  %v755 = vadd.f32 %v86, %v754
  %v756 = vpop.f32.mrb[0].mxu0
  %v757 = vpop.f32.mrb[0].mxu0
  %v758 = vadd.f32 %v86, %v757
  %v759 = vpop.f32.mrb[0].mxu0
  %760 = vmatprep.mubr.bf16.mxu0 0
  %761 = vmatmul.mubr.bf16.gmra.mrb[0].mxu0 %v671
  %v762 = vpop.f32.mrb[0].mxu0
  %v763 = vadd.f32 %v86, %v762
  %v764 = vpop.f32.mrb[0].mxu0
  %v765 = vpop.f32.mrb[0].mxu0
  %v766 = vadd.f32 %v86, %v765
  %v767 = vpop.f32.mrb[0].mxu0
  %768 = vmatprep.mubr.bf16.mxu0 0
  %769 = vmatmul.mubr.bf16.gmra.mrb[0].mxu0 %v672
  %v770 = vpop.f32.mrb[0].mxu0
  %v771 = vadd.f32 %v86, %v770
  %v772 = vpop.f32.mrb[0].mxu0
  %v773 = vpop.f32.mrb[0].mxu0
  %v774 = vadd.f32 %v86, %v773
  %v775 = vpop.f32.mrb[0].mxu0
  %776 = vmatprep.mubr.bf16.mxu0 0
  %777 = vmatmul.mubr.bf16.gmra.mrb[0].mxu0 %v673
  %v778 = vpop.f32.mrb[0].mxu0
  %v779 = vadd.f32 %v86, %v778
  %v780 = vpop.f32.mrb[0].mxu0
  %v781 = vpop.f32.mrb[0].mxu0
  %v782 = vadd.f32 %v86, %v781
  %v783 = vpop.f32.mrb[0].mxu0
  %784 = vmatprep.mubr.bf16.mxu0 0
  %785 = vmatmul.mubr.bf16.gmra.mrb[0].mxu0 %v674
  %v786 = vpop.f32.mrb[0].mxu0
  %v787 = vadd.f32 %v86, %v786
  %v788 = vpop.f32.mrb[0].mxu0
  %v789 = vpop.f32.mrb[0].mxu0
  %v790 = vadd.f32 %v86, %v789
  %v791 = vpop.f32.mrb[0].mxu0
  %792 = vmatprep.mubr.bf16.mxu0 0
  %793 = vmatmul.mubr.bf16.gmra.mrb[0].mxu0 %v675
  %v794 = vpop.f32.mrb[0].mxu0
  %v795 = vadd.f32 %v86, %v794
  %v796 = vpop.f32.mrb[0].mxu0
  %v797 = vpop.f32.mrb[0].mxu0
  %v798 = vadd.f32 %v86, %v797
  %v799 = vpop.f32.mrb[0].mxu0
  %800 = vmatprep.mubr.bf16.mxu0 0
  %801 = vmatmul.mubr.bf16.gmra.mrb[0].mxu0 %v676
  %v802 = vpop.f32.mrb[0].mxu0
  %v803 = vadd.f32 %v86, %v802
  %v804 = vpop.f32.mrb[0].mxu0
  %v805 = vpop.f32.mrb[0].mxu0
  %v806 = vadd.f32 %v86, %v805
  %v807 = vpop.f32.mrb[0].mxu0
  %808 = vmatprep.mubr.bf16.mxu0 0
  %809 = vmatmul.mubr.bf16.gmra.mrb[0].mxu0 %v677
  %v810 = vpop.f32.mrb[0].mxu0
  %v811 = vadd.f32 %v86, %v810
  %v812 = vpop.f32.mrb[0].mxu0
  %v813 = vpop.f32.mrb[0].mxu0
  %v814 = vadd.f32 %v86, %v813
  %v815 = vpop.f32.mrb[0].mxu0
  %816 = vmatprep.mubr.bf16.mxu0 0
  %817 = vmatmul.mubr.bf16.gmra.mrb[0].mxu0 %v678
  %v818 = vpop.f32.mrb[0].mxu0
  %v819 = vadd.f32 %v86, %v818
  %v820 = vpop.f32.mrb[0].mxu0
  %v821 = vpop.f32.mrb[0].mxu0
  %v822 = vadd.f32 %v86, %v821
  %v823 = vpop.f32.mrb[0].mxu0
  %824 = vmatprep.mubr.bf16.mxu0 0
  %825 = vmatmul.mubr.bf16.gmra.mrb[0].mxu0 %v679
  %v826 = vpop.f32.mrb[0].mxu0
  %v827 = vadd.f32 %v86, %v826
  %v828 = vpop.f32.mrb[0].mxu0
  %v829 = vpop.f32.mrb[0].mxu0
  %v830 = vadd.f32 %v86, %v829
  %v831 = vpop.f32.mrb[0].mxu0
  %832 = vmatprep.mubr.bf16.mxu0 0
  %833 = vmatmul.mubr.bf16.gmra.mrb[0].mxu0 %v680
  %v834 = vpop.f32.mrb[0].mxu0
  %v835 = vadd.f32 %v86, %v834
  %v836 = vpop.f32.mrb[0].mxu0
  %v837 = vpop.f32.mrb[0].mxu0
  %v838 = vadd.f32 %v86, %v837
  %v839 = vpop.f32.mrb[0].mxu0
  %840 = vmatprep.mubr.bf16.mxu0 0
  %841 = vmatmul.mubr.bf16.gmra.mrb[0].mxu0 %v681
  %v842 = vpop.f32.mrb[0].mxu0
  %v843 = vadd.f32 %v86, %v842
  %v844 = vpop.f32.mrb[0].mxu0
  %v845 = vpop.f32.mrb[0].mxu0
  %v846 = vadd.f32 %v86, %v845
  %v847 = vpop.f32.mrb[0].mxu0
  %848 = vmatprep.mubr.bf16.mxu0 0
  %849 = vmatmul.mubr.bf16.gmra.mrb[0].mxu0 %v682
  %v850 = vpop.f32.mrb[0].mxu0
  %v851 = vadd.f32 %v86, %v850
  %v852 = vpop.f32.mrb[0].mxu0
  %v853 = vpop.f32.mrb[0].mxu0
  %v854 = vadd.f32 %v86, %v853
  %v855 = vpop.f32.mrb[0].mxu0
  %856 = vmatprep.mubr.bf16.mxu0 0
  %857 = vmatmul.mubr.bf16.gmra.mrb[0].mxu0 %v683
  %v858 = vpop.f32.mrb[0].mxu0
  %v859 = vadd.f32 %v86, %v858
  %v860 = vpop.f32.mrb[0].mxu0
  %v861 = vpop.f32.mrb[0].mxu0
  %v862 = vadd.f32 %v86, %v861
  %v863 = vpop.f32.mrb[0].mxu0
  %864 = vmatprep.mubr.bf16.mxu0 0
  %865 = vmatmul.mubr.bf16.gmra.mrb[0].mxu0 %v684
  %v866 = vpop.f32.mrb[0].mxu0
  %v867 = vadd.f32 %v86, %v866
  %v868 = vpop.f32.mrb[0].mxu0
  %v869 = vpop.f32.mrb[0].mxu0
  %v870 = vadd.f32 %v86, %v869
  %v871 = vpop.f32.mrb[0].mxu0
  %872 = vmatprep.mubr.bf16.mxu0 0
  %873 = vmatmul.mubr.bf16.gmra.mrb[0].mxu0 %v685
  %v874 = vpop.f32.mrb[0].mxu0
  %v875 = vadd.f32 %v86, %v874
  %v876 = vpop.f32.mrb[0].mxu0
  %v877 = vpop.f32.mrb[0].mxu0
  %v878 = vadd.f32 %v86, %v877
  %v879 = vpop.f32.mrb[0].mxu0
  %880 = vmatprep.mubr.bf16.mxu0 0
  %881 = vmatmul.mubr.bf16.gmra.mrb[0].mxu0 %v686
  %v882 = vpop.f32.mrb[0].mxu0
  %v883 = vadd.f32 %v86, %v882
  %v884 = vpop.f32.mrb[0].mxu0
  %v885 = vpop.f32.mrb[0].mxu0
  %v886 = vadd.f32 %v86, %v885
  %v887 = vpop.f32.mrb[0].mxu0
  %888 = vmatprep.mubr.bf16.mxu0 0
  %889 = vmatmul.mubr.bf16.gmra.mrb[0].mxu0 %v687
  %v890 = vpop.f32.mrb[0].mxu0
  %v891 = vadd.f32 %v86, %v890
  %v892 = vpop.f32.mrb[0].mxu0
  %v893 = vpop.f32.mrb[0].mxu0
  %v894 = vadd.f32 %v86, %v893
  %v895 = vpop.f32.mrb[0].mxu0
  %896 = vmatprep.mubr.bf16.mxu0 0
  %897 = vmatmul.mubr.bf16.gmra.mrb[0].mxu0 %v688
  %v898 = vpop.f32.mrb[0].mxu0
  %v899 = vadd.f32 %v86, %v898
  %v900 = vpop.f32.mrb[0].mxu0
  %v901 = vpop.f32.mrb[0].mxu0
  %v902 = vadd.f32 %v86, %v901
  %v903 = vpop.f32.mrb[0].mxu0
  %904 = vmatprep.mubr.bf16.mxu0 0
  %905 = vmatmul.mubr.bf16.gmra.mrb[0].mxu0 %v689
  %v906 = vpop.f32.mrb[0].mxu0
  %v907 = vadd.f32 %v86, %v906
  %v908 = vpop.f32.mrb[0].mxu0
  %v909 = vpop.f32.mrb[0].mxu0
  %v910 = vadd.f32 %v86, %v909
  %v911 = vpop.f32.mrb[0].mxu0
  %912 = vmatprep.mubr.bf16.mxu0 0
  %913 = vmatmul.mubr.bf16.gmra.mrb[0].mxu0 %v690
  %v914 = vpop.f32.mrb[0].mxu0
  %v915 = vadd.f32 %v86, %v914
  %v916 = vpop.f32.mrb[0].mxu0
  %v917 = vpop.f32.mrb[0].mxu0
  %v918 = vadd.f32 %v86, %v917
  %v919 = vpop.f32.mrb[0].mxu0
  %920 = vmatprep.mubr.bf16.mxu0 0
  %921 = vmatmul.mubr.bf16.gmra.mrb[0].mxu0 %v691
  %v922 = vpop.f32.mrb[0].mxu0
  %v923 = vadd.f32 %v86, %v922
  %v924 = vpop.f32.mrb[0].mxu0
  %v925 = vpop.f32.mrb[0].mxu0
  %v926 = vadd.f32 %v86, %v925
  %v927 = vpop.f32.mrb[0].mxu0
  %928 = vmatprep.mubr.bf16.mxu0 0
  %929 = vmatmul.mubr.bf16.gmra.mrb[0].mxu0 %v692
  %v930 = vpop.f32.mrb[0].mxu0
  %v931 = vadd.f32 %v86, %v930
  %v932 = vpop.f32.mrb[0].mxu0
  %v933 = vpop.f32.mrb[0].mxu0
  %v934 = vadd.f32 %v86, %v933
  %v935 = vpop.f32.mrb[0].mxu0
  %936 = vmatprep.mubr.bf16.mxu0 0
  %937 = vmatmul.mubr.bf16.gmra.mrb[0].mxu0 %v693
  %v938 = vpop.f32.mrb[0].mxu0
  %v939 = vadd.f32 %v86, %v938
  %v940 = vpop.f32.mrb[0].mxu0
  %v941 = vpop.f32.mrb[0].mxu0
  %v942 = vadd.f32 %v86, %v941
  %v943 = vpop.f32.mrb[0].mxu0
  %944 = vmatprep.mubr.bf16.mxu0 0
  %945 = vmatmul.mubr.bf16.gmra.mrb[0].mxu0 %v694
  %v946 = vpop.f32.mrb[0].mxu0
  %v947 = vadd.f32 %v86, %v946
  %v948 = vpop.f32.mrb[0].mxu0
  %v949 = vpop.f32.mrb[0].mxu0
  %v950 = vadd.f32 %v86, %v949
  %v951 = vpop.f32.mrb[0].mxu0
  %952 = vdwg.mxu0
  %s953 = scalar_lea.vmem %s0, 400
  %v954 = vld [vmem:[%s953] sm:$0xf]
  %v955 = vld [vmem:[%s953 + $0x4] sm:$0xf]
  %v956 = vld [vmem:[%s953 + $0x8] sm:$0xf]
  %v957 = vld [vmem:[%s953 + $0xc] sm:$0xf]
  %v958 = vld [vmem:[%s953 + $0x10] sm:$0xf]
  %v959 = vld [vmem:[%s953 + $0x14] sm:$0xf]
  %v960 = vld [vmem:[%s953 + $0x18] sm:$0xf]
  %v961 = vld [vmem:[%s953 + $0x1c] sm:$0xf]
  %v962 = vld [vmem:[%s953 + $0x20] sm:$0xf]
  %v963 = vld [vmem:[%s953 + $0x24] sm:$0xf]
  %v964 = vld [vmem:[%s953 + $0x28] sm:$0xf]
  %v965 = vld [vmem:[%s953 + $0x2c] sm:$0xf]
  %v966 = vld [vmem:[%s953 + $0x30] sm:$0xf]
  %v967 = vld [vmem:[%s953 + $0x34] sm:$0xf]
  %v968 = vld [vmem:[%s953 + $0x38] sm:$0xf]
  %v969 = vld [vmem:[%s953 + $0x3c] sm:$0xf]
  %v970 = vld [vmem:[%s953 + $0x40] sm:$0xf]
  %v971 = vld [vmem:[%s953 + $0x44] sm:$0xf]
  %v972 = vld [vmem:[%s953 + $0x48] sm:$0xf]
  %v973 = vld [vmem:[%s953 + $0x4c] sm:$0xf]
  %v974 = vld [vmem:[%s953 + $0x50] sm:$0xf]
  %v975 = vld [vmem:[%s953 + $0x54] sm:$0xf]
  %v976 = vld [vmem:[%s953 + $0x58] sm:$0xf]
  %v977 = vld [vmem:[%s953 + $0x5c] sm:$0xf]
  %v978 = vld [vmem:[%s953 + $0x60] sm:$0xf]
  %v979 = vld [vmem:[%s953 + $0x64] sm:$0xf]
  %v980 = vld [vmem:[%s953 + $0x68] sm:$0xf]
  %v981 = vld [vmem:[%s953 + $0x6c] sm:$0xf]
  %v982 = vld [vmem:[%s953 + $0x70] sm:$0xf]
  %v983 = vld [vmem:[%s953 + $0x74] sm:$0xf]
  %v984 = vld [vmem:[%s953 + $0x78] sm:$0xf]
  %v985 = vld [vmem:[%s953 + $0x7c] sm:$0xf]
  %v986 = vld [vmem:[%s953 + $0x80] sm:$0xf]
  %v987 = vld [vmem:[%s953 + $0x84] sm:$0xf]
  %v988 = vld [vmem:[%s953 + $0x88] sm:$0xf]
  %v989 = vld [vmem:[%s953 + $0x8c] sm:$0xf]
  %v990 = vld [vmem:[%s953 + $0x90] sm:$0xf]
  %v991 = vld [vmem:[%s953 + $0x94] sm:$0xf]
  %v992 = vld [vmem:[%s953 + $0x98] sm:$0xf]
  %v993 = vld [vmem:[%s953 + $0x9c] sm:$0xf]
  %v994 = vld [vmem:[%s953 + $0xa0] sm:$0xf]
  %v995 = vld [vmem:[%s953 + $0xa4] sm:$0xf]
  %v996 = vld [vmem:[%s953 + $0xa8] sm:$0xf]
  %v997 = vld [vmem:[%s953 + $0xac] sm:$0xf]
  %v998 = vld [vmem:[%s953 + $0xb0] sm:$0xf]
  %v999 = vld [vmem:[%s953 + $0xb4] sm:$0xf]
  %v1000 = vld [vmem:[%s953 + $0xb8] sm:$0xf]
  %v1001 = vld [vmem:[%s953 + $0xbc] sm:$0xf]
  %v1002 = vld [vmem:[%s953 + $0xc0] sm:$0xf]
  %v1003 = vld [vmem:[%s953 + $0xc4] sm:$0xf]
  %v1054 = vunpack.c.l.b16 %v954
  %v1055 = vunpack.c.l.b16 %v955
  %v1056 = vunpack.c.l.b16 %v956
  %v1057 = vunpack.c.l.b16 %v957
  %v1058 = vunpack.c.l.b16 %v958
  %v1059 = vunpack.c.l.b16 %v959
  %v1060 = vunpack.c.l.b16 %v960
  %v1061 = vunpack.c.l.b16 %v961
  %v1062 = vunpack.c.l.b16 %v962
  %v1063 = vunpack.c.l.b16 %v963
  %v1064 = vunpack.c.l.b16 %v964
  %v1065 = vunpack.c.l.b16 %v965
  %v1066 = vunpack.c.l.b16 %v966
  %v1067 = vunpack.c.l.b16 %v967
  %v1068 = vunpack.c.l.b16 %v968
  %v1069 = vunpack.c.l.b16 %v969
  %v1070 = vunpack.c.l.b16 %v970
  %v1071 = vunpack.c.l.b16 %v971
  %v1072 = vunpack.c.l.b16 %v972
  %v1073 = vunpack.c.l.b16 %v973
  %v1074 = vunpack.c.l.b16 %v974
  %v1075 = vunpack.c.l.b16 %v975
  %v1076 = vunpack.c.l.b16 %v976
  %v1077 = vunpack.c.l.b16 %v977
  %v1078 = vunpack.c.l.b16 %v978
  %v1079 = vunpack.c.l.b16 %v979
  %v1080 = vunpack.c.l.b16 %v980
  %v1081 = vunpack.c.l.b16 %v981
  %v1082 = vunpack.c.l.b16 %v982
  %v1083 = vunpack.c.l.b16 %v983
  %v1084 = vunpack.c.l.b16 %v984
  %v1085 = vunpack.c.l.b16 %v985
  %v1086 = vunpack.c.l.b16 %v986
  %v1087 = vunpack.c.l.b16 %v987
  %v1088 = vunpack.c.l.b16 %v988
  %v1089 = vunpack.c.l.b16 %v989
  %v1090 = vunpack.c.l.b16 %v990
  %v1091 = vunpack.c.l.b16 %v991
  %v1092 = vunpack.c.l.b16 %v992
  %v1093 = vunpack.c.l.b16 %v993
  %v1094 = vunpack.c.l.b16 %v994
  %v1095 = vunpack.c.l.b16 %v995
  %v1096 = vunpack.c.l.b16 %v996
  %v1097 = vunpack.c.l.b16 %v997
  %v1098 = vunpack.c.l.b16 %v998
  %v1099 = vunpack.c.l.b16 %v999
  %v1100 = vunpack.c.l.b16 %v1000
  %v1101 = vunpack.c.l.b16 %v1001
  %v1102 = vunpack.c.l.b16 %v1002
  %v1103 = vunpack.c.l.b16 %v1003
  %v1104 = vpack.c.b16 %v1055, %v1054
  %v1105 = vpack.c.b16 %v1057, %v1056
  %v1106 = vpack.c.b16 %v1059, %v1058
  %v1107 = vpack.c.b16 %v1061, %v1060
  %v1108 = vpack.c.b16 %v1063, %v1062
  %v1109 = vpack.c.b16 %v1065, %v1064
  %v1110 = vpack.c.b16 %v1067, %v1066
  %v1111 = vpack.c.b16 %v1069, %v1068
  %v1112 = vpack.c.b16 %v1071, %v1070
  %v1113 = vpack.c.b16 %v1073, %v1072
  %v1114 = vpack.c.b16 %v1075, %v1074
  %v1115 = vpack.c.b16 %v1077, %v1076
  %v1116 = vpack.c.b16 %v1079, %v1078
  %v1117 = vpack.c.b16 %v1081, %v1080
  %v1118 = vpack.c.b16 %v1083, %v1082
  %v1119 = vpack.c.b16 %v1085, %v1084
  %v1120 = vpack.c.b16 %v1087, %v1086
  %v1121 = vpack.c.b16 %v1089, %v1088
  %v1122 = vpack.c.b16 %v1091, %v1090
  %v1123 = vpack.c.b16 %v1093, %v1092
  %v1124 = vpack.c.b16 %v1095, %v1094
  %v1125 = vpack.c.b16 %v1097, %v1096
  %v1126 = vpack.c.b16 %v1099, %v1098
  %v1127 = vpack.c.b16 %v1101, %v1100
  %v1128 = vpack.c.b16 %v1103, %v1102
  %1154 = vmatprep.subr.bf16.mxu0 0
  %1155 = vmatpush1.bf16.msra.mxu0 %v270
  %1156 = vmatprep.subr.bf16.mxu0 0
  %1157 = vmatpush1.bf16.msra.mxu0 %v271
  %1158 = vmatprep.subr.bf16.mxu0 0
  %1159 = vmatpush1.bf16.msra.mxu0 %v272
  %1160 = vmatprep.subr.bf16.mxu0 0
  %1161 = vmatpush1.bf16.msra.mxu0 %v273
  %1162 = vmatprep.subr.bf16.mxu0 0
  %1163 = vmatpush1.bf16.msra.mxu0 %v274
  %1164 = vmatprep.subr.bf16.mxu0 0
  %1165 = vmatpush1.bf16.msra.mxu0 %v275
  %1166 = vmatprep.subr.bf16.mxu0 0
  %1167 = vmatpush1.bf16.msra.mxu0 %v276
  %1168 = vmatprep.subr.bf16.mxu0 0
  %1169 = vmatpush1.bf16.msra.mxu0 %v277
  %1170 = vmatprep.subr.bf16.mxu0 0
  %1171 = vmatpush1.bf16.msra.mxu0 0
  %1172 = vmatprep.subr.bf16.mxu0 0
  %1173 = vmatpush1.bf16.msra.mxu0 0
  %1174 = vmatprep.subr.bf16.mxu0 0
  %1175 = vmatpush1.bf16.msra.mxu0 0
  %1176 = vmatprep.subr.bf16.mxu0 0
  %1177 = vmatpush1.bf16.msra.mxu0 0
  %1178 = vmatprep.subr.bf16.mxu0 0
  %1179 = vmatpush1.bf16.msra.mxu0 0
  %1180 = vmatprep.subr.bf16.mxu0 0
  %1181 = vmatpush1.bf16.msra.mxu0 0
  %1182 = vmatprep.subr.bf16.mxu0 0
  %1183 = vmatpush1.bf16.msra.mxu0 0
  %1184 = vmatprep.subr.bf16.mxu0 0
  %1185 = vmatpush1.bf16.msra.mxu0 0
  %1186 = vmatprep.mubr.bf16.mxu0 0
  %1187 = vmatmul.mubr.bf16.gmra.mrb[0].mxu0 %v1104
  %v1188 = vpop.f32.mrb[0].mxu0
  %v1189 = vadd.f32 %v86, %v1188
  %v1190 = vpop.f32.mrb[0].mxu0
  %v1191 = vpop.f32.mrb[0].mxu0
  %v1192 = vadd.f32 %v86, %v1191
  %v1193 = vpop.f32.mrb[0].mxu0
  %1194 = vmatprep.mubr.bf16.mxu0 0
  %1195 = vmatmul.mubr.bf16.gmra.mrb[0].mxu0 %v1105
  %v1196 = vpop.f32.mrb[0].mxu0
  %v1197 = vadd.f32 %v86, %v1196
  %v1198 = vpop.f32.mrb[0].mxu0
  %v1199 = vpop.f32.mrb[0].mxu0
  %v1200 = vadd.f32 %v86, %v1199
  %v1201 = vpop.f32.mrb[0].mxu0
  %1202 = vmatprep.mubr.bf16.mxu0 0
  %1203 = vmatmul.mubr.bf16.gmra.mrb[0].mxu0 %v1106
  %v1204 = vpop.f32.mrb[0].mxu0
  %v1205 = vadd.f32 %v86, %v1204
  %v1206 = vpop.f32.mrb[0].mxu0
  %v1207 = vpop.f32.mrb[0].mxu0
  %v1208 = vadd.f32 %v86, %v1207
  %v1209 = vpop.f32.mrb[0].mxu0
  %1210 = vmatprep.mubr.bf16.mxu0 0
  %1211 = vmatmul.mubr.bf16.gmra.mrb[0].mxu0 %v1107
  %v1212 = vpop.f32.mrb[0].mxu0
  %v1213 = vadd.f32 %v86, %v1212
  %v1214 = vpop.f32.mrb[0].mxu0
  %v1215 = vpop.f32.mrb[0].mxu0
  %v1216 = vadd.f32 %v86, %v1215
  %v1217 = vpop.f32.mrb[0].mxu0
  %1218 = vmatprep.mubr.bf16.mxu0 0
  %1219 = vmatmul.mubr.bf16.gmra.mrb[0].mxu0 %v1108
  %v1220 = vpop.f32.mrb[0].mxu0
  %v1221 = vadd.f32 %v86, %v1220
  %v1222 = vpop.f32.mrb[0].mxu0
  %v1223 = vpop.f32.mrb[0].mxu0
  %v1224 = vadd.f32 %v86, %v1223
  %v1225 = vpop.f32.mrb[0].mxu0
  %1226 = vmatprep.mubr.bf16.mxu0 0
  %1227 = vmatmul.mubr.bf16.gmra.mrb[0].mxu0 %v1109
  %v1228 = vpop.f32.mrb[0].mxu0
  %v1229 = vadd.f32 %v86, %v1228
  %v1230 = vpop.f32.mrb[0].mxu0
  %v1231 = vpop.f32.mrb[0].mxu0
  %v1232 = vadd.f32 %v86, %v1231
  %v1233 = vpop.f32.mrb[0].mxu0
  %1234 = vmatprep.mubr.bf16.mxu0 0
  %1235 = vmatmul.mubr.bf16.gmra.mrb[0].mxu0 %v1110
  %v1236 = vpop.f32.mrb[0].mxu0
  %v1237 = vadd.f32 %v86, %v1236
  %v1238 = vpop.f32.mrb[0].mxu0
  %v1239 = vpop.f32.mrb[0].mxu0
  %v1240 = vadd.f32 %v86, %v1239
  %v1241 = vpop.f32.mrb[0].mxu0
  %1242 = vmatprep.mubr.bf16.mxu0 0
  %1243 = vmatmul.mubr.bf16.gmra.mrb[0].mxu0 %v1111
  %v1244 = vpop.f32.mrb[0].mxu0
  %v1245 = vadd.f32 %v86, %v1244
  %v1246 = vpop.f32.mrb[0].mxu0
  %v1247 = vpop.f32.mrb[0].mxu0
  %v1248 = vadd.f32 %v86, %v1247
  %v1249 = vpop.f32.mrb[0].mxu0
  %1250 = vmatprep.mubr.bf16.mxu0 0
  %1251 = vmatmul.mubr.bf16.gmra.mrb[0].mxu0 %v1112
  %v1252 = vpop.f32.mrb[0].mxu0
  %v1253 = vadd.f32 %v86, %v1252
  %v1254 = vpop.f32.mrb[0].mxu0
  %v1255 = vpop.f32.mrb[0].mxu0
  %v1256 = vadd.f32 %v86, %v1255
  %v1257 = vpop.f32.mrb[0].mxu0
  %1258 = vmatprep.mubr.bf16.mxu0 0
  %1259 = vmatmul.mubr.bf16.gmra.mrb[0].mxu0 %v1113
  %v1260 = vpop.f32.mrb[0].mxu0
  %v1261 = vadd.f32 %v86, %v1260
  %v1262 = vpop.f32.mrb[0].mxu0
  %v1263 = vpop.f32.mrb[0].mxu0
  %v1264 = vadd.f32 %v86, %v1263
  %v1265 = vpop.f32.mrb[0].mxu0
  %1266 = vmatprep.mubr.bf16.mxu0 0
  %1267 = vmatmul.mubr.bf16.gmra.mrb[0].mxu0 %v1114
  %v1268 = vpop.f32.mrb[0].mxu0
  %v1269 = vadd.f32 %v86, %v1268
  %v1270 = vpop.f32.mrb[0].mxu0
  %v1271 = vpop.f32.mrb[0].mxu0
  %v1272 = vadd.f32 %v86, %v1271
  %v1273 = vpop.f32.mrb[0].mxu0
  %1274 = vmatprep.mubr.bf16.mxu0 0
  %1275 = vmatmul.mubr.bf16.gmra.mrb[0].mxu0 %v1115
  %v1276 = vpop.f32.mrb[0].mxu0
  %v1277 = vadd.f32 %v86, %v1276
  %v1278 = vpop.f32.mrb[0].mxu0
  %v1279 = vpop.f32.mrb[0].mxu0
  %v1280 = vadd.f32 %v86, %v1279
  %v1281 = vpop.f32.mrb[0].mxu0
  %1282 = vmatprep.mubr.bf16.mxu0 0
  %1283 = vmatmul.mubr.bf16.gmra.mrb[0].mxu0 %v1116
  %v1284 = vpop.f32.mrb[0].mxu0
  %v1285 = vadd.f32 %v86, %v1284
  %v1286 = vpop.f32.mrb[0].mxu0
  %v1287 = vpop.f32.mrb[0].mxu0
  %v1288 = vadd.f32 %v86, %v1287
  %v1289 = vpop.f32.mrb[0].mxu0
  %1290 = vmatprep.mubr.bf16.mxu0 0
  %1291 = vmatmul.mubr.bf16.gmra.mrb[0].mxu0 %v1117
  %v1292 = vpop.f32.mrb[0].mxu0
  %v1293 = vadd.f32 %v86, %v1292
  %v1294 = vpop.f32.mrb[0].mxu0
  %v1295 = vpop.f32.mrb[0].mxu0
  %v1296 = vadd.f32 %v86, %v1295
  %v1297 = vpop.f32.mrb[0].mxu0
  %1298 = vmatprep.mubr.bf16.mxu0 0
  %1299 = vmatmul.mubr.bf16.gmra.mrb[0].mxu0 %v1118
  %v1300 = vpop.f32.mrb[0].mxu0
  %v1301 = vadd.f32 %v86, %v1300
  %v1302 = vpop.f32.mrb[0].mxu0
  %v1303 = vpop.f32.mrb[0].mxu0
  %v1304 = vadd.f32 %v86, %v1303
  %v1305 = vpop.f32.mrb[0].mxu0
  %1306 = vmatprep.mubr.bf16.mxu0 0
  %1307 = vmatmul.mubr.bf16.gmra.mrb[0].mxu0 %v1119
  %v1308 = vpop.f32.mrb[0].mxu0
  %v1309 = vadd.f32 %v86, %v1308
  %v1310 = vpop.f32.mrb[0].mxu0
  %v1311 = vpop.f32.mrb[0].mxu0
  %v1312 = vadd.f32 %v86, %v1311
  %v1313 = vpop.f32.mrb[0].mxu0
  %1314 = vmatprep.mubr.bf16.mxu0 0
  %1315 = vmatmul.mubr.bf16.gmra.mrb[0].mxu0 %v1120
  %v1316 = vpop.f32.mrb[0].mxu0
  %v1317 = vadd.f32 %v86, %v1316
  %v1318 = vpop.f32.mrb[0].mxu0
  %v1319 = vpop.f32.mrb[0].mxu0
  %v1320 = vadd.f32 %v86, %v1319
  %v1321 = vpop.f32.mrb[0].mxu0
  %1322 = vmatprep.mubr.bf16.mxu0 0
  %1323 = vmatmul.mubr.bf16.gmra.mrb[0].mxu0 %v1121
  %v1324 = vpop.f32.mrb[0].mxu0
  %v1325 = vadd.f32 %v86, %v1324
  %v1326 = vpop.f32.mrb[0].mxu0
  %v1327 = vpop.f32.mrb[0].mxu0
  %v1328 = vadd.f32 %v86, %v1327
  %v1329 = vpop.f32.mrb[0].mxu0
  %1330 = vmatprep.mubr.bf16.mxu0 0
  %1331 = vmatmul.mubr.bf16.gmra.mrb[0].mxu0 %v1122
  %v1332 = vpop.f32.mrb[0].mxu0
  %v1333 = vadd.f32 %v86, %v1332
  %v1334 = vpop.f32.mrb[0].mxu0
  %v1335 = vpop.f32.mrb[0].mxu0
  %v1336 = vadd.f32 %v86, %v1335
  %v1337 = vpop.f32.mrb[0].mxu0
  %1338 = vmatprep.mubr.bf16.mxu0 0
  %1339 = vmatmul.mubr.bf16.gmra.mrb[0].mxu0 %v1123
  %v1340 = vpop.f32.mrb[0].mxu0
  %v1341 = vadd.f32 %v86, %v1340
  %v1342 = vpop.f32.mrb[0].mxu0
  %v1343 = vpop.f32.mrb[0].mxu0
  %v1344 = vadd.f32 %v86, %v1343
  %v1345 = vpop.f32.mrb[0].mxu0
  %1346 = vmatprep.mubr.bf16.mxu0 0
  %1347 = vmatmul.mubr.bf16.gmra.mrb[0].mxu0 %v1124
  %v1348 = vpop.f32.mrb[0].mxu0
  %v1349 = vadd.f32 %v86, %v1348
  %v1350 = vpop.f32.mrb[0].mxu0
  %v1351 = vpop.f32.mrb[0].mxu0
  %v1352 = vadd.f32 %v86, %v1351
  %v1353 = vpop.f32.mrb[0].mxu0
  %1354 = vmatprep.mubr.bf16.mxu0 0
  %1355 = vmatmul.mubr.bf16.gmra.mrb[0].mxu0 %v1125
  %v1356 = vpop.f32.mrb[0].mxu0
  %v1357 = vadd.f32 %v86, %v1356
  %v1358 = vpop.f32.mrb[0].mxu0
  %v1359 = vpop.f32.mrb[0].mxu0
  %v1360 = vadd.f32 %v86, %v1359
  %v1361 = vpop.f32.mrb[0].mxu0
  %1362 = vmatprep.mubr.bf16.mxu0 0
  %1363 = vmatmul.mubr.bf16.gmra.mrb[0].mxu0 %v1126
  %v1364 = vpop.f32.mrb[0].mxu0
  %v1365 = vadd.f32 %v86, %v1364
  %v1366 = vpop.f32.mrb[0].mxu0
  %v1367 = vpop.f32.mrb[0].mxu0
  %v1368 = vadd.f32 %v86, %v1367
  %v1369 = vpop.f32.mrb[0].mxu0
  %1370 = vmatprep.mubr.bf16.mxu0 0
  %1371 = vmatmul.mubr.bf16.gmra.mrb[0].mxu0 %v1127
  %v1372 = vpop.f32.mrb[0].mxu0
  %v1373 = vadd.f32 %v86, %v1372
  %v1374 = vpop.f32.mrb[0].mxu0
  %v1375 = vpop.f32.mrb[0].mxu0
  %v1376 = vadd.f32 %v86, %v1375
  %v1377 = vpop.f32.mrb[0].mxu0
  %1378 = vmatprep.mubr.bf16.mxu0 0
  %1379 = vmatmul.mubr.bf16.gmra.mrb[0].mxu0 %v1128
  %v1380 = vpop.f32.mrb[0].mxu0
  %v1381 = vadd.f32 %v86, %v1380
  %v1382 = vpop.f32.mrb[0].mxu0
  %v1383 = vpop.f32.mrb[0].mxu0
  %v1384 = vadd.f32 %v86, %v1383
  %v1385 = vpop.f32.mrb[0].mxu0
  %1386 = vdwg.mxu0
  %s1387 = scalar_lea.vmem %s0, 600
  %v1388 = vld [vmem:[%s1387] sm:$0xf]
  %v1389 = vld [vmem:[%s1387 + $0x4] sm:$0xf]
  %v1390 = vld [vmem:[%s1387 + $0x8] sm:$0xf]
  %v1391 = vld [vmem:[%s1387 + $0xc] sm:$0xf]
  %v1392 = vld [vmem:[%s1387 + $0x10] sm:$0xf]
  %v1393 = vld [vmem:[%s1387 + $0x14] sm:$0xf]
  %v1394 = vld [vmem:[%s1387 + $0x18] sm:$0xf]
  %v1395 = vld [vmem:[%s1387 + $0x1c] sm:$0xf]
  %v1396 = vld [vmem:[%s1387 + $0x20] sm:$0xf]
  %v1397 = vld [vmem:[%s1387 + $0x24] sm:$0xf]
  %v1398 = vld [vmem:[%s1387 + $0x28] sm:$0xf]
  %v1399 = vld [vmem:[%s1387 + $0x2c] sm:$0xf]
  %v1400 = vld [vmem:[%s1387 + $0x30] sm:$0xf]
  %v1401 = vld [vmem:[%s1387 + $0x34] sm:$0xf]
  %v1402 = vld [vmem:[%s1387 + $0x38] sm:$0xf]
  %v1403 = vld [vmem:[%s1387 + $0x3c] sm:$0xf]
  %v1404 = vld [vmem:[%s1387 + $0x40] sm:$0xf]
  %v1405 = vld [vmem:[%s1387 + $0x44] sm:$0xf]
  %v1406 = vld [vmem:[%s1387 + $0x48] sm:$0xf]
  %v1407 = vld [vmem:[%s1387 + $0x4c] sm:$0xf]
  %v1408 = vld [vmem:[%s1387 + $0x50] sm:$0xf]
  %v1409 = vld [vmem:[%s1387 + $0x54] sm:$0xf]
  %v1410 = vld [vmem:[%s1387 + $0x58] sm:$0xf]
  %v1411 = vld [vmem:[%s1387 + $0x5c] sm:$0xf]
  %v1412 = vld [vmem:[%s1387 + $0x60] sm:$0xf]
  %v1413 = vld [vmem:[%s1387 + $0x64] sm:$0xf]
  %v1414 = vld [vmem:[%s1387 + $0x68] sm:$0xf]
  %v1415 = vld [vmem:[%s1387 + $0x6c] sm:$0xf]
  %v1416 = vld [vmem:[%s1387 + $0x70] sm:$0xf]
  %v1417 = vld [vmem:[%s1387 + $0x74] sm:$0xf]
  %v1418 = vld [vmem:[%s1387 + $0x78] sm:$0xf]
  %v1419 = vld [vmem:[%s1387 + $0x7c] sm:$0xf]
  %v1420 = vld [vmem:[%s1387 + $0x80] sm:$0xf]
  %v1421 = vld [vmem:[%s1387 + $0x84] sm:$0xf]
  %v1422 = vld [vmem:[%s1387 + $0x88] sm:$0xf]
  %v1423 = vld [vmem:[%s1387 + $0x8c] sm:$0xf]
  %v1424 = vld [vmem:[%s1387 + $0x90] sm:$0xf]
  %v1425 = vld [vmem:[%s1387 + $0x94] sm:$0xf]
  %v1426 = vld [vmem:[%s1387 + $0x98] sm:$0xf]
  %v1427 = vld [vmem:[%s1387 + $0x9c] sm:$0xf]
  %v1428 = vld [vmem:[%s1387 + $0xa0] sm:$0xf]
  %v1429 = vld [vmem:[%s1387 + $0xa4] sm:$0xf]
  %v1430 = vld [vmem:[%s1387 + $0xa8] sm:$0xf]
  %v1431 = vld [vmem:[%s1387 + $0xac] sm:$0xf]
  %v1432 = vld [vmem:[%s1387 + $0xb0] sm:$0xf]
  %v1433 = vld [vmem:[%s1387 + $0xb4] sm:$0xf]
  %v1434 = vld [vmem:[%s1387 + $0xb8] sm:$0xf]
  %v1435 = vld [vmem:[%s1387 + $0xbc] sm:$0xf]
  %v1436 = vld [vmem:[%s1387 + $0xc0] sm:$0xf]
  %v1437 = vld [vmem:[%s1387 + $0xc4] sm:$0xf]
  %v1488 = vunpack.c.l.b16 %v1388
  %v1489 = vunpack.c.l.b16 %v1389
  %v1490 = vunpack.c.l.b16 %v1390
  %v1491 = vunpack.c.l.b16 %v1391
  %v1492 = vunpack.c.l.b16 %v1392
  %v1493 = vunpack.c.l.b16 %v1393
  %v1494 = vunpack.c.l.b16 %v1394
  %v1495 = vunpack.c.l.b16 %v1395
  %v1496 = vunpack.c.l.b16 %v1396
  %v1497 = vunpack.c.l.b16 %v1397
  %v1498 = vunpack.c.l.b16 %v1398
  %v1499 = vunpack.c.l.b16 %v1399
  %v1500 = vunpack.c.l.b16 %v1400
  %v1501 = vunpack.c.l.b16 %v1401
  %v1502 = vunpack.c.l.b16 %v1402
  %v1503 = vunpack.c.l.b16 %v1403
  %v1504 = vunpack.c.l.b16 %v1404
  %v1505 = vunpack.c.l.b16 %v1405
  %v1506 = vunpack.c.l.b16 %v1406
  %v1507 = vunpack.c.l.b16 %v1407
  %v1508 = vunpack.c.l.b16 %v1408
  %v1509 = vunpack.c.l.b16 %v1409
  %v1510 = vunpack.c.l.b16 %v1410
  %v1511 = vunpack.c.l.b16 %v1411
  %v1512 = vunpack.c.l.b16 %v1412
  %v1513 = vunpack.c.l.b16 %v1413
  %v1514 = vunpack.c.l.b16 %v1414
  %v1515 = vunpack.c.l.b16 %v1415
  %v1516 = vunpack.c.l.b16 %v1416
  %v1517 = vunpack.c.l.b16 %v1417
  %v1518 = vunpack.c.l.b16 %v1418
  %v1519 = vunpack.c.l.b16 %v1419
  %v1520 = vunpack.c.l.b16 %v1420
  %v1521 = vunpack.c.l.b16 %v1421
  %v1522 = vunpack.c.l.b16 %v1422
  %v1523 = vunpack.c.l.b16 %v1423
  %v1524 = vunpack.c.l.b16 %v1424
  %v1525 = vunpack.c.l.b16 %v1425
  %v1526 = vunpack.c.l.b16 %v1426
  %v1527 = vunpack.c.l.b16 %v1427
  %v1528 = vunpack.c.l.b16 %v1428
  %v1529 = vunpack.c.l.b16 %v1429
  %v1530 = vunpack.c.l.b16 %v1430
  %v1531 = vunpack.c.l.b16 %v1431
  %v1532 = vunpack.c.l.b16 %v1432
  %v1533 = vunpack.c.l.b16 %v1433
  %v1534 = vunpack.c.l.b16 %v1434
  %v1535 = vunpack.c.l.b16 %v1435
  %v1536 = vunpack.c.l.b16 %v1436
  %v1537 = vunpack.c.l.b16 %v1437
  %v1538 = vpack.c.b16 %v1489, %v1488
  %v1539 = vpack.c.b16 %v1491, %v1490
  %v1540 = vpack.c.b16 %v1493, %v1492
  %v1541 = vpack.c.b16 %v1495, %v1494
  %v1542 = vpack.c.b16 %v1497, %v1496
  %v1543 = vpack.c.b16 %v1499, %v1498
  %v1544 = vpack.c.b16 %v1501, %v1500
  %v1545 = vpack.c.b16 %v1503, %v1502
  %v1546 = vpack.c.b16 %v1505, %v1504
  %v1547 = vpack.c.b16 %v1507, %v1506
  %v1548 = vpack.c.b16 %v1509, %v1508
  %v1549 = vpack.c.b16 %v1511, %v1510
  %v1550 = vpack.c.b16 %v1513, %v1512
  %v1551 = vpack.c.b16 %v1515, %v1514
  %v1552 = vpack.c.b16 %v1517, %v1516
  %v1553 = vpack.c.b16 %v1519, %v1518
  %v1554 = vpack.c.b16 %v1521, %v1520
  %v1555 = vpack.c.b16 %v1523, %v1522
  %v1556 = vpack.c.b16 %v1525, %v1524
  %v1557 = vpack.c.b16 %v1527, %v1526
  %v1558 = vpack.c.b16 %v1529, %v1528
  %v1559 = vpack.c.b16 %v1531, %v1530
  %v1560 = vpack.c.b16 %v1533, %v1532
  %v1561 = vpack.c.b16 %v1535, %v1534
  %v1562 = vpack.c.b16 %v1537, %v1536
  %1588 = vmatprep.subr.bf16.mxu0 0
  %1589 = vmatpush1.bf16.msra.mxu0 %v270
  %1590 = vmatprep.subr.bf16.mxu0 0
  %1591 = vmatpush1.bf16.msra.mxu0 %v271
  %1592 = vmatprep.subr.bf16.mxu0 0
  %1593 = vmatpush1.bf16.msra.mxu0 %v272
  %1594 = vmatprep.subr.bf16.mxu0 0
  %1595 = vmatpush1.bf16.msra.mxu0 %v273
  %1596 = vmatprep.subr.bf16.mxu0 0
  %1597 = vmatpush1.bf16.msra.mxu0 %v274
  %1598 = vmatprep.subr.bf16.mxu0 0
  %1599 = vmatpush1.bf16.msra.mxu0 %v275
  %1600 = vmatprep.subr.bf16.mxu0 0
  %1601 = vmatpush1.bf16.msra.mxu0 %v276
  %1602 = vmatprep.subr.bf16.mxu0 0
  %1603 = vmatpush1.bf16.msra.mxu0 %v277
  %1604 = vmatprep.subr.bf16.mxu0 0
  %1605 = vmatpush1.bf16.msra.mxu0 0
  %1606 = vmatprep.subr.bf16.mxu0 0
  %1607 = vmatpush1.bf16.msra.mxu0 0
  %1608 = vmatprep.subr.bf16.mxu0 0
  %1609 = vmatpush1.bf16.msra.mxu0 0
  %1610 = vmatprep.subr.bf16.mxu0 0
  %1611 = vmatpush1.bf16.msra.mxu0 0
  %1612 = vmatprep.subr.bf16.mxu0 0
  %1613 = vmatpush1.bf16.msra.mxu0 0
  %1614 = vmatprep.subr.bf16.mxu0 0
  %1615 = vmatpush1.bf16.msra.mxu0 0
  %1616 = vmatprep.subr.bf16.mxu0 0
  %1617 = vmatpush1.bf16.msra.mxu0 0
  %1618 = vmatprep.subr.bf16.mxu0 0
  %1619 = vmatpush1.bf16.msra.mxu0 0
  %1620 = vmatprep.mubr.bf16.mxu0 0
  %1621 = vmatmul.mubr.bf16.gmra.mrb[0].mxu0 %v1538
  %v1622 = vpop.f32.mrb[0].mxu0
  %v1623 = vadd.f32 %v86, %v1622
  %v1624 = vpop.f32.mrb[0].mxu0
  %v1625 = vpop.f32.mrb[0].mxu0
  %v1626 = vadd.f32 %v86, %v1625
  %v1627 = vpop.f32.mrb[0].mxu0
  %1628 = vmatprep.mubr.bf16.mxu0 0
  %1629 = vmatmul.mubr.bf16.gmra.mrb[0].mxu0 %v1539
  %v1630 = vpop.f32.mrb[0].mxu0
  %v1631 = vadd.f32 %v86, %v1630
  %v1632 = vpop.f32.mrb[0].mxu0
  %v1633 = vpop.f32.mrb[0].mxu0
  %v1634 = vadd.f32 %v86, %v1633
  %v1635 = vpop.f32.mrb[0].mxu0
  %1636 = vmatprep.mubr.bf16.mxu0 0
  %1637 = vmatmul.mubr.bf16.gmra.mrb[0].mxu0 %v1540
  %v1638 = vpop.f32.mrb[0].mxu0
  %v1639 = vadd.f32 %v86, %v1638
  %v1640 = vpop.f32.mrb[0].mxu0
  %v1641 = vpop.f32.mrb[0].mxu0
  %v1642 = vadd.f32 %v86, %v1641
  %v1643 = vpop.f32.mrb[0].mxu0
  %1644 = vmatprep.mubr.bf16.mxu0 0
  %1645 = vmatmul.mubr.bf16.gmra.mrb[0].mxu0 %v1541
  %v1646 = vpop.f32.mrb[0].mxu0
  %v1647 = vadd.f32 %v86, %v1646
  %v1648 = vpop.f32.mrb[0].mxu0
  %v1649 = vpop.f32.mrb[0].mxu0
  %v1650 = vadd.f32 %v86, %v1649
  %v1651 = vpop.f32.mrb[0].mxu0
  %1652 = vmatprep.mubr.bf16.mxu0 0
  %1653 = vmatmul.mubr.bf16.gmra.mrb[0].mxu0 %v1542
  %v1654 = vpop.f32.mrb[0].mxu0
  %v1655 = vadd.f32 %v86, %v1654
  %v1656 = vpop.f32.mrb[0].mxu0
  %v1657 = vpop.f32.mrb[0].mxu0
  %v1658 = vadd.f32 %v86, %v1657
  %v1659 = vpop.f32.mrb[0].mxu0
  %1660 = vmatprep.mubr.bf16.mxu0 0
  %1661 = vmatmul.mubr.bf16.gmra.mrb[0].mxu0 %v1543
  %v1662 = vpop.f32.mrb[0].mxu0
  %v1663 = vadd.f32 %v86, %v1662
  %v1664 = vpop.f32.mrb[0].mxu0
  %v1665 = vpop.f32.mrb[0].mxu0
  %v1666 = vadd.f32 %v86, %v1665
  %v1667 = vpop.f32.mrb[0].mxu0
  %1668 = vmatprep.mubr.bf16.mxu0 0
  %1669 = vmatmul.mubr.bf16.gmra.mrb[0].mxu0 %v1544
  %v1670 = vpop.f32.mrb[0].mxu0
  %v1671 = vadd.f32 %v86, %v1670
  %v1672 = vpop.f32.mrb[0].mxu0
  %v1673 = vpop.f32.mrb[0].mxu0
  %v1674 = vadd.f32 %v86, %v1673
  %v1675 = vpop.f32.mrb[0].mxu0
  %1676 = vmatprep.mubr.bf16.mxu0 0
  %1677 = vmatmul.mubr.bf16.gmra.mrb[0].mxu0 %v1545
  %v1678 = vpop.f32.mrb[0].mxu0
  %v1679 = vadd.f32 %v86, %v1678
  %v1680 = vpop.f32.mrb[0].mxu0
  %v1681 = vpop.f32.mrb[0].mxu0
  %v1682 = vadd.f32 %v86, %v1681
  %v1683 = vpop.f32.mrb[0].mxu0
  %1684 = vmatprep.mubr.bf16.mxu0 0
  %1685 = vmatmul.mubr.bf16.gmra.mrb[0].mxu0 %v1546
  %v1686 = vpop.f32.mrb[0].mxu0
  %v1687 = vadd.f32 %v86, %v1686
  %v1688 = vpop.f32.mrb[0].mxu0
  %v1689 = vpop.f32.mrb[0].mxu0
  %v1690 = vadd.f32 %v86, %v1689
  %v1691 = vpop.f32.mrb[0].mxu0
  %1692 = vmatprep.mubr.bf16.mxu0 0
  %1693 = vmatmul.mubr.bf16.gmra.mrb[0].mxu0 %v1547
  %v1694 = vpop.f32.mrb[0].mxu0
  %v1695 = vadd.f32 %v86, %v1694
  %v1696 = vpop.f32.mrb[0].mxu0
  %v1697 = vpop.f32.mrb[0].mxu0
  %v1698 = vadd.f32 %v86, %v1697
  %v1699 = vpop.f32.mrb[0].mxu0
  %1700 = vmatprep.mubr.bf16.mxu0 0
  %1701 = vmatmul.mubr.bf16.gmra.mrb[0].mxu0 %v1548
  %v1702 = vpop.f32.mrb[0].mxu0
  %v1703 = vadd.f32 %v86, %v1702
  %v1704 = vpop.f32.mrb[0].mxu0
  %v1705 = vpop.f32.mrb[0].mxu0
  %v1706 = vadd.f32 %v86, %v1705
  %v1707 = vpop.f32.mrb[0].mxu0
  %1708 = vmatprep.mubr.bf16.mxu0 0
  %1709 = vmatmul.mubr.bf16.gmra.mrb[0].mxu0 %v1549
  %v1710 = vpop.f32.mrb[0].mxu0
  %v1711 = vadd.f32 %v86, %v1710
  %v1712 = vpop.f32.mrb[0].mxu0
  %v1713 = vpop.f32.mrb[0].mxu0
  %v1714 = vadd.f32 %v86, %v1713
  %v1715 = vpop.f32.mrb[0].mxu0
  %1716 = vmatprep.mubr.bf16.mxu0 0
  %1717 = vmatmul.mubr.bf16.gmra.mrb[0].mxu0 %v1550
  %v1718 = vpop.f32.mrb[0].mxu0
  %v1719 = vadd.f32 %v86, %v1718
  %v1720 = vpop.f32.mrb[0].mxu0
  %v1721 = vpop.f32.mrb[0].mxu0
  %v1722 = vadd.f32 %v86, %v1721
  %v1723 = vpop.f32.mrb[0].mxu0
  %1724 = vmatprep.mubr.bf16.mxu0 0
  %1725 = vmatmul.mubr.bf16.gmra.mrb[0].mxu0 %v1551
  %v1726 = vpop.f32.mrb[0].mxu0
  %v1727 = vadd.f32 %v86, %v1726
  %v1728 = vpop.f32.mrb[0].mxu0
  %v1729 = vpop.f32.mrb[0].mxu0
  %v1730 = vadd.f32 %v86, %v1729
  %v1731 = vpop.f32.mrb[0].mxu0
  %1732 = vmatprep.mubr.bf16.mxu0 0
  %1733 = vmatmul.mubr.bf16.gmra.mrb[0].mxu0 %v1552
  %v1734 = vpop.f32.mrb[0].mxu0
  %v1735 = vadd.f32 %v86, %v1734
  %v1736 = vpop.f32.mrb[0].mxu0
  %v1737 = vpop.f32.mrb[0].mxu0
  %v1738 = vadd.f32 %v86, %v1737
  %v1739 = vpop.f32.mrb[0].mxu0
  %1740 = vmatprep.mubr.bf16.mxu0 0
  %1741 = vmatmul.mubr.bf16.gmra.mrb[0].mxu0 %v1553
  %v1742 = vpop.f32.mrb[0].mxu0
  %v1743 = vadd.f32 %v86, %v1742
  %v1744 = vpop.f32.mrb[0].mxu0
  %v1745 = vpop.f32.mrb[0].mxu0
  %v1746 = vadd.f32 %v86, %v1745
  %v1747 = vpop.f32.mrb[0].mxu0
  %1748 = vmatprep.mubr.bf16.mxu0 0
  %1749 = vmatmul.mubr.bf16.gmra.mrb[0].mxu0 %v1554
  %v1750 = vpop.f32.mrb[0].mxu0
  %v1751 = vadd.f32 %v86, %v1750
  %v1752 = vpop.f32.mrb[0].mxu0
  %v1753 = vpop.f32.mrb[0].mxu0
  %v1754 = vadd.f32 %v86, %v1753
  %v1755 = vpop.f32.mrb[0].mxu0
  %1756 = vmatprep.mubr.bf16.mxu0 0
  %1757 = vmatmul.mubr.bf16.gmra.mrb[0].mxu0 %v1555
  %v1758 = vpop.f32.mrb[0].mxu0
  %v1759 = vadd.f32 %v86, %v1758
  %v1760 = vpop.f32.mrb[0].mxu0
  %v1761 = vpop.f32.mrb[0].mxu0
  %v1762 = vadd.f32 %v86, %v1761
  %v1763 = vpop.f32.mrb[0].mxu0
  %1764 = vmatprep.mubr.bf16.mxu0 0
  %1765 = vmatmul.mubr.bf16.gmra.mrb[0].mxu0 %v1556
  %v1766 = vpop.f32.mrb[0].mxu0
  %v1767 = vadd.f32 %v86, %v1766
  %v1768 = vpop.f32.mrb[0].mxu0
  %v1769 = vpop.f32.mrb[0].mxu0
  %v1770 = vadd.f32 %v86, %v1769
  %v1771 = vpop.f32.mrb[0].mxu0
  %1772 = vmatprep.mubr.bf16.mxu0 0
  %1773 = vmatmul.mubr.bf16.gmra.mrb[0].mxu0 %v1557
  %v1774 = vpop.f32.mrb[0].mxu0
  %v1775 = vadd.f32 %v86, %v1774
  %v1776 = vpop.f32.mrb[0].mxu0
  %v1777 = vpop.f32.mrb[0].mxu0
  %v1778 = vadd.f32 %v86, %v1777
  %v1779 = vpop.f32.mrb[0].mxu0
  %1780 = vmatprep.mubr.bf16.mxu0 0
  %1781 = vmatmul.mubr.bf16.gmra.mrb[0].mxu0 %v1558
  %v1782 = vpop.f32.mrb[0].mxu0
  %v1783 = vadd.f32 %v86, %v1782
  %v1784 = vpop.f32.mrb[0].mxu0
  %v1785 = vpop.f32.mrb[0].mxu0
  %v1786 = vadd.f32 %v86, %v1785
  %v1787 = vpop.f32.mrb[0].mxu0
  %1788 = vmatprep.mubr.bf16.mxu0 0
  %1789 = vmatmul.mubr.bf16.gmra.mrb[0].mxu0 %v1559
  %v1790 = vpop.f32.mrb[0].mxu0
  %v1791 = vadd.f32 %v86, %v1790
  %v1792 = vpop.f32.mrb[0].mxu0
  %v1793 = vpop.f32.mrb[0].mxu0
  %v1794 = vadd.f32 %v86, %v1793
  %v1795 = vpop.f32.mrb[0].mxu0
  %1796 = vmatprep.mubr.bf16.mxu0 0
  %1797 = vmatmul.mubr.bf16.gmra.mrb[0].mxu0 %v1560
  %v1798 = vpop.f32.mrb[0].mxu0
  %v1799 = vadd.f32 %v86, %v1798
  %v1800 = vpop.f32.mrb[0].mxu0
  %v1801 = vpop.f32.mrb[0].mxu0
  %v1802 = vadd.f32 %v86, %v1801
  %v1803 = vpop.f32.mrb[0].mxu0
  %1804 = vmatprep.mubr.bf16.mxu0 0
  %1805 = vmatmul.mubr.bf16.gmra.mrb[0].mxu0 %v1561
  %v1806 = vpop.f32.mrb[0].mxu0
  %v1807 = vadd.f32 %v86, %v1806
  %v1808 = vpop.f32.mrb[0].mxu0
  %v1809 = vpop.f32.mrb[0].mxu0
  %v1810 = vadd.f32 %v86, %v1809
  %v1811 = vpop.f32.mrb[0].mxu0
  %1812 = vmatprep.mubr.bf16.mxu0 0
  %1813 = vmatmul.mubr.bf16.gmra.mrb[0].mxu0 %v1562
  %v1814 = vpop.f32.mrb[0].mxu0
  %v1815 = vadd.f32 %v86, %v1814
  %v1816 = vpop.f32.mrb[0].mxu0
  %v1817 = vpop.f32.mrb[0].mxu0
  %v1818 = vadd.f32 %v86, %v1817
  %v1819 = vpop.f32.mrb[0].mxu0
  %1820 = vdwg.mxu0
  %v1821 = vmax.f32 %v321, %v755
  %v1822 = vmax.f32 %v324, %v758
  %v1823 = vmax.f32 %v329, %v763
  %v1824 = vmax.f32 %v332, %v766
  %v1825 = vmax.f32 %v337, %v771
  %v1826 = vmax.f32 %v340, %v774
  %v1827 = vmax.f32 %v345, %v779
  %v1828 = vmax.f32 %v348, %v782
  %v1829 = vmax.f32 %v353, %v787
  %v1830 = vmax.f32 %v356, %v790
  %v1831 = vmax.f32 %v361, %v795
  %v1832 = vmax.f32 %v364, %v798
  %v1833 = vmax.f32 %v369, %v803
  %v1834 = vmax.f32 %v372, %v806
  %v1835 = vmax.f32 %v377, %v811
  %v1836 = vmax.f32 %v380, %v814
  %v1837 = vmax.f32 %v385, %v819
  %v1838 = vmax.f32 %v388, %v822
  %v1839 = vmax.f32 %v393, %v827
  %v1840 = vmax.f32 %v396, %v830
  %v1841 = vmax.f32 %v401, %v835
  %v1842 = vmax.f32 %v404, %v838
  %v1843 = vmax.f32 %v409, %v843
  %v1844 = vmax.f32 %v412, %v846
  %v1845 = vmax.f32 %v417, %v851
  %v1846 = vmax.f32 %v420, %v854
  %v1847 = vmax.f32 %v425, %v859
  %v1848 = vmax.f32 %v428, %v862
  %v1849 = vmax.f32 %v433, %v867
  %v1850 = vmax.f32 %v436, %v870
  %v1851 = vmax.f32 %v441, %v875
  %v1852 = vmax.f32 %v444, %v878
  %v1853 = vmax.f32 %v449, %v883
  %v1854 = vmax.f32 %v452, %v886
  %v1855 = vmax.f32 %v457, %v891
  %v1856 = vmax.f32 %v460, %v894
  %v1857 = vmax.f32 %v465, %v899
  %v1858 = vmax.f32 %v468, %v902
  %v1859 = vmax.f32 %v473, %v907
  %v1860 = vmax.f32 %v476, %v910
  %v1861 = vmax.f32 %v481, %v915
  %v1862 = vmax.f32 %v484, %v918
  %v1863 = vmax.f32 %v489, %v923
  %v1864 = vmax.f32 %v492, %v926
  %v1865 = vmax.f32 %v497, %v931
  %v1866 = vmax.f32 %v500, %v934
  %v1867 = vmax.f32 %v505, %v939
  %v1868 = vmax.f32 %v508, %v942
  %v1869 = vmax.f32 %v513, %v947
  %v1870 = vmax.f32 %v516, %v950
  %v1871 = vmax.f32 %v1189, %v1623
  %v1872 = vmax.f32 %v1192, %v1626
  %v1873 = vmax.f32 %v1197, %v1631
  %v1874 = vmax.f32 %v1200, %v1634
  %v1875 = vmax.f32 %v1205, %v1639
  %v1876 = vmax.f32 %v1208, %v1642
  %v1877 = vmax.f32 %v1213, %v1647
  %v1878 = vmax.f32 %v1216, %v1650
  %v1879 = vmax.f32 %v1221, %v1655
  %v1880 = vmax.f32 %v1224, %v1658
  %v1881 = vmax.f32 %v1229, %v1663
  %v1882 = vmax.f32 %v1232, %v1666
  %v1883 = vmax.f32 %v1237, %v1671
  %v1884 = vmax.f32 %v1240, %v1674
  %v1885 = vmax.f32 %v1245, %v1679
  %v1886 = vmax.f32 %v1248, %v1682
  %v1887 = vmax.f32 %v1253, %v1687
  %v1888 = vmax.f32 %v1256, %v1690
  %v1889 = vmax.f32 %v1261, %v1695
  %v1890 = vmax.f32 %v1264, %v1698
  %v1891 = vmax.f32 %v1269, %v1703
  %v1892 = vmax.f32 %v1272, %v1706
  %v1893 = vmax.f32 %v1277, %v1711
  %v1894 = vmax.f32 %v1280, %v1714
  %v1895 = vmax.f32 %v1285, %v1719
  %v1896 = vmax.f32 %v1288, %v1722
  %v1897 = vmax.f32 %v1293, %v1727
  %v1898 = vmax.f32 %v1296, %v1730
  %v1899 = vmax.f32 %v1301, %v1735
  %v1900 = vmax.f32 %v1304, %v1738
  %v1901 = vmax.f32 %v1309, %v1743
  %v1902 = vmax.f32 %v1312, %v1746
  %v1903 = vmax.f32 %v1317, %v1751
  %v1904 = vmax.f32 %v1320, %v1754
  %v1905 = vmax.f32 %v1325, %v1759
  %v1906 = vmax.f32 %v1328, %v1762
  %v1907 = vmax.f32 %v1333, %v1767
  %v1908 = vmax.f32 %v1336, %v1770
  %v1909 = vmax.f32 %v1341, %v1775
  %v1910 = vmax.f32 %v1344, %v1778
  %v1911 = vmax.f32 %v1349, %v1783
  %v1912 = vmax.f32 %v1352, %v1786
  %v1913 = vmax.f32 %v1357, %v1791
  %v1914 = vmax.f32 %v1360, %v1794
  %v1915 = vmax.f32 %v1365, %v1799
  %v1916 = vmax.f32 %v1368, %v1802
  %v1917 = vmax.f32 %v1373, %v1807
  %v1918 = vmax.f32 %v1376, %v1810
  %v1919 = vmax.f32 %v1381, %v1815
  %v1920 = vmax.f32 %v1384, %v1818
  %v1921 = vmax.f32 %v1821, %v1871
  %v1922 = vmax.f32 %v1822, %v1872
  %v1923 = vmax.f32 %v1823, %v1873
  %v1924 = vmax.f32 %v1824, %v1874
  %v1925 = vmax.f32 %v1825, %v1875
  %v1926 = vmax.f32 %v1826, %v1876
  %v1927 = vmax.f32 %v1827, %v1877
  %v1928 = vmax.f32 %v1828, %v1878
  %v1929 = vmax.f32 %v1829, %v1879
  %v1930 = vmax.f32 %v1830, %v1880
  %v1931 = vmax.f32 %v1831, %v1881
  %v1932 = vmax.f32 %v1832, %v1882
  %v1933 = vmax.f32 %v1833, %v1883
  %v1934 = vmax.f32 %v1834, %v1884
  %v1935 = vmax.f32 %v1835, %v1885
  %v1936 = vmax.f32 %v1836, %v1886
  %v1937 = vmax.f32 %v1837, %v1887
  %v1938 = vmax.f32 %v1838, %v1888
  %v1939 = vmax.f32 %v1839, %v1889
  %v1940 = vmax.f32 %v1840, %v1890
  %v1941 = vmax.f32 %v1841, %v1891
  %v1942 = vmax.f32 %v1842, %v1892
  %v1943 = vmax.f32 %v1843, %v1893
  %v1944 = vmax.f32 %v1844, %v1894
  %v1945 = vmax.f32 %v1845, %v1895
  %v1946 = vmax.f32 %v1846, %v1896
  %v1947 = vmax.f32 %v1847, %v1897
  %v1948 = vmax.f32 %v1848, %v1898
  %v1949 = vmax.f32 %v1849, %v1899
  %v1950 = vmax.f32 %v1850, %v1900
  %v1951 = vmax.f32 %v1851, %v1901
  %v1952 = vmax.f32 %v1852, %v1902
  %v1953 = vmax.f32 %v1853, %v1903
  %v1954 = vmax.f32 %v1854, %v1904
  %v1955 = vmax.f32 %v1855, %v1905
  %v1956 = vmax.f32 %v1856, %v1906
  %v1957 = vmax.f32 %v1857, %v1907
  %v1958 = vmax.f32 %v1858, %v1908
  %v1959 = vmax.f32 %v1859, %v1909
  %v1960 = vmax.f32 %v1860, %v1910
  %v1961 = vmax.f32 %v1861, %v1911
  %v1962 = vmax.f32 %v1862, %v1912
  %v1963 = vmax.f32 %v1863, %v1913
  %v1964 = vmax.f32 %v1864, %v1914
  %v1965 = vmax.f32 %v1865, %v1915
  %v1966 = vmax.f32 %v1866, %v1916
  %v1967 = vmax.f32 %v1867, %v1917
  %v1968 = vmax.f32 %v1868, %v1918
  %v1969 = vmax.f32 %v1869, %v1919
  %v1970 = vmax.f32 %v1870, %v1920
  %v1971 = vmax.f32 %v1921, 0.0
  %v1972 = vmax.f32 %v1922, 0.0
  %v1973 = vmax.f32 %v1923, 0.0
  %v1974 = vmax.f32 %v1924, 0.0
  %v1975 = vmax.f32 %v1925, 0.0
  %v1976 = vmax.f32 %v1926, 0.0
  %v1977 = vmax.f32 %v1927, 0.0
  %v1978 = vmax.f32 %v1928, 0.0
  %v1979 = vmax.f32 %v1929, 0.0
  %v1980 = vmax.f32 %v1930, 0.0
  %v1981 = vmax.f32 %v1931, 0.0
  %v1982 = vmax.f32 %v1932, 0.0
  %v1983 = vmax.f32 %v1933, 0.0
  %v1984 = vmax.f32 %v1934, 0.0
  %v1985 = vmax.f32 %v1935, 0.0
  %v1986 = vmax.f32 %v1936, 0.0
  %v1987 = vmax.f32 %v1937, 0.0
  %v1988 = vmax.f32 %v1938, 0.0
  %v1989 = vmax.f32 %v1939, 0.0
  %v1990 = vmax.f32 %v1940, 0.0
  %v1991 = vmax.f32 %v1941, 0.0
  %v1992 = vmax.f32 %v1942, 0.0
  %v1993 = vmax.f32 %v1943, 0.0
  %v1994 = vmax.f32 %v1944, 0.0
  %v1995 = vmax.f32 %v1945, 0.0
  %v1996 = vmax.f32 %v1946, 0.0
  %v1997 = vmax.f32 %v1947, 0.0
  %v1998 = vmax.f32 %v1948, 0.0
  %v1999 = vmax.f32 %v1949, 0.0
  %v2000 = vmax.f32 %v1950, 0.0
  %v2001 = vmax.f32 %v1951, 0.0
  %v2002 = vmax.f32 %v1952, 0.0
  %v2003 = vmax.f32 %v1953, 0.0
  %v2004 = vmax.f32 %v1954, 0.0
  %v2005 = vmax.f32 %v1955, 0.0
  %v2006 = vmax.f32 %v1956, 0.0
  %v2007 = vmax.f32 %v1957, 0.0
  %v2008 = vmax.f32 %v1958, 0.0
  %v2009 = vmax.f32 %v1959, 0.0
  %v2010 = vmax.f32 %v1960, 0.0
  %v2011 = vmax.f32 %v1961, 0.0
  %v2012 = vmax.f32 %v1962, 0.0
  %v2013 = vmax.f32 %v1963, 0.0
  %v2014 = vmax.f32 %v1964, 0.0
  %v2015 = vmax.f32 %v1965, 0.0
  %v2016 = vmax.f32 %v1966, 0.0
  %v2017 = vmax.f32 %v1967, 0.0
  %v2018 = vmax.f32 %v1968, 0.0
  %v2019 = vmax.f32 %v1969, 0.0
  %v2020 = vmax.f32 %v1970, 0.0
  %2021 = vst [vmem:[%s3] sm:$0xff] %v1971
  %2022 = vst [vmem:[%s3 + $0x8] sm:$0xff] %v1972
  %2023 = vst [vmem:[%s3 + $0x10] sm:$0xff] %v1973
  %2024 = vst [vmem:[%s3 + $0x18] sm:$0xff] %v1974
  %2025 = vst [vmem:[%s3 + $0x20] sm:$0xff] %v1975
  %2026 = vst [vmem:[%s3 + $0x28] sm:$0xff] %v1976
  %2027 = vst [vmem:[%s3 + $0x30] sm:$0xff] %v1977
  %2028 = vst [vmem:[%s3 + $0x38] sm:$0xff] %v1978
  %2029 = vst [vmem:[%s3 + $0x40] sm:$0xff] %v1979
  %2030 = vst [vmem:[%s3 + $0x48] sm:$0xff] %v1980
  %2031 = vst [vmem:[%s3 + $0x50] sm:$0xff] %v1981
  %2032 = vst [vmem:[%s3 + $0x58] sm:$0xff] %v1982
  %2033 = vst [vmem:[%s3 + $0x60] sm:$0xff] %v1983
  %2034 = vst [vmem:[%s3 + $0x68] sm:$0xff] %v1984
  %2035 = vst [vmem:[%s3 + $0x70] sm:$0xff] %v1985
  %2036 = vst [vmem:[%s3 + $0x78] sm:$0xff] %v1986
  %2037 = vst [vmem:[%s3 + $0x80] sm:$0xff] %v1987
  %2038 = vst [vmem:[%s3 + $0x88] sm:$0xff] %v1988
  %2039 = vst [vmem:[%s3 + $0x90] sm:$0xff] %v1989
  %2040 = vst [vmem:[%s3 + $0x98] sm:$0xff] %v1990
  %2041 = vst [vmem:[%s3 + $0xa0] sm:$0xff] %v1991
  %2042 = vst [vmem:[%s3 + $0xa8] sm:$0xff] %v1992
  %2043 = vst [vmem:[%s3 + $0xb0] sm:$0xff] %v1993
  %2044 = vst [vmem:[%s3 + $0xb8] sm:$0xff] %v1994
  %2045 = vst [vmem:[%s3 + $0xc0] sm:$0xff] %v1995
  %2046 = vst [vmem:[%s3 + $0xc8] sm:$0xff] %v1996
  %2047 = vst [vmem:[%s3 + $0xd0] sm:$0xff] %v1997
  %2048 = vst [vmem:[%s3 + $0xd8] sm:$0xff] %v1998
  %2049 = vst [vmem:[%s3 + $0xe0] sm:$0xff] %v1999
  %2050 = vst [vmem:[%s3 + $0xe8] sm:$0xff] %v2000
  %2051 = vst [vmem:[%s3 + $0xf0] sm:$0xff] %v2001
  %2052 = vst [vmem:[%s3 + $0xf8] sm:$0xff] %v2002
  %2053 = vst [vmem:[%s3 + $0x100] sm:$0xff] %v2003
  %2054 = vst [vmem:[%s3 + $0x108] sm:$0xff] %v2004
  %2055 = vst [vmem:[%s3 + $0x110] sm:$0xff] %v2005
  %2056 = vst [vmem:[%s3 + $0x118] sm:$0xff] %v2006
  %2057 = vst [vmem:[%s3 + $0x120] sm:$0xff] %v2007
  %2058 = vst [vmem:[%s3 + $0x128] sm:$0xff] %v2008
  %2059 = vst [vmem:[%s3 + $0x130] sm:$0xff] %v2009
  %2060 = vst [vmem:[%s3 + $0x138] sm:$0xff] %v2010
  %2061 = vst [vmem:[%s3 + $0x140] sm:$0xff] %v2011
  %2062 = vst [vmem:[%s3 + $0x148] sm:$0xff] %v2012
  %2063 = vst [vmem:[%s3 + $0x150] sm:$0xff] %v2013
  %2064 = vst [vmem:[%s3 + $0x158] sm:$0xff] %v2014
  %2065 = vst [vmem:[%s3 + $0x160] sm:$0xff] %v2015
  %2066 = vst [vmem:[%s3 + $0x168] sm:$0xff] %v2016
  %2067 = vst [vmem:[%s3 + $0x170] sm:$0xff] %v2017
  %2068 = vst [vmem:[%s3 + $0x178] sm:$0xff] %v2018
  %2069 = vst [vmem:[%s3 + $0x180] sm:$0xff] %v2019
  %2070 = vst [vmem:[%s3 + $0x188] sm:$0xff] %v2020
  // Predicated region
  $region14: #{forward.3} parent=0 // pred_check
    _
  $region15: #{forward.3} parent=0 // pred_check_branch
    %2072 = sbr.rel (0) target = $region17
  $region16: #{forward.3} parent=0 // pred_region
    _
  $region17: #{forward.3} parent=0 // pred_fallthru
    _
  // Predicated region
  $region18: #{forward.3} parent=0 // pred_check
    _
  $region19: #{forward.3} parent=0 // pred_check_branch
    %2074 = sbr.rel (0) target = $region21
  $region20: #{forward.3} parent=0 // pred_region
    _
  $region21: #{forward.3} parent=0 // pred_fallthru
    _

// kernel: forward.4
$region0: #{forward.4}
  #allocation0 [shape = 'u32[]', space=smem, size = 0x4, offset = 0x4, fixed_abs, tag = 'smem constant byte address 0x4 - core index']
  #allocation1 [shape = 'u32[144,128]{1,0:T(1,128)}', space=vmem, size = 0x12000, scoped, tag = 'internal scratch']
  %s0 = inlined_call_operand.vmem [shape: bf16[4,64,256], index: 0, kind: input, shape index: {}]
  %s1 = inlined_call_operand.vmem [shape: bf16[256,128], index: 1, kind: input, shape index: {}]
  %s2 = inlined_call_operand.vmem [shape: f32[1,128], index: 2, kind: input, shape index: {}]
  %s3 = inlined_call_operand.vmem [shape: f32[64,128], index: 3, kind: output, shape index: {}]
  %s4 = sld [smem:[#allocation0]]
  $region22: #{forward.4} parent=0
    _
  %s6 = ssub.s32 1, %s4
  %s7 = scalar_select 0, %s6, %s4
  // Predicated region
  $region2: #{forward.4} parent=0 // pred_check
    _
  $region3: #{forward.4} parent=0 // pred_check_branch
    %9 = sbr.rel (0) target = $region5
  $region4: #{forward.4} parent=0 // pred_region
    _
  $region5: #{forward.4} parent=0 // pred_fallthru
    _
  // Predicated region
  $region6: #{forward.4} parent=0 // pred_check
    _
  $region7: #{forward.4} parent=0 // pred_check_branch
    %11 = sbr.rel (0) target = $region9
  $region8: #{forward.4} parent=0 // pred_region
    _
  $region9: #{forward.4} parent=0 // pred_fallthru
    _
  // Predicated region
  $region10: #{forward.4} parent=0 // pred_check
    _
  $region11: #{forward.4} parent=0 // pred_check_branch
    %13 = sbr.rel (0) target = $region13
  $region12: #{forward.4} parent=0 // pred_region
    _
  $region13: #{forward.4} parent=0 // pred_fallthru
    _
  %v15 = vld [vmem:[%s1] sm:$0xf]
  %v16 = vld [vmem:[%s1 + $0x4] sm:$0xf]
  %v17 = vld [vmem:[%s1 + $0x8] sm:$0xf]
  %v18 = vld [vmem:[%s1 + $0xc] sm:$0xf]
  %v19 = vld [vmem:[%s1 + $0x10] sm:$0xf]
  %v20 = vld [vmem:[%s1 + $0x14] sm:$0xf]
  %v21 = vld [vmem:[%s1 + $0x18] sm:$0xf]
  %v22 = vld [vmem:[%s1 + $0x1c] sm:$0xf]
  %v23 = vld [vmem:[%s1 + $0x20] sm:$0xf]
  %v24 = vld [vmem:[%s1 + $0x24] sm:$0xf]
  %v25 = vld [vmem:[%s1 + $0x28] sm:$0xf]
  %v26 = vld [vmem:[%s1 + $0x2c] sm:$0xf]
  %v27 = vld [vmem:[%s1 + $0x30] sm:$0xf]
  %v28 = vld [vmem:[%s1 + $0x34] sm:$0xf]
  %v29 = vld [vmem:[%s1 + $0x38] sm:$0xf]
  %v30 = vld [vmem:[%s1 + $0x3c] sm:$0xf]
  %v31 = vld [vmem:[%s1 + $0x40] sm:$0xf]
  %v32 = vld [vmem:[%s1 + $0x44] sm:$0xf]
  %v33 = vld [vmem:[%s1 + $0x48] sm:$0xf]
  %v34 = vld [vmem:[%s1 + $0x4c] sm:$0xf]
  %v35 = vld [vmem:[%s1 + $0x50] sm:$0xf]
  %v36 = vld [vmem:[%s1 + $0x54] sm:$0xf]
  %v37 = vld [vmem:[%s1 + $0x58] sm:$0xf]
  %v38 = vld [vmem:[%s1 + $0x5c] sm:$0xf]
  %v39 = vld [vmem:[%s1 + $0x60] sm:$0xf]
  %v40 = vld [vmem:[%s1 + $0x64] sm:$0xf]
  %v41 = vld [vmem:[%s1 + $0x68] sm:$0xf]
  %v42 = vld [vmem:[%s1 + $0x6c] sm:$0xf]
  %v43 = vld [vmem:[%s1 + $0x70] sm:$0xf]
  %v44 = vld [vmem:[%s1 + $0x74] sm:$0xf]
  %v45 = vld [vmem:[%s1 + $0x78] sm:$0xf]
  %v46 = vld [vmem:[%s1 + $0x7c] sm:$0xf]
  %v47 = vld [vmem:[%s2] sm:$0x1]
  %v48 = vld [vmem:[%s0] sm:$0xff]
  %v49 = vld [vmem:[%s0 + $0x8] sm:$0xff]
  %v50 = vld [vmem:[%s0 + $0x10] sm:$0xff]
  %v51 = vld [vmem:[%s0 + $0x18] sm:$0xff]
  %v52 = vld [vmem:[%s0 + $0x20] sm:$0xff]
  %v53 = vld [vmem:[%s0 + $0x28] sm:$0xff]
  %v54 = vld [vmem:[%s0 + $0x30] sm:$0xff]
  %v55 = vld [vmem:[%s0 + $0x38] sm:$0xff]
  %v57 = vlaneseq
  %v58 = vshrl.u32 %v57, 7
  %v59 = vsub.s32 0, %v58
  %v60 = vrot.slane %v47, %v59
  %v70 = vunpack.c.l.b16 %v48
  %v71 = vunpack.c.h.b16 %v48
  %v72 = vunpack.c.l.b16 %v49
  %v73 = vunpack.c.h.b16 %v49
  %v74 = vunpack.c.l.b16 %v50
  %v75 = vunpack.c.h.b16 %v50
  %v76 = vunpack.c.l.b16 %v51
  %v77 = vunpack.c.h.b16 %v51
  %v78 = vunpack.c.l.b16 %v52
  %v79 = vunpack.c.h.b16 %v52
  %v80 = vunpack.c.l.b16 %v53
  %v81 = vunpack.c.h.b16 %v53
  %v82 = vunpack.c.l.b16 %v54
  %v83 = vunpack.c.h.b16 %v54
  %v84 = vunpack.c.l.b16 %v55
  %v85 = vunpack.c.h.b16 %v55
  %v86 = vpack.c.b16 %v72, %v70
  %v87 = vpack.c.b16 %v73, %v71
  %v88 = vpack.c.b16 %v76, %v74
  %v89 = vpack.c.b16 %v77, %v75
  %v90 = vpack.c.b16 %v80, %v78
  %v91 = vpack.c.b16 %v81, %v79
  %v92 = vpack.c.b16 %v84, %v82
  %v93 = vpack.c.b16 %v85, %v83
  %v134 = vunpack.c.l.b16 %v15
  %v135 = vunpack.c.l.b16 %v16
  %v136 = vunpack.c.l.b16 %v17
  %v137 = vunpack.c.l.b16 %v18
  %v138 = vunpack.c.l.b16 %v19
  %v139 = vunpack.c.l.b16 %v20
  %v140 = vunpack.c.l.b16 %v21
  %v141 = vunpack.c.l.b16 %v22
  %v142 = vunpack.c.l.b16 %v23
  %v143 = vunpack.c.l.b16 %v24
  %v144 = vunpack.c.l.b16 %v25
  %v145 = vunpack.c.l.b16 %v26
  %v146 = vunpack.c.l.b16 %v27
  %v147 = vunpack.c.l.b16 %v28
  %v148 = vunpack.c.l.b16 %v29
  %v149 = vunpack.c.l.b16 %v30
  %v150 = vunpack.c.l.b16 %v31
  %v151 = vunpack.c.l.b16 %v32
  %v152 = vunpack.c.l.b16 %v33
  %v153 = vunpack.c.l.b16 %v34
  %v154 = vunpack.c.l.b16 %v35
  %v155 = vunpack.c.l.b16 %v36
  %v156 = vunpack.c.l.b16 %v37
  %v157 = vunpack.c.l.b16 %v38
  %v158 = vunpack.c.l.b16 %v39
  %v159 = vunpack.c.l.b16 %v40
  %v160 = vunpack.c.l.b16 %v41
  %v161 = vunpack.c.l.b16 %v42
  %v162 = vunpack.c.l.b16 %v43
  %v163 = vunpack.c.l.b16 %v44
  %v164 = vunpack.c.l.b16 %v45
  %v165 = vunpack.c.l.b16 %v46
  %v166 = vpack.c.b16 %v135, %v134
  %v167 = vpack.c.b16 %v137, %v136
  %v168 = vpack.c.b16 %v139, %v138
  %v169 = vpack.c.b16 %v141, %v140
  %v170 = vpack.c.b16 %v143, %v142
  %v171 = vpack.c.b16 %v145, %v144
  %v172 = vpack.c.b16 %v147, %v146
  %v173 = vpack.c.b16 %v149, %v148
  %v174 = vpack.c.b16 %v151, %v150
  %v175 = vpack.c.b16 %v153, %v152
  %v176 = vpack.c.b16 %v155, %v154
  %v177 = vpack.c.b16 %v157, %v156
  %v178 = vpack.c.b16 %v159, %v158
  %v179 = vpack.c.b16 %v161, %v160
  %v180 = vpack.c.b16 %v163, %v162
  %v181 = vpack.c.b16 %v165, %v164
  %198 = vmatprep.subr.bf16.mxu0 0
  %199 = vmatpush1.bf16.msra.mxu0 %v166
  %200 = vmatprep.subr.bf16.mxu0 0
  %201 = vmatpush1.bf16.msra.mxu0 %v167
  %202 = vmatprep.subr.bf16.mxu0 0
  %203 = vmatpush1.bf16.msra.mxu0 %v168
  %204 = vmatprep.subr.bf16.mxu0 0
  %205 = vmatpush1.bf16.msra.mxu0 %v169
  %206 = vmatprep.subr.bf16.mxu0 0
  %207 = vmatpush1.bf16.msra.mxu0 %v170
  %208 = vmatprep.subr.bf16.mxu0 0
  %209 = vmatpush1.bf16.msra.mxu0 %v171
  %210 = vmatprep.subr.bf16.mxu0 0
  %211 = vmatpush1.bf16.msra.mxu0 %v172
  %212 = vmatprep.subr.bf16.mxu0 0
  %213 = vmatpush1.bf16.msra.mxu0 %v173
  %214 = vmatprep.subr.bf16.mxu0 0
  %215 = vmatpush1.bf16.msra.mxu0 %v174
  %216 = vmatprep.subr.bf16.mxu0 0
  %217 = vmatpush1.bf16.msra.mxu0 %v175
  %218 = vmatprep.subr.bf16.mxu0 0
  %219 = vmatpush1.bf16.msra.mxu0 %v176
  %220 = vmatprep.subr.bf16.mxu0 0
  %221 = vmatpush1.bf16.msra.mxu0 %v177
  %222 = vmatprep.subr.bf16.mxu0 0
  %223 = vmatpush1.bf16.msra.mxu0 %v178
  %224 = vmatprep.subr.bf16.mxu0 0
  %225 = vmatpush1.bf16.msra.mxu0 %v179
  %226 = vmatprep.subr.bf16.mxu0 0
  %227 = vmatpush1.bf16.msra.mxu0 %v180
  %228 = vmatprep.subr.bf16.mxu0 0
  %229 = vmatpush1.bf16.msra.mxu0 %v181
  %230 = vmatprep.mubr.bf16.mxu0 %v87
  %231 = vmatmul.mubr.bf16.gmra.mrb[0].mxu0 %v86
  %v232 = vpop.f32.mrb[0].mxu0
  %v233 = vadd.f32 %v60, %v232
  %v234 = vpop.f32.mrb[0].mxu0
  %v235 = vpop.f32.mrb[0].mxu0
  %v236 = vadd.f32 %v60, %v235
  %v237 = vpop.f32.mrb[0].mxu0
  %238 = vmatprep.mubr.bf16.mxu0 %v89
  %239 = vmatmul.mubr.bf16.gmra.mrb[0].mxu0 %v88
  %v240 = vpop.f32.mrb[0].mxu0
  %v241 = vadd.f32 %v60, %v240
  %v242 = vpop.f32.mrb[0].mxu0
  %v243 = vpop.f32.mrb[0].mxu0
  %v244 = vadd.f32 %v60, %v243
  %v245 = vpop.f32.mrb[0].mxu0
  %246 = vmatprep.mubr.bf16.mxu0 %v91
  %247 = vmatmul.mubr.bf16.gmra.mrb[0].mxu0 %v90
  %v248 = vpop.f32.mrb[0].mxu0
  %v249 = vadd.f32 %v60, %v248
  %v250 = vpop.f32.mrb[0].mxu0
  %v251 = vpop.f32.mrb[0].mxu0
  %v252 = vadd.f32 %v60, %v251
  %v253 = vpop.f32.mrb[0].mxu0
  %254 = vmatprep.mubr.bf16.mxu0 %v93
  %255 = vmatmul.mubr.bf16.gmra.mrb[0].mxu0 %v92
  %v256 = vpop.f32.mrb[0].mxu0
  %v257 = vadd.f32 %v60, %v256
  %v258 = vpop.f32.mrb[0].mxu0
  %v259 = vpop.f32.mrb[0].mxu0
  %v260 = vadd.f32 %v60, %v259
  %v261 = vpop.f32.mrb[0].mxu0
  %262 = vdwg.mxu0
  %s263 = scalar_lea.vmem %s0, 64
  %v264 = vld [vmem:[%s263] sm:$0xff]
  %v265 = vld [vmem:[%s263 + $0x8] sm:$0xff]
  %v266 = vld [vmem:[%s263 + $0x10] sm:$0xff]
  %v267 = vld [vmem:[%s263 + $0x18] sm:$0xff]
  %v268 = vld [vmem:[%s263 + $0x20] sm:$0xff]
  %v269 = vld [vmem:[%s263 + $0x28] sm:$0xff]
  %v270 = vld [vmem:[%s263 + $0x30] sm:$0xff]
  %v271 = vld [vmem:[%s263 + $0x38] sm:$0xff]
  %v280 = vunpack.c.l.b16 %v264
  %v281 = vunpack.c.h.b16 %v264
  %v282 = vunpack.c.l.b16 %v265
  %v283 = vunpack.c.h.b16 %v265
  %v284 = vunpack.c.l.b16 %v266
  %v285 = vunpack.c.h.b16 %v266
  %v286 = vunpack.c.l.b16 %v267
  %v287 = vunpack.c.h.b16 %v267
  %v288 = vunpack.c.l.b16 %v268
  %v289 = vunpack.c.h.b16 %v268
  %v290 = vunpack.c.l.b16 %v269
  %v291 = vunpack.c.h.b16 %v269
  %v292 = vunpack.c.l.b16 %v270
  %v293 = vunpack.c.h.b16 %v270
  %v294 = vunpack.c.l.b16 %v271
  %v295 = vunpack.c.h.b16 %v271
  %v296 = vpack.c.b16 %v282, %v280
  %v297 = vpack.c.b16 %v283, %v281
  %v298 = vpack.c.b16 %v286, %v284
  %v299 = vpack.c.b16 %v287, %v285
  %v300 = vpack.c.b16 %v290, %v288
  %v301 = vpack.c.b16 %v291, %v289
  %v302 = vpack.c.b16 %v294, %v292
  %v303 = vpack.c.b16 %v295, %v293
  %312 = vmatprep.subr.bf16.mxu0 0
  %313 = vmatpush1.bf16.msra.mxu0 %v166
  %314 = vmatprep.subr.bf16.mxu0 0
  %315 = vmatpush1.bf16.msra.mxu0 %v167
  %316 = vmatprep.subr.bf16.mxu0 0
  %317 = vmatpush1.bf16.msra.mxu0 %v168
  %318 = vmatprep.subr.bf16.mxu0 0
  %319 = vmatpush1.bf16.msra.mxu0 %v169
  %320 = vmatprep.subr.bf16.mxu0 0
  %321 = vmatpush1.bf16.msra.mxu0 %v170
  %322 = vmatprep.subr.bf16.mxu0 0
  %323 = vmatpush1.bf16.msra.mxu0 %v171
  %324 = vmatprep.subr.bf16.mxu0 0
  %325 = vmatpush1.bf16.msra.mxu0 %v172
  %326 = vmatprep.subr.bf16.mxu0 0
  %327 = vmatpush1.bf16.msra.mxu0 %v173
  %328 = vmatprep.subr.bf16.mxu0 0
  %329 = vmatpush1.bf16.msra.mxu0 %v174
  %330 = vmatprep.subr.bf16.mxu0 0
  %331 = vmatpush1.bf16.msra.mxu0 %v175
  %332 = vmatprep.subr.bf16.mxu0 0
  %333 = vmatpush1.bf16.msra.mxu0 %v176
  %334 = vmatprep.subr.bf16.mxu0 0
  %335 = vmatpush1.bf16.msra.mxu0 %v177
  %336 = vmatprep.subr.bf16.mxu0 0
  %337 = vmatpush1.bf16.msra.mxu0 %v178
  %338 = vmatprep.subr.bf16.mxu0 0
  %339 = vmatpush1.bf16.msra.mxu0 %v179
  %340 = vmatprep.subr.bf16.mxu0 0
  %341 = vmatpush1.bf16.msra.mxu0 %v180
  %342 = vmatprep.subr.bf16.mxu0 0
  %343 = vmatpush1.bf16.msra.mxu0 %v181
  %344 = vmatprep.mubr.bf16.mxu0 %v297
  %345 = vmatmul.mubr.bf16.gmra.mrb[0].mxu0 %v296
  %v346 = vpop.f32.mrb[0].mxu0
  %v347 = vadd.f32 %v60, %v346
  %v348 = vpop.f32.mrb[0].mxu0
  %v349 = vpop.f32.mrb[0].mxu0
  %v350 = vadd.f32 %v60, %v349
  %v351 = vpop.f32.mrb[0].mxu0
  %352 = vmatprep.mubr.bf16.mxu0 %v299
  %353 = vmatmul.mubr.bf16.gmra.mrb[0].mxu0 %v298
  %v354 = vpop.f32.mrb[0].mxu0
  %v355 = vadd.f32 %v60, %v354
  %v356 = vpop.f32.mrb[0].mxu0
  %v357 = vpop.f32.mrb[0].mxu0
  %v358 = vadd.f32 %v60, %v357
  %v359 = vpop.f32.mrb[0].mxu0
  %360 = vmatprep.mubr.bf16.mxu0 %v301
  %361 = vmatmul.mubr.bf16.gmra.mrb[0].mxu0 %v300
  %v362 = vpop.f32.mrb[0].mxu0
  %v363 = vadd.f32 %v60, %v362
  %v364 = vpop.f32.mrb[0].mxu0
  %v365 = vpop.f32.mrb[0].mxu0
  %v366 = vadd.f32 %v60, %v365
  %v367 = vpop.f32.mrb[0].mxu0
  %368 = vmatprep.mubr.bf16.mxu0 %v303
  %369 = vmatmul.mubr.bf16.gmra.mrb[0].mxu0 %v302
  %v370 = vpop.f32.mrb[0].mxu0
  %v371 = vadd.f32 %v60, %v370
  %v372 = vpop.f32.mrb[0].mxu0
  %v373 = vpop.f32.mrb[0].mxu0
  %v374 = vadd.f32 %v60, %v373
  %v375 = vpop.f32.mrb[0].mxu0
  %376 = vdwg.mxu0
  %s377 = scalar_lea.vmem %s0, 128
  %v378 = vld [vmem:[%s377] sm:$0xff]
  %v379 = vld [vmem:[%s377 + $0x8] sm:$0xff]
  %v380 = vld [vmem:[%s377 + $0x10] sm:$0xff]
  %v381 = vld [vmem:[%s377 + $0x18] sm:$0xff]
  %v382 = vld [vmem:[%s377 + $0x20] sm:$0xff]
  %v383 = vld [vmem:[%s377 + $0x28] sm:$0xff]
  %v384 = vld [vmem:[%s377 + $0x30] sm:$0xff]
  %v385 = vld [vmem:[%s377 + $0x38] sm:$0xff]
  %v394 = vunpack.c.l.b16 %v378
  %v395 = vunpack.c.h.b16 %v378
  %v396 = vunpack.c.l.b16 %v379
  %v397 = vunpack.c.h.b16 %v379
  %v398 = vunpack.c.l.b16 %v380
  %v399 = vunpack.c.h.b16 %v380
  %v400 = vunpack.c.l.b16 %v381
  %v401 = vunpack.c.h.b16 %v381
  %v402 = vunpack.c.l.b16 %v382
  %v403 = vunpack.c.h.b16 %v382
  %v404 = vunpack.c.l.b16 %v383
  %v405 = vunpack.c.h.b16 %v383
  %v406 = vunpack.c.l.b16 %v384
  %v407 = vunpack.c.h.b16 %v384
  %v408 = vunpack.c.l.b16 %v385
  %v409 = vunpack.c.h.b16 %v385
  %v410 = vpack.c.b16 %v396, %v394
  %v411 = vpack.c.b16 %v397, %v395
  %v412 = vpack.c.b16 %v400, %v398
  %v413 = vpack.c.b16 %v401, %v399
  %v414 = vpack.c.b16 %v404, %v402
  %v415 = vpack.c.b16 %v405, %v403
  %v416 = vpack.c.b16 %v408, %v406
  %v417 = vpack.c.b16 %v409, %v407
  %426 = vmatprep.subr.bf16.mxu0 0
  %427 = vmatpush1.bf16.msra.mxu0 %v166
  %428 = vmatprep.subr.bf16.mxu0 0
  %429 = vmatpush1.bf16.msra.mxu0 %v167
  %430 = vmatprep.subr.bf16.mxu0 0
  %431 = vmatpush1.bf16.msra.mxu0 %v168
  %432 = vmatprep.subr.bf16.mxu0 0
  %433 = vmatpush1.bf16.msra.mxu0 %v169
  %434 = vmatprep.subr.bf16.mxu0 0
  %435 = vmatpush1.bf16.msra.mxu0 %v170
  %436 = vmatprep.subr.bf16.mxu0 0
  %437 = vmatpush1.bf16.msra.mxu0 %v171
  %438 = vmatprep.subr.bf16.mxu0 0
  %439 = vmatpush1.bf16.msra.mxu0 %v172
  %440 = vmatprep.subr.bf16.mxu0 0
  %441 = vmatpush1.bf16.msra.mxu0 %v173
  %442 = vmatprep.subr.bf16.mxu0 0
  %443 = vmatpush1.bf16.msra.mxu0 %v174
  %444 = vmatprep.subr.bf16.mxu0 0
  %445 = vmatpush1.bf16.msra.mxu0 %v175
  %446 = vmatprep.subr.bf16.mxu0 0
  %447 = vmatpush1.bf16.msra.mxu0 %v176
  %448 = vmatprep.subr.bf16.mxu0 0
  %449 = vmatpush1.bf16.msra.mxu0 %v177
  %450 = vmatprep.subr.bf16.mxu0 0
  %451 = vmatpush1.bf16.msra.mxu0 %v178
  %452 = vmatprep.subr.bf16.mxu0 0
  %453 = vmatpush1.bf16.msra.mxu0 %v179
  %454 = vmatprep.subr.bf16.mxu0 0
  %455 = vmatpush1.bf16.msra.mxu0 %v180
  %456 = vmatprep.subr.bf16.mxu0 0
  %457 = vmatpush1.bf16.msra.mxu0 %v181
  %458 = vmatprep.mubr.bf16.mxu0 %v411
  %459 = vmatmul.mubr.bf16.gmra.mrb[0].mxu0 %v410
  %v460 = vpop.f32.mrb[0].mxu0
  %v461 = vadd.f32 %v60, %v460
  %v462 = vpop.f32.mrb[0].mxu0
  %v463 = vpop.f32.mrb[0].mxu0
  %v464 = vadd.f32 %v60, %v463
  %v465 = vpop.f32.mrb[0].mxu0
  %466 = vmatprep.mubr.bf16.mxu0 %v413
  %467 = vmatmul.mubr.bf16.gmra.mrb[0].mxu0 %v412
  %v468 = vpop.f32.mrb[0].mxu0
  %v469 = vadd.f32 %v60, %v468
  %v470 = vpop.f32.mrb[0].mxu0
  %v471 = vpop.f32.mrb[0].mxu0
  %v472 = vadd.f32 %v60, %v471
  %v473 = vpop.f32.mrb[0].mxu0
  %474 = vmatprep.mubr.bf16.mxu0 %v415
  %475 = vmatmul.mubr.bf16.gmra.mrb[0].mxu0 %v414
  %v476 = vpop.f32.mrb[0].mxu0
  %v477 = vadd.f32 %v60, %v476
  %v478 = vpop.f32.mrb[0].mxu0
  %v479 = vpop.f32.mrb[0].mxu0
  %v480 = vadd.f32 %v60, %v479
  %v481 = vpop.f32.mrb[0].mxu0
  %482 = vmatprep.mubr.bf16.mxu0 %v417
  %483 = vmatmul.mubr.bf16.gmra.mrb[0].mxu0 %v416
  %v484 = vpop.f32.mrb[0].mxu0
  %v485 = vadd.f32 %v60, %v484
  %v486 = vpop.f32.mrb[0].mxu0
  %v487 = vpop.f32.mrb[0].mxu0
  %v488 = vadd.f32 %v60, %v487
  %v489 = vpop.f32.mrb[0].mxu0
  %490 = vdwg.mxu0
  %s491 = scalar_lea.vmem %s0, 192
  %v492 = vld [vmem:[%s491] sm:$0xff]
  %v493 = vld [vmem:[%s491 + $0x8] sm:$0xff]
  %v494 = vld [vmem:[%s491 + $0x10] sm:$0xff]
  %v495 = vld [vmem:[%s491 + $0x18] sm:$0xff]
  %v496 = vld [vmem:[%s491 + $0x20] sm:$0xff]
  %v497 = vld [vmem:[%s491 + $0x28] sm:$0xff]
  %v498 = vld [vmem:[%s491 + $0x30] sm:$0xff]
  %v499 = vld [vmem:[%s491 + $0x38] sm:$0xff]
  %v508 = vunpack.c.l.b16 %v492
  %v509 = vunpack.c.h.b16 %v492
  %v510 = vunpack.c.l.b16 %v493
  %v511 = vunpack.c.h.b16 %v493
  %v512 = vunpack.c.l.b16 %v494
  %v513 = vunpack.c.h.b16 %v494
  %v514 = vunpack.c.l.b16 %v495
  %v515 = vunpack.c.h.b16 %v495
  %v516 = vunpack.c.l.b16 %v496
  %v517 = vunpack.c.h.b16 %v496
  %v518 = vunpack.c.l.b16 %v497
  %v519 = vunpack.c.h.b16 %v497
  %v520 = vunpack.c.l.b16 %v498
  %v521 = vunpack.c.h.b16 %v498
  %v522 = vunpack.c.l.b16 %v499
  %v523 = vunpack.c.h.b16 %v499
  %v524 = vpack.c.b16 %v510, %v508
  %v525 = vpack.c.b16 %v511, %v509
  %v526 = vpack.c.b16 %v514, %v512
  %v527 = vpack.c.b16 %v515, %v513
  %v528 = vpack.c.b16 %v518, %v516
  %v529 = vpack.c.b16 %v519, %v517
  %v530 = vpack.c.b16 %v522, %v520
  %v531 = vpack.c.b16 %v523, %v521
  %540 = vmatprep.subr.bf16.mxu0 0
  %541 = vmatpush1.bf16.msra.mxu0 %v166
  %542 = vmatprep.subr.bf16.mxu0 0
  %543 = vmatpush1.bf16.msra.mxu0 %v167
  %544 = vmatprep.subr.bf16.mxu0 0
  %545 = vmatpush1.bf16.msra.mxu0 %v168
  %546 = vmatprep.subr.bf16.mxu0 0
  %547 = vmatpush1.bf16.msra.mxu0 %v169
  %548 = vmatprep.subr.bf16.mxu0 0
  %549 = vmatpush1.bf16.msra.mxu0 %v170
  %550 = vmatprep.subr.bf16.mxu0 0
  %551 = vmatpush1.bf16.msra.mxu0 %v171
  %552 = vmatprep.subr.bf16.mxu0 0
  %553 = vmatpush1.bf16.msra.mxu0 %v172
  %554 = vmatprep.subr.bf16.mxu0 0
  %555 = vmatpush1.bf16.msra.mxu0 %v173
  %556 = vmatprep.subr.bf16.mxu0 0
  %557 = vmatpush1.bf16.msra.mxu0 %v174
  %558 = vmatprep.subr.bf16.mxu0 0
  %559 = vmatpush1.bf16.msra.mxu0 %v175
  %560 = vmatprep.subr.bf16.mxu0 0
  %561 = vmatpush1.bf16.msra.mxu0 %v176
  %562 = vmatprep.subr.bf16.mxu0 0
  %563 = vmatpush1.bf16.msra.mxu0 %v177
  %564 = vmatprep.subr.bf16.mxu0 0
  %565 = vmatpush1.bf16.msra.mxu0 %v178
  %566 = vmatprep.subr.bf16.mxu0 0
  %567 = vmatpush1.bf16.msra.mxu0 %v179
  %568 = vmatprep.subr.bf16.mxu0 0
  %569 = vmatpush1.bf16.msra.mxu0 %v180
  %570 = vmatprep.subr.bf16.mxu0 0
  %571 = vmatpush1.bf16.msra.mxu0 %v181
  %572 = vmatprep.mubr.bf16.mxu0 %v525
  %573 = vmatmul.mubr.bf16.gmra.mrb[0].mxu0 %v524
  %v574 = vpop.f32.mrb[0].mxu0
  %v575 = vadd.f32 %v60, %v574
  %v576 = vpop.f32.mrb[0].mxu0
  %v577 = vpop.f32.mrb[0].mxu0
  %v578 = vadd.f32 %v60, %v577
  %v579 = vpop.f32.mrb[0].mxu0
  %580 = vmatprep.mubr.bf16.mxu0 %v527
  %581 = vmatmul.mubr.bf16.gmra.mrb[0].mxu0 %v526
  %v582 = vpop.f32.mrb[0].mxu0
  %v583 = vadd.f32 %v60, %v582
  %v584 = vpop.f32.mrb[0].mxu0
  %v585 = vpop.f32.mrb[0].mxu0
  %v586 = vadd.f32 %v60, %v585
  %v587 = vpop.f32.mrb[0].mxu0
  %588 = vmatprep.mubr.bf16.mxu0 %v529
  %589 = vmatmul.mubr.bf16.gmra.mrb[0].mxu0 %v528
  %v590 = vpop.f32.mrb[0].mxu0
  %v591 = vadd.f32 %v60, %v590
  %v592 = vpop.f32.mrb[0].mxu0
  %v593 = vpop.f32.mrb[0].mxu0
  %v594 = vadd.f32 %v60, %v593
  %v595 = vpop.f32.mrb[0].mxu0
  %596 = vmatprep.mubr.bf16.mxu0 %v531
  %597 = vmatmul.mubr.bf16.gmra.mrb[0].mxu0 %v530
  %v598 = vpop.f32.mrb[0].mxu0
  %v599 = vadd.f32 %v60, %v598
  %v600 = vpop.f32.mrb[0].mxu0
  %v601 = vpop.f32.mrb[0].mxu0
  %v602 = vadd.f32 %v60, %v601
  %v603 = vpop.f32.mrb[0].mxu0
  %604 = vdwg.mxu0
  %v605 = vmax.f32 %v233, %v347
  %v606 = vmax.f32 %v236, %v350
  %v607 = vmax.f32 %v241, %v355
  %v608 = vmax.f32 %v244, %v358
  %v609 = vmax.f32 %v249, %v363
  %v610 = vmax.f32 %v252, %v366
  %v611 = vmax.f32 %v257, %v371
  %v612 = vmax.f32 %v260, %v374
  %v613 = vmax.f32 %v461, %v575
  %v614 = vmax.f32 %v464, %v578
  %v615 = vmax.f32 %v469, %v583
  %v616 = vmax.f32 %v472, %v586
  %v617 = vmax.f32 %v477, %v591
  %v618 = vmax.f32 %v480, %v594
  %v619 = vmax.f32 %v485, %v599
  %v620 = vmax.f32 %v488, %v602
  %v621 = vmax.f32 %v605, %v613
  %v622 = vmax.f32 %v606, %v614
  %v623 = vmax.f32 %v607, %v615
  %v624 = vmax.f32 %v608, %v616
  %v625 = vmax.f32 %v609, %v617
  %v626 = vmax.f32 %v610, %v618
  %v627 = vmax.f32 %v611, %v619
  %v628 = vmax.f32 %v612, %v620
  %v629 = vmax.f32 %v621, 0.0
  %v630 = vmax.f32 %v622, 0.0
  %v631 = vmax.f32 %v623, 0.0
  %v632 = vmax.f32 %v624, 0.0
  %v633 = vmax.f32 %v625, 0.0
  %v634 = vmax.f32 %v626, 0.0
  %v635 = vmax.f32 %v627, 0.0
  %v636 = vmax.f32 %v628, 0.0
  %637 = vst [vmem:[%s3] sm:$0xff] %v629
  %638 = vst [vmem:[%s3 + $0x8] sm:$0xff] %v630
  %639 = vst [vmem:[%s3 + $0x10] sm:$0xff] %v631
  %640 = vst [vmem:[%s3 + $0x18] sm:$0xff] %v632
  %641 = vst [vmem:[%s3 + $0x20] sm:$0xff] %v633
  %642 = vst [vmem:[%s3 + $0x28] sm:$0xff] %v634
  %643 = vst [vmem:[%s3 + $0x30] sm:$0xff] %v635
  %644 = vst [vmem:[%s3 + $0x38] sm:$0xff] %v636
  // Predicated region
  $region14: #{forward.4} parent=0 // pred_check
    _
  $region15: #{forward.4} parent=0 // pred_check_branch
    %646 = sbr.rel (0) target = $region17
  $region16: #{forward.4} parent=0 // pred_region
    _
  $region17: #{forward.4} parent=0 // pred_fallthru
    _
  // Predicated region
  $region18: #{forward.4} parent=0 // pred_check
    _
  $region19: #{forward.4} parent=0 // pred_check_branch
    %648 = sbr.rel (0) target = $region21
  $region20: #{forward.4} parent=0 // pred_region
    _
  $region21: #{forward.4} parent=0 // pred_fallthru
    _

// kernel: forward.5
$region0: #{forward.5}
  #allocation0 [shape = 'u32[]', space=smem, size = 0x4, offset = 0x4, fixed_abs, tag = 'smem constant byte address 0x4 - core index']
  #allocation1 [shape = 'u32[144,128]{1,0:T(1,128)}', space=vmem, size = 0x12000, scoped, tag = 'internal scratch']
  %s0 = inlined_call_operand.vmem [shape: bf16[16,512], index: 0, kind: input, shape index: {}]
  %s1 = inlined_call_operand.vmem [shape: bf16[512,128], index: 1, kind: input, shape index: {}]
  %s2 = inlined_call_operand.vmem [shape: f32[1,128], index: 2, kind: input, shape index: {}]
  %s3 = inlined_call_operand.vmem [shape: bf16[128,128], index: 3, kind: input, shape index: {}]
  %s4 = inlined_call_operand.vmem [shape: f32[1,128], index: 4, kind: input, shape index: {}]
  %s5 = inlined_call_operand.vmem [shape: bf16[128,128], index: 5, kind: input, shape index: {}]
  %s6 = inlined_call_operand.vmem [shape: f32[1,128], index: 6, kind: input, shape index: {}]
  %s7 = inlined_call_operand.vmem [shape: f32[16,128], index: 7, kind: output, shape index: {}]
  %s8 = sld [smem:[#allocation0]]
  $region38: #{forward.5} parent=0
    _
  %s10 = ssub.s32 1, %s8
  %s11 = scalar_select 0, %s10, %s8
  // Predicated region
  $region2: #{forward.5} parent=0 // pred_check
    _
  $region3: #{forward.5} parent=0 // pred_check_branch
    %13 = sbr.rel (0) target = $region5
  $region4: #{forward.5} parent=0 // pred_region
    _
  $region5: #{forward.5} parent=0 // pred_fallthru
    _
  // Predicated region
  $region6: #{forward.5} parent=0 // pred_check
    _
  $region7: #{forward.5} parent=0 // pred_check_branch
    %15 = sbr.rel (0) target = $region9
  $region8: #{forward.5} parent=0 // pred_region
    _
  $region9: #{forward.5} parent=0 // pred_fallthru
    _
  // Predicated region
  $region10: #{forward.5} parent=0 // pred_check
    _
  $region11: #{forward.5} parent=0 // pred_check_branch
    %17 = sbr.rel (0) target = $region13
  $region12: #{forward.5} parent=0 // pred_region
    _
  $region13: #{forward.5} parent=0 // pred_fallthru
    _
  // Predicated region
  $region14: #{forward.5} parent=0 // pred_check
    _
  $region15: #{forward.5} parent=0 // pred_check_branch
    %19 = sbr.rel (0) target = $region17
  $region16: #{forward.5} parent=0 // pred_region
    _
  $region17: #{forward.5} parent=0 // pred_fallthru
    _
  // Predicated region
  $region18: #{forward.5} parent=0 // pred_check
    _
  $region19: #{forward.5} parent=0 // pred_check_branch
    %21 = sbr.rel (0) target = $region21
  $region20: #{forward.5} parent=0 // pred_region
    _
  $region21: #{forward.5} parent=0 // pred_fallthru
    _
  // Predicated region
  $region22: #{forward.5} parent=0 // pred_check
    _
  $region23: #{forward.5} parent=0 // pred_check_branch
    %23 = sbr.rel (0) target = $region25
  $region24: #{forward.5} parent=0 // pred_region
    _
  $region25: #{forward.5} parent=0 // pred_fallthru
    _
  // Predicated region
  $region26: #{forward.5} parent=0 // pred_check
    _
  $region27: #{forward.5} parent=0 // pred_check_branch
    %25 = sbr.rel (0) target = $region29
  $region28: #{forward.5} parent=0 // pred_region
    _
  $region29: #{forward.5} parent=0 // pred_fallthru
    _
  %v27 = vld [vmem:[%s0] sm:$0xff]
  %v28 = vld [vmem:[%s0 + $0x8] sm:$0xff]
  %v29 = vld [vmem:[%s0 + $0x10] sm:$0xff]
  %v30 = vld [vmem:[%s0 + $0x18] sm:$0xff]
  %v31 = vld [vmem:[%s1] sm:$0xf]
  %v32 = vld [vmem:[%s1 + $0x4] sm:$0xf]
  %v33 = vld [vmem:[%s1 + $0x8] sm:$0xf]
  %v34 = vld [vmem:[%s1 + $0xc] sm:$0xf]
  %v35 = vld [vmem:[%s1 + $0x10] sm:$0xf]
  %v36 = vld [vmem:[%s1 + $0x14] sm:$0xf]
  %v37 = vld [vmem:[%s1 + $0x18] sm:$0xf]
  %v38 = vld [vmem:[%s1 + $0x1c] sm:$0xf]
  %v39 = vld [vmem:[%s1 + $0x20] sm:$0xf]
  %v40 = vld [vmem:[%s1 + $0x24] sm:$0xf]
  %v41 = vld [vmem:[%s1 + $0x28] sm:$0xf]
  %v42 = vld [vmem:[%s1 + $0x2c] sm:$0xf]
  %v43 = vld [vmem:[%s1 + $0x30] sm:$0xf]
  %v44 = vld [vmem:[%s1 + $0x34] sm:$0xf]
  %v45 = vld [vmem:[%s1 + $0x38] sm:$0xf]
  %v46 = vld [vmem:[%s1 + $0x3c] sm:$0xf]
  %v47 = vld [vmem:[%s1 + $0x40] sm:$0xf]
  %v48 = vld [vmem:[%s1 + $0x44] sm:$0xf]
  %v49 = vld [vmem:[%s1 + $0x48] sm:$0xf]
  %v50 = vld [vmem:[%s1 + $0x4c] sm:$0xf]
  %v51 = vld [vmem:[%s1 + $0x50] sm:$0xf]
  %v52 = vld [vmem:[%s1 + $0x54] sm:$0xf]
  %v53 = vld [vmem:[%s1 + $0x58] sm:$0xf]
  %v54 = vld [vmem:[%s1 + $0x5c] sm:$0xf]
  %v55 = vld [vmem:[%s1 + $0x60] sm:$0xf]
  %v56 = vld [vmem:[%s1 + $0x64] sm:$0xf]
  %v57 = vld [vmem:[%s1 + $0x68] sm:$0xf]
  %v58 = vld [vmem:[%s1 + $0x6c] sm:$0xf]
  %v59 = vld [vmem:[%s1 + $0x70] sm:$0xf]
  %v60 = vld [vmem:[%s1 + $0x74] sm:$0xf]
  %v61 = vld [vmem:[%s1 + $0x78] sm:$0xf]
  %v62 = vld [vmem:[%s1 + $0x7c] sm:$0xf]
  %v63 = vld [vmem:[%s1 + $0x80] sm:$0xf]
  %v64 = vld [vmem:[%s1 + $0x84] sm:$0xf]
  %v65 = vld [vmem:[%s1 + $0x88] sm:$0xf]
  %v66 = vld [vmem:[%s1 + $0x8c] sm:$0xf]
  %v67 = vld [vmem:[%s1 + $0x90] sm:$0xf]
  %v68 = vld [vmem:[%s1 + $0x94] sm:$0xf]
  %v69 = vld [vmem:[%s1 + $0x98] sm:$0xf]
  %v70 = vld [vmem:[%s1 + $0x9c] sm:$0xf]
  %v71 = vld [vmem:[%s1 + $0xa0] sm:$0xf]
  %v72 = vld [vmem:[%s1 + $0xa4] sm:$0xf]
  %v73 = vld [vmem:[%s1 + $0xa8] sm:$0xf]
  %v74 = vld [vmem:[%s1 + $0xac] sm:$0xf]
  %v75 = vld [vmem:[%s1 + $0xb0] sm:$0xf]
  %v76 = vld [vmem:[%s1 + $0xb4] sm:$0xf]
  %v77 = vld [vmem:[%s1 + $0xb8] sm:$0xf]
  %v78 = vld [vmem:[%s1 + $0xbc] sm:$0xf]
  %v79 = vld [vmem:[%s1 + $0xc0] sm:$0xf]
  %v80 = vld [vmem:[%s1 + $0xc4] sm:$0xf]
  %v81 = vld [vmem:[%s1 + $0xc8] sm:$0xf]
  %v82 = vld [vmem:[%s1 + $0xcc] sm:$0xf]
  %v83 = vld [vmem:[%s1 + $0xd0] sm:$0xf]
  %v84 = vld [vmem:[%s1 + $0xd4] sm:$0xf]
  %v85 = vld [vmem:[%s1 + $0xd8] sm:$0xf]
  %v86 = vld [vmem:[%s1 + $0xdc] sm:$0xf]
  %v87 = vld [vmem:[%s1 + $0xe0] sm:$0xf]
  %v88 = vld [vmem:[%s1 + $0xe4] sm:$0xf]
  %v89 = vld [vmem:[%s1 + $0xe8] sm:$0xf]
  %v90 = vld [vmem:[%s1 + $0xec] sm:$0xf]
  %v91 = vld [vmem:[%s1 + $0xf0] sm:$0xf]
  %v92 = vld [vmem:[%s1 + $0xf4] sm:$0xf]
  %v93 = vld [vmem:[%s1 + $0xf8] sm:$0xf]
  %v94 = vld [vmem:[%s1 + $0xfc] sm:$0xf]
  %v95 = vld [vmem:[%s2] sm:$0x1]
  %v97 = vlaneseq
  %v98 = vshrl.u32 %v97, 7
  %v99 = vsub.s32 0, %v98
  %v100 = vrot.slane %v95, %v99
  %v106 = vunpack.c.l.b16 %v27
  %v107 = vunpack.c.h.b16 %v27
  %v108 = vunpack.c.l.b16 %v28
  %v109 = vunpack.c.h.b16 %v28
  %v110 = vunpack.c.l.b16 %v29
  %v111 = vunpack.c.h.b16 %v29
  %v112 = vunpack.c.l.b16 %v30
  %v113 = vunpack.c.h.b16 %v30
  %v114 = vpack.c.b16 %v110, %v106
  %v115 = vpack.c.b16 %v111, %v107
  %v116 = vpack.c.b16 %v112, %v108
  %v117 = vpack.c.b16 %v113, %v109
  %v186 = vunpack.c.l.b16 %v31
  %v187 = vunpack.c.l.b16 %v32
  %v188 = vunpack.c.l.b16 %v33
  %v189 = vunpack.c.l.b16 %v34
  %v190 = vunpack.c.l.b16 %v35
  %v191 = vunpack.c.l.b16 %v36
  %v192 = vunpack.c.l.b16 %v37
  %v193 = vunpack.c.l.b16 %v38
  %v194 = vunpack.c.l.b16 %v39
  %v195 = vunpack.c.l.b16 %v40
  %v196 = vunpack.c.l.b16 %v41
  %v197 = vunpack.c.l.b16 %v42
  %v198 = vunpack.c.l.b16 %v43
  %v199 = vunpack.c.l.b16 %v44
  %v200 = vunpack.c.l.b16 %v45
  %v201 = vunpack.c.l.b16 %v46
  %v202 = vunpack.c.l.b16 %v47
  %v203 = vunpack.c.l.b16 %v48
  %v204 = vunpack.c.l.b16 %v49
  %v205 = vunpack.c.l.b16 %v50
  %v206 = vunpack.c.l.b16 %v51
  %v207 = vunpack.c.l.b16 %v52
  %v208 = vunpack.c.l.b16 %v53
  %v209 = vunpack.c.l.b16 %v54
  %v210 = vunpack.c.l.b16 %v55
  %v211 = vunpack.c.l.b16 %v56
  %v212 = vunpack.c.l.b16 %v57
  %v213 = vunpack.c.l.b16 %v58
  %v214 = vunpack.c.l.b16 %v59
  %v215 = vunpack.c.l.b16 %v60
  %v216 = vunpack.c.l.b16 %v61
  %v217 = vunpack.c.l.b16 %v62
  %v218 = vunpack.c.l.b16 %v63
  %v219 = vunpack.c.l.b16 %v64
  %v220 = vunpack.c.l.b16 %v65
  %v221 = vunpack.c.l.b16 %v66
  %v222 = vunpack.c.l.b16 %v67
  %v223 = vunpack.c.l.b16 %v68
  %v224 = vunpack.c.l.b16 %v69
  %v225 = vunpack.c.l.b16 %v70
  %v226 = vunpack.c.l.b16 %v71
  %v227 = vunpack.c.l.b16 %v72
  %v228 = vunpack.c.l.b16 %v73
  %v229 = vunpack.c.l.b16 %v74
  %v230 = vunpack.c.l.b16 %v75
  %v231 = vunpack.c.l.b16 %v76
  %v232 = vunpack.c.l.b16 %v77
  %v233 = vunpack.c.l.b16 %v78
  %v234 = vunpack.c.l.b16 %v79
  %v235 = vunpack.c.l.b16 %v80
  %v236 = vunpack.c.l.b16 %v81
  %v237 = vunpack.c.l.b16 %v82
  %v238 = vunpack.c.l.b16 %v83
  %v239 = vunpack.c.l.b16 %v84
  %v240 = vunpack.c.l.b16 %v85
  %v241 = vunpack.c.l.b16 %v86
  %v242 = vunpack.c.l.b16 %v87
  %v243 = vunpack.c.l.b16 %v88
  %v244 = vunpack.c.l.b16 %v89
  %v245 = vunpack.c.l.b16 %v90
  %v246 = vunpack.c.l.b16 %v91
  %v247 = vunpack.c.l.b16 %v92
  %v248 = vunpack.c.l.b16 %v93
  %v249 = vunpack.c.l.b16 %v94
  %v250 = vpack.c.b16 %v187, %v186
  %v251 = vpack.c.b16 %v189, %v188
  %v252 = vpack.c.b16 %v191, %v190
  %v253 = vpack.c.b16 %v193, %v192
  %v254 = vpack.c.b16 %v195, %v194
  %v255 = vpack.c.b16 %v197, %v196
  %v256 = vpack.c.b16 %v199, %v198
  %v257 = vpack.c.b16 %v201, %v200
  %v258 = vpack.c.b16 %v203, %v202
  %v259 = vpack.c.b16 %v205, %v204
  %v260 = vpack.c.b16 %v207, %v206
  %v261 = vpack.c.b16 %v209, %v208
  %v262 = vpack.c.b16 %v211, %v210
  %v263 = vpack.c.b16 %v213, %v212
  %v264 = vpack.c.b16 %v215, %v214
  %v265 = vpack.c.b16 %v217, %v216
  %v266 = vpack.c.b16 %v219, %v218
  %v267 = vpack.c.b16 %v221, %v220
  %v268 = vpack.c.b16 %v223, %v222
  %v269 = vpack.c.b16 %v225, %v224
  %v270 = vpack.c.b16 %v227, %v226
  %v271 = vpack.c.b16 %v229, %v228
  %v272 = vpack.c.b16 %v231, %v230
  %v273 = vpack.c.b16 %v233, %v232
  %v274 = vpack.c.b16 %v235, %v234
  %v275 = vpack.c.b16 %v237, %v236
  %v276 = vpack.c.b16 %v239, %v238
  %v277 = vpack.c.b16 %v241, %v240
  %v278 = vpack.c.b16 %v243, %v242
  %v279 = vpack.c.b16 %v245, %v244
  %v280 = vpack.c.b16 %v247, %v246
  %v281 = vpack.c.b16 %v249, %v248
  %314 = vmatprep.subr.bf16.mxu0 0
  %315 = vmatpush1.bf16.msra.mxu0 %v250
  %316 = vmatprep.subr.bf16.mxu0 0
  %317 = vmatpush1.bf16.msra.mxu0 %v251
  %318 = vmatprep.subr.bf16.mxu0 0
  %319 = vmatpush1.bf16.msra.mxu0 %v252
  %320 = vmatprep.subr.bf16.mxu0 0
  %321 = vmatpush1.bf16.msra.mxu0 %v253
  %322 = vmatprep.subr.bf16.mxu0 0
  %323 = vmatpush1.bf16.msra.mxu0 %v254
  %324 = vmatprep.subr.bf16.mxu0 0
  %325 = vmatpush1.bf16.msra.mxu0 %v255
  %326 = vmatprep.subr.bf16.mxu0 0
  %327 = vmatpush1.bf16.msra.mxu0 %v256
  %328 = vmatprep.subr.bf16.mxu0 0
  %329 = vmatpush1.bf16.msra.mxu0 %v257
  %330 = vmatprep.subr.bf16.mxu0 0
  %331 = vmatpush1.bf16.msra.mxu0 %v258
  %332 = vmatprep.subr.bf16.mxu0 0
  %333 = vmatpush1.bf16.msra.mxu0 %v259
  %334 = vmatprep.subr.bf16.mxu0 0
  %335 = vmatpush1.bf16.msra.mxu0 %v260
  %336 = vmatprep.subr.bf16.mxu0 0
  %337 = vmatpush1.bf16.msra.mxu0 %v261
  %338 = vmatprep.subr.bf16.mxu0 0
  %339 = vmatpush1.bf16.msra.mxu0 %v262
  %340 = vmatprep.subr.bf16.mxu0 0
  %341 = vmatpush1.bf16.msra.mxu0 %v263
  %342 = vmatprep.subr.bf16.mxu0 0
  %343 = vmatpush1.bf16.msra.mxu0 %v264
  %344 = vmatprep.subr.bf16.mxu0 0
  %345 = vmatpush1.bf16.msra.mxu0 %v265
  %346 = vmatprep.mubr.bf16.mxu0 %v115
  %347 = vmatmul.mubr.bf16.gmra.mrb[0].mxu0 %v114
  %v348 = vpop.f32.mrb[0].mxu0
  %v349 = vadd.f32 %v100, %v348
  %v350 = vpop.f32.mrb[0].mxu0
  %v351 = vpop.f32.mrb[0].mxu0
  %v352 = vadd.f32 %v100, %v351
  %v353 = vpop.f32.mrb[0].mxu0
  %354 = vdwg.mxu0
  %355 = vmatprep.subr.bf16.mxu0 0
  %356 = vmatpush1.bf16.msra.mxu0 %v266
  %357 = vmatprep.subr.bf16.mxu0 0
  %358 = vmatpush1.bf16.msra.mxu0 %v267
  %359 = vmatprep.subr.bf16.mxu0 0
  %360 = vmatpush1.bf16.msra.mxu0 %v268
  %361 = vmatprep.subr.bf16.mxu0 0
  %362 = vmatpush1.bf16.msra.mxu0 %v269
  %363 = vmatprep.subr.bf16.mxu0 0
  %364 = vmatpush1.bf16.msra.mxu0 %v270
  %365 = vmatprep.subr.bf16.mxu0 0
  %366 = vmatpush1.bf16.msra.mxu0 %v271
  %367 = vmatprep.subr.bf16.mxu0 0
  %368 = vmatpush1.bf16.msra.mxu0 %v272
  %369 = vmatprep.subr.bf16.mxu0 0
  %370 = vmatpush1.bf16.msra.mxu0 %v273
  %371 = vmatprep.subr.bf16.mxu0 0
  %372 = vmatpush1.bf16.msra.mxu0 %v274
  %373 = vmatprep.subr.bf16.mxu0 0
  %374 = vmatpush1.bf16.msra.mxu0 %v275
  %375 = vmatprep.subr.bf16.mxu0 0
  %376 = vmatpush1.bf16.msra.mxu0 %v276
  %377 = vmatprep.subr.bf16.mxu0 0
  %378 = vmatpush1.bf16.msra.mxu0 %v277
  %379 = vmatprep.subr.bf16.mxu0 0
  %380 = vmatpush1.bf16.msra.mxu0 %v278
  %381 = vmatprep.subr.bf16.mxu0 0
  %382 = vmatpush1.bf16.msra.mxu0 %v279
  %383 = vmatprep.subr.bf16.mxu0 0
  %384 = vmatpush1.bf16.msra.mxu0 %v280
  %385 = vmatprep.subr.bf16.mxu0 0
  %386 = vmatpush1.bf16.msra.mxu0 %v281
  %387 = vmatprep.mubr.bf16.mxu0 %v117
  %388 = vmatmul.mubr.bf16.gmra.mrb[0].mxu0 %v116
  %v389 = vpop.f32.mrb[0].mxu0
  %v390 = vadd.f32 %v349, %v389
  %v391 = vpop.f32.mrb[0].mxu0
  %v392 = vpop.f32.mrb[0].mxu0
  %v393 = vadd.f32 %v352, %v392
  %v394 = vpop.f32.mrb[0].mxu0
  %395 = vdwg.mxu0
  %v396 = vmax.f32 %v390, 0.0
  %v397 = vmax.f32 %v393, 0.0
  %v398 = vpack.c.bf16 %v397, %v396
  %v399 = vld [vmem:[%s3] sm:$0xf]
  %v400 = vld [vmem:[%s3 + $0x4] sm:$0xf]
  %v401 = vld [vmem:[%s3 + $0x8] sm:$0xf]
  %v402 = vld [vmem:[%s3 + $0xc] sm:$0xf]
  %v403 = vld [vmem:[%s3 + $0x10] sm:$0xf]
  %v404 = vld [vmem:[%s3 + $0x14] sm:$0xf]
  %v405 = vld [vmem:[%s3 + $0x18] sm:$0xf]
  %v406 = vld [vmem:[%s3 + $0x1c] sm:$0xf]
  %v407 = vld [vmem:[%s3 + $0x20] sm:$0xf]
  %v408 = vld [vmem:[%s3 + $0x24] sm:$0xf]
  %v409 = vld [vmem:[%s3 + $0x28] sm:$0xf]
  %v410 = vld [vmem:[%s3 + $0x2c] sm:$0xf]
  %v411 = vld [vmem:[%s3 + $0x30] sm:$0xf]
  %v412 = vld [vmem:[%s3 + $0x34] sm:$0xf]
  %v413 = vld [vmem:[%s3 + $0x38] sm:$0xf]
  %v414 = vld [vmem:[%s3 + $0x3c] sm:$0xf]
  %v415 = vld [vmem:[%s4] sm:$0x1]
  %v417 = vlaneseq
  %v418 = vshrl.u32 %v417, 7
  %v419 = vsub.s32 0, %v418
  %v420 = vrot.slane %v415, %v419
  %v438 = vunpack.c.l.b16 %v399
  %v439 = vunpack.c.l.b16 %v400
  %v440 = vunpack.c.l.b16 %v401
  %v441 = vunpack.c.l.b16 %v402
  %v442 = vunpack.c.l.b16 %v403
  %v443 = vunpack.c.l.b16 %v404
  %v444 = vunpack.c.l.b16 %v405
  %v445 = vunpack.c.l.b16 %v406
  %v446 = vunpack.c.l.b16 %v407
  %v447 = vunpack.c.l.b16 %v408
  %v448 = vunpack.c.l.b16 %v409
  %v449 = vunpack.c.l.b16 %v410
  %v450 = vunpack.c.l.b16 %v411
  %v451 = vunpack.c.l.b16 %v412
  %v452 = vunpack.c.l.b16 %v413
  %v453 = vunpack.c.l.b16 %v414
  %v454 = vpack.c.b16 %v439, %v438
  %v455 = vpack.c.b16 %v441, %v440
  %v456 = vpack.c.b16 %v443, %v442
  %v457 = vpack.c.b16 %v445, %v444
  %v458 = vpack.c.b16 %v447, %v446
  %v459 = vpack.c.b16 %v449, %v448
  %v460 = vpack.c.b16 %v451, %v450
  %v461 = vpack.c.b16 %v453, %v452
  %470 = vmatprep.subr.bf16.mxu0 0
  %471 = vmatpush1.bf16.msra.mxu0 %v454
  %472 = vmatprep.subr.bf16.mxu0 0
  %473 = vmatpush1.bf16.msra.mxu0 %v455
  %474 = vmatprep.subr.bf16.mxu0 0
  %475 = vmatpush1.bf16.msra.mxu0 %v456
  %476 = vmatprep.subr.bf16.mxu0 0
  %477 = vmatpush1.bf16.msra.mxu0 %v457
  %478 = vmatprep.subr.bf16.mxu0 0
  %479 = vmatpush1.bf16.msra.mxu0 %v458
  %480 = vmatprep.subr.bf16.mxu0 0
  %481 = vmatpush1.bf16.msra.mxu0 %v459
  %482 = vmatprep.subr.bf16.mxu0 0
  %483 = vmatpush1.bf16.msra.mxu0 %v460
  %484 = vmatprep.subr.bf16.mxu0 0
  %485 = vmatpush1.bf16.msra.mxu0 %v461
  %486 = vmatprep.subr.bf16.mxu0 0
  %487 = vmatpush1.bf16.msra.mxu0 0
  %488 = vmatprep.subr.bf16.mxu0 0
  %489 = vmatpush1.bf16.msra.mxu0 0
  %490 = vmatprep.subr.bf16.mxu0 0
  %491 = vmatpush1.bf16.msra.mxu0 0
  %492 = vmatprep.subr.bf16.mxu0 0
  %493 = vmatpush1.bf16.msra.mxu0 0
  %494 = vmatprep.subr.bf16.mxu0 0
  %495 = vmatpush1.bf16.msra.mxu0 0
  %496 = vmatprep.subr.bf16.mxu0 0
  %497 = vmatpush1.bf16.msra.mxu0 0
  %498 = vmatprep.subr.bf16.mxu0 0
  %499 = vmatpush1.bf16.msra.mxu0 0
  %500 = vmatprep.subr.bf16.mxu0 0
  %501 = vmatpush1.bf16.msra.mxu0 0
  %502 = vmatprep.mubr.bf16.mxu0 0
  %503 = vmatmul.mubr.bf16.gmra.mrb[0].mxu0 %v398
  %v504 = vpop.f32.mrb[0].mxu0
  %v505 = vadd.f32 %v420, %v504
  %v506 = vpop.f32.mrb[0].mxu0
  %v507 = vpop.f32.mrb[0].mxu0
  %v508 = vadd.f32 %v420, %v507
  %v509 = vpop.f32.mrb[0].mxu0
  %510 = vdwg.mxu0
  %v511 = vmax.f32 %v505, 0.0
  %v512 = vmax.f32 %v508, 0.0
  %v513 = vpack.c.bf16 %v512, %v511
  %v514 = vld [vmem:[%s5] sm:$0xf]
  %v515 = vld [vmem:[%s5 + $0x4] sm:$0xf]
  %v516 = vld [vmem:[%s5 + $0x8] sm:$0xf]
  %v517 = vld [vmem:[%s5 + $0xc] sm:$0xf]
  %v518 = vld [vmem:[%s5 + $0x10] sm:$0xf]
  %v519 = vld [vmem:[%s5 + $0x14] sm:$0xf]
  %v520 = vld [vmem:[%s5 + $0x18] sm:$0xf]
  %v521 = vld [vmem:[%s5 + $0x1c] sm:$0xf]
  %v522 = vld [vmem:[%s5 + $0x20] sm:$0xf]
  %v523 = vld [vmem:[%s5 + $0x24] sm:$0xf]
  %v524 = vld [vmem:[%s5 + $0x28] sm:$0xf]
  %v525 = vld [vmem:[%s5 + $0x2c] sm:$0xf]
  %v526 = vld [vmem:[%s5 + $0x30] sm:$0xf]
  %v527 = vld [vmem:[%s5 + $0x34] sm:$0xf]
  %v528 = vld [vmem:[%s5 + $0x38] sm:$0xf]
  %v529 = vld [vmem:[%s5 + $0x3c] sm:$0xf]
  %v530 = vld [vmem:[%s6] sm:$0x1]
  %v532 = vlaneseq
  %v533 = vshrl.u32 %v532, 7
  %v534 = vsub.s32 0, %v533
  %v535 = vrot.slane %v530, %v534
  %v553 = vunpack.c.l.b16 %v514
  %v554 = vunpack.c.l.b16 %v515
  %v555 = vunpack.c.l.b16 %v516
  %v556 = vunpack.c.l.b16 %v517
  %v557 = vunpack.c.l.b16 %v518
  %v558 = vunpack.c.l.b16 %v519
  %v559 = vunpack.c.l.b16 %v520
  %v560 = vunpack.c.l.b16 %v521
  %v561 = vunpack.c.l.b16 %v522
  %v562 = vunpack.c.l.b16 %v523
  %v563 = vunpack.c.l.b16 %v524
  %v564 = vunpack.c.l.b16 %v525
  %v565 = vunpack.c.l.b16 %v526
  %v566 = vunpack.c.l.b16 %v527
  %v567 = vunpack.c.l.b16 %v528
  %v568 = vunpack.c.l.b16 %v529
  %v569 = vpack.c.b16 %v554, %v553
  %v570 = vpack.c.b16 %v556, %v555
  %v571 = vpack.c.b16 %v558, %v557
  %v572 = vpack.c.b16 %v560, %v559
  %v573 = vpack.c.b16 %v562, %v561
  %v574 = vpack.c.b16 %v564, %v563
  %v575 = vpack.c.b16 %v566, %v565
  %v576 = vpack.c.b16 %v568, %v567
  %585 = vmatprep.subr.bf16.mxu0 0
  %586 = vmatpush1.bf16.msra.mxu0 %v569
  %587 = vmatprep.subr.bf16.mxu0 0
  %588 = vmatpush1.bf16.msra.mxu0 %v570
  %589 = vmatprep.subr.bf16.mxu0 0
  %590 = vmatpush1.bf16.msra.mxu0 %v571
  %591 = vmatprep.subr.bf16.mxu0 0
  %592 = vmatpush1.bf16.msra.mxu0 %v572
  %593 = vmatprep.subr.bf16.mxu0 0
  %594 = vmatpush1.bf16.msra.mxu0 %v573
  %595 = vmatprep.subr.bf16.mxu0 0
  %596 = vmatpush1.bf16.msra.mxu0 %v574
  %597 = vmatprep.subr.bf16.mxu0 0
  %598 = vmatpush1.bf16.msra.mxu0 %v575
  %599 = vmatprep.subr.bf16.mxu0 0
  %600 = vmatpush1.bf16.msra.mxu0 %v576
  %601 = vmatprep.subr.bf16.mxu0 0
  %602 = vmatpush1.bf16.msra.mxu0 0
  %603 = vmatprep.subr.bf16.mxu0 0
  %604 = vmatpush1.bf16.msra.mxu0 0
  %605 = vmatprep.subr.bf16.mxu0 0
  %606 = vmatpush1.bf16.msra.mxu0 0
  %607 = vmatprep.subr.bf16.mxu0 0
  %608 = vmatpush1.bf16.msra.mxu0 0
  %609 = vmatprep.subr.bf16.mxu0 0
  %610 = vmatpush1.bf16.msra.mxu0 0
  %611 = vmatprep.subr.bf16.mxu0 0
  %612 = vmatpush1.bf16.msra.mxu0 0
  %613 = vmatprep.subr.bf16.mxu0 0
  %614 = vmatpush1.bf16.msra.mxu0 0
  %615 = vmatprep.subr.bf16.mxu0 0
  %616 = vmatpush1.bf16.msra.mxu0 0
  %617 = vmatprep.mubr.bf16.mxu0 0
  %618 = vmatmul.mubr.bf16.gmra.mrb[0].mxu0 %v513
  %v619 = vpop.f32.mrb[0].mxu0
  %v620 = vadd.f32 %v535, %v619
  %v621 = vpop.f32.mrb[0].mxu0
  %v622 = vpop.f32.mrb[0].mxu0
  %v623 = vadd.f32 %v535, %v622
  %v624 = vpop.f32.mrb[0].mxu0
  %625 = vdwg.mxu0
  %626 = vst [vmem:[%s7] sm:$0xff] %v620
  %627 = vst [vmem:[%s7 + $0x8] sm:$0xff] %v623
  // Predicated region
  $region30: #{forward.5} parent=0 // pred_check
    _
  $region31: #{forward.5} parent=0 // pred_check_branch
    %629 = sbr.rel (0) target = $region33
  $region32: #{forward.5} parent=0 // pred_region
    _
  $region33: #{forward.5} parent=0 // pred_fallthru
    _
  // Predicated region
  $region34: #{forward.5} parent=0 // pred_check
    _
  $region35: #{forward.5} parent=0 // pred_check_branch
    %631 = sbr.rel (0) target = $region37
  $region36: #{forward.5} parent=0 // pred_region
    _
  $region37: #{forward.5} parent=0 // pred_fallthru
    _

</llo_original>
